<compile_context>
chip_gen: v5e
topology: v5e:2x2
jax: 0.10.0
libtpu: 0.0.40
codegen_flags: <defaults>
</compile_context>

<pallas_src>
import functools

import jax
import jax.numpy as jnp
import numpy as np
from jax.experimental import pallas as pl
from jax.experimental.pallas import tpu as pltpu


def _round_up(x, m):
    return ((x + m - 1) // m) * m


# ------------------------------ fused kernel --------------------------------

def _unet_conv_block_kernel(cols_ref, w1_ref, b1_ref, w2_ref, b2_ref,
                            o_ref, h1p_ref, *, Wp, S, L, Cp, tail):
    """One batch element, fully in VMEM.

    cols_ref : (L, 9*Cin+1) bf16  conv1 im2col (+ seam-indicator column)
    w1_ref   : (9*Cin+1, Cp) bf16 conv1 weights (+ -1e30 seam-mask row)
    b1_ref   : (1, Cp) f32
    w2_ref   : (9*Cp, Cp) bf16    conv2 per-tap (Cp, Cp) blocks stacked along rows
    b2_ref   : (1, Cp) f32
    o_ref    : (L, Cp) f32        lane-dense output slab (wrapper crops)
    h1p_ref  : (Np_ext, Cp) bf16  zero-padded conv1 activation scratch
    """
    # Zero ONLY the halo rows of the activation scratch (the rows conv2's taps read
    # as zero padding).  The interior [S, S+L) is fully overwritten below, so no
    # full-buffer zero fill is needed.
    h1p_ref[pl.ds(0, S), :] = jnp.zeros((S, Cp), h1p_ref.dtype)
    h1p_ref[pl.ds(S + L, tail), :] = jnp.zeros((tail, Cp), h1p_ref.dtype)

    # ---- conv1: one MXU matmul (bf16 operands, f32 accumulation) ----
    # Seam rows are driven to exact zero by the -1e30 mask column folded into
    # cols/w1 (ReLU of a huge negative), so after this store h1p is the exact
    # zero-padded conv1 activation that conv2 needs.
    acc1 = jnp.dot(cols_ref[...], w1_ref[...], preferred_element_type=jnp.float32)
    h1 = jnp.maximum(acc1 + b1_ref[...], 0.0)
    h1p_ref[pl.ds(S, L), :] = h1.astype(h1p_ref.dtype)        # S % 16 == 0: aligned

    # ---- conv2: 9 shifted-slice matmuls, value-carried f32 accumulator ----
    taps = [(dy, dx) for dy in range(3) for dx in range(3)]
    acc = None
    for t, (dy, dx) in enumerate(taps):
        off = S + (dy - 1) * Wp + (dx - 1)                    # static offset
        d = jnp.dot(h1p_ref[pl.ds(off, L), :],                # (L, Cp) bf16
                    w2_ref[pl.ds(t * Cp, Cp), :],             # (Cp, Cp) bf16
                    preferred_element_type=jnp.float32)
        acc = d if acc is None else acc + d

    o_ref[...] = jnp.maximum(acc + b2_ref[...], 0.0).astype(o_ref.dtype)


# --------------------------------- wrapper ----------------------------------

def init_params(key, in_size, out_size):
    ks = jax.random.split(key, 4)
    return {
        "c1_w": 0.1 * jax.random.normal(ks[0], (out_size, in_size, 3, 3), jnp.float32),
        "c1_b": 0.1 * jax.random.normal(ks[1], (out_size,), jnp.float32),
        "c2_w": 0.1 * jax.random.normal(ks[2], (out_size, out_size, 3, 3), jnp.float32),
        "c2_b": 0.1 * jax.random.normal(ks[3], (out_size,), jnp.float32),
    }


@jax.jit
def unet_conv_block_forward(params, x_nchw):
    """Forward of UNetConvBlock(in_size, out_size, padding=True, batch_norm=False)."""
    B, Cin, H, W = x_nchw.shape
    Cout = params["c1_b"].shape[0]
    Cp = _round_up(max(Cout, 128), 128)      # lane-dense / MXU-friendly channel pad
    K1 = 9 * Cin + 1                         # 9 taps * Cin  +  1 seam-mask column

    Wp = W + 2                               # padded plane width
    Np = (H + 2) * Wp                        # padded plane size (flattened)
    L = H * Wp                               # rows computed per plane
    S = _round_up(Wp + 1, 16)                # interior start in h1p (sublane aligned)
    tail = _round_up(Wp + 1, 16)             # bottom halo rows after the interior
    Np_ext = S + L + tail                    # every conv2 tap slice stays in range

    # ---- conv1 im2col (cheap one-shot XLA glue; only 9*Cin lanes wide) ----
    x_nhwc = jnp.transpose(x_nchw, (0, 2, 3, 1)).astype(jnp.bfloat16)
    xpad = jnp.pad(x_nhwc, ((0, 0), (1, 1), (1, 1), (0, 0)))       # (B, H+2, Wp, Cin)
    xflat = jnp.pad(xpad.reshape(B, Np, Cin), ((0, 0), (0, 2), (0, 0)))
    starts = [(Wp + 1) + (dy - 1) * Wp + (dx - 1)
              for dy in range(3) for dx in range(3)]
    # Seam indicator: 1.0 on rows that are left/right padding columns of the flat
    # plane; with a -1e30 weight row it pushes those rows to ReLU(negative) == 0.
    seam = ((np.arange(L) % Wp) >= W).astype(np.float32).reshape(1, L, 1)
    seam_col = jnp.broadcast_to(jnp.asarray(seam, jnp.bfloat16), (B, L, 1))
    cols = jnp.concatenate([xflat[:, s:s + L, :] for s in starts] + [seam_col],
                           axis=-1)                                # (B, L, K1)

    # ---- weights: per-tap blocks stacked along rows, Cout zero-padded to Cp ----
    w1 = jnp.transpose(params["c1_w"], (2, 3, 1, 0))               # (3,3,Cin,Cout)
    w1 = jnp.pad(w1, ((0, 0), (0, 0), (0, 0), (0, Cp - Cout))).reshape(9 * Cin, Cp)
    w1 = jnp.concatenate([w1, jnp.full((1, Cp), -1e30, w1.dtype)], axis=0)
    w1 = w1.astype(jnp.bfloat16)                                   # (K1, Cp)
    b1 = jnp.pad(params["c1_b"], (0, Cp - Cout)).reshape(1, Cp).astype(jnp.float32)
    w2 = jnp.transpose(params["c2_w"], (2, 3, 1, 0))               # (3,3,Cout,Cout)
    w2 = jnp.pad(w2, ((0, 0), (0, 0), (0, Cp - Cout), (0, Cp - Cout)))
    w2 = w2.reshape(9 * Cp, Cp).astype(jnp.bfloat16)
    b2 = jnp.pad(params["c2_b"], (0, Cp - Cout)).reshape(1, Cp).astype(jnp.float32)

    kernel = functools.partial(_unet_conv_block_kernel,
                               Wp=Wp, S=S, L=L, Cp=Cp, tail=tail)

    out_flat = pl.pallas_call(
        kernel,
        out_shape=jax.ShapeDtypeStruct((B, L, Cp), jnp.float32),
        grid_spec=pltpu.PrefetchScalarGridSpec(
            num_scalar_prefetch=0,
            grid=(B,),
            in_specs=[
                pl.BlockSpec((None, L, K1), lambda b: (b, 0, 0)),   # im2col
                pl.BlockSpec((K1, Cp), lambda b: (0, 0)),           # w1
                pl.BlockSpec((1, Cp), lambda b: (0, 0)),            # b1
                pl.BlockSpec((9 * Cp, Cp), lambda b: (0, 0)),       # w2
                pl.BlockSpec((1, Cp), lambda b: (0, 0)),            # b2
            ],
            out_specs=pl.BlockSpec((None, L, Cp), lambda b: (b, 0, 0)),
            scratch_shapes=[
                pltpu.VMEM((Np_ext, Cp), jnp.bfloat16),  # zero-padded conv1 activation
            ],
        ),
        compiler_params=pltpu.CompilerParams(
            dimension_semantics=("parallel",),           # v7x: batches across both TCs
        ),
    )(cols, w1, b1, w2, b2)

    # Unpack lane-dense slab: (B, L=H*Wp, Cp) -> (B, H, Wp, Cp) -> crop pad cols/chans.
    out_nhwc = out_flat.reshape(B, H, Wp, Cp)[:, :, :W, :Cout]
    return jnp.transpose(out_nhwc, (0, 3, 1, 2))         # back to NCHW
    # Note: one grid step processes a full H x W plane; for very large planes add a
    # second "parallel" grid axis over row-bands (1-row halos per band).


# ------------------------- pure-JAX reference (check) ------------------------

def reference_forward(params, x_nchw):
    x = jnp.transpose(x_nchw, (0, 2, 3, 1))

    def conv(x_, w, b):
        w_hwio = jnp.transpose(w, (2, 3, 1, 0))
        y = jax.lax.conv_general_dilated(
            x_, w_hwio, (1, 1), ((1, 1), (1, 1)),
            dimension_numbers=("NHWC", "HWIO", "NHWC"))
        return jnp.maximum(y + b, 0.0)

    h = conv(x, params["c1_w"], params["c1_b"])
    o = conv(h, params["c2_w"], params["c2_b"])
    return jnp.transpose(o, (0, 3, 1, 2))


# ---------------------------------- main -------------------------------------

if __name__ == "__main__":
    in_size, out_size = 4, 8          # UNetConvBlock(4, 8, padding=True, batch_norm=False)
    B, H, W = 2, 16, 16
    key = jax.random.PRNGKey(0)
    kp, kx = jax.random.split(key)

    params = init_params(kp, in_size, out_size)
    x = jax.random.normal(kx, (B, in_size, H, W), jnp.float32)

    out = jax.block_until_ready(unet_conv_block_forward(params, x))
    ref = reference_forward(params, x)

    assert out.shape == (B, out_size, H, W), out.shape
    # bf16 MXU operands (f32 accumulation) vs. the pure-f32 XLA reference:
    # agreement is ~1e-2 relative, so use a correspondingly loosened tolerance.
    np.testing.assert_allclose(np.asarray(out), np.asarray(ref), rtol=3e-2, atol=3e-2)
    print("KERNEL_OK")
</pallas_src>

<mosaic_0001>
module attributes {stable_mosaic.version = 11 : i64} {
  func.func @_unet_conv_block_kernel(%arg0: i32, %arg1: memref<1x288x37xbf16, #tpu.memory_space<vmem>>, %arg2: memref<37x128xbf16, #tpu.memory_space<vmem>>, %arg3: memref<1x128xf32, #tpu.memory_space<vmem>>, %arg4: memref<1152x128xbf16, #tpu.memory_space<vmem>>, %arg5: memref<1x128xf32, #tpu.memory_space<vmem>>, %arg6: memref<1x288x128xf32, #tpu.memory_space<vmem>>, %arg7: memref<352x128xbf16, #tpu.memory_space<vmem>>) attributes {dimension_semantics = [#tpu.dimension_semantics<parallel>], iteration_bounds = array<i64: 2>, scalar_prefetch = 0 : i64, scratch_operands = 1 : i64, tpu.core_type = #tpu.core_type<tc>, window_params = [{transform_indices = @transform_0, window_bounds = array<i64: 1, 288, 37>}, {pipeline_mode = #tpu.pipeline_mode<synchronous>, transform_indices = @transform_1, window_bounds = array<i64: 37, 128>}, {pipeline_mode = #tpu.pipeline_mode<synchronous>, transform_indices = @transform_2, window_bounds = array<i64: 1, 128>}, {pipeline_mode = #tpu.pipeline_mode<synchronous>, transform_indices = @transform_3, window_bounds = array<i64: 1152, 128>}, {pipeline_mode = #tpu.pipeline_mode<synchronous>, transform_indices = @transform_4, window_bounds = array<i64: 1, 128>}, {transform_indices = @transform_5, window_bounds = array<i64: 1, 288, 128>}]} {
    %cst = arith.constant 0.000000e+00 : bf16
    %0 = vector.broadcast %cst : bf16 to vector<32x128xbf16>
    %c0 = arith.constant 0 : index
    %c0_0 = arith.constant 0 : index
    %1 = vector.load %arg7[%c0, %c0_0] : memref<352x128xbf16, #tpu.memory_space<vmem>>, vector<32x128xbf16>
    tpu.vector_store %arg7[%c0, %c0_0], %0 {strides = array<i32>} : memref<352x128xbf16, #tpu.memory_space<vmem>>, vector<32x128xbf16>,
    %cst_1 = arith.constant 0.000000e+00 : bf16
    %2 = vector.broadcast %cst_1 : bf16 to vector<32x128xbf16>
    %c320 = arith.constant 320 : index
    %c0_2 = arith.constant 0 : index
    %3 = vector.load %arg7[%c320, %c0_2] : memref<352x128xbf16, #tpu.memory_space<vmem>>, vector<32x128xbf16>
    tpu.vector_store %arg7[%c320, %c0_2], %2 {strides = array<i32>} : memref<352x128xbf16, #tpu.memory_space<vmem>>, vector<32x128xbf16>,
    %c0_3 = arith.constant 0 : index
    %c0_4 = arith.constant 0 : index
    %c0_5 = arith.constant 0 : index
    %4 = vector.load %arg1[%c0_3, %c0_4, %c0_5] : memref<1x288x37xbf16, #tpu.memory_space<vmem>>, vector<1x288x37xbf16>
    %5 = vector.shape_cast %4 : vector<1x288x37xbf16> to vector<288x37xbf16>
    %c0_6 = arith.constant 0 : index
    %c0_7 = arith.constant 0 : index
    %6 = vector.load %arg2[%c0_6, %c0_7] : memref<37x128xbf16, #tpu.memory_space<vmem>>, vector<37x128xbf16>
    %cst_8 = arith.constant dense<0.000000e+00> : vector<288x128xf32>
    %7 = tpu.matmul %5, %6, %cst_8 {dimension_numbers = #tpu.dot_dimension_numbers<[1], [0], [0], [1], [0, 0, 1, 1], [], []>} : vector<288x37xbf16>, vector<37x128xbf16>, vector<288x128xf32> -> vector<288x128xf32>
    %c0_9 = arith.constant 0 : index
    %c0_10 = arith.constant 0 : index
    %8 = vector.load %arg3[%c0_9, %c0_10] : memref<1x128xf32, #tpu.memory_space<vmem>>, vector<1x128xf32>
    %9 = vector.broadcast %8 : vector<1x128xf32> to vector<288x128xf32>
    %10 = arith.addf %7, %9 : vector<288x128xf32>
    %cst_11 = arith.constant 0.000000e+00 : f32
    %11 = vector.broadcast %cst_11 : f32 to vector<288x128xf32>
    %12 = arith.maximumf %10, %11 : vector<288x128xf32>
    %13 = arith.truncf %12 : vector<288x128xf32> to vector<288x128xbf16>
    %c32 = arith.constant 32 : index
    %c0_12 = arith.constant 0 : index
    %14 = vector.load %arg7[%c32, %c0_12] : memref<352x128xbf16, #tpu.memory_space<vmem>>, vector<288x128xbf16>
    tpu.vector_store %arg7[%c32, %c0_12], %13 {strides = array<i32>} : memref<352x128xbf16, #tpu.memory_space<vmem>>, vector<288x128xbf16>,
    %c13 = arith.constant 13 : index
    %c0_13 = arith.constant 0 : index
    %15 = vector.load %arg7[%c13, %c0_13] : memref<352x128xbf16, #tpu.memory_space<vmem>>, vector<288x128xbf16>
    %c0_14 = arith.constant 0 : index
    %c0_15 = arith.constant 0 : index
    %16 = vector.load %arg4[%c0_14, %c0_15] : memref<1152x128xbf16, #tpu.memory_space<vmem>>, vector<128x128xbf16>
    %cst_16 = arith.constant dense<0.000000e+00> : vector<288x128xf32>
    %17 = tpu.matmul %15, %16, %cst_16 {dimension_numbers = #tpu.dot_dimension_numbers<[1], [0], [0], [1], [0, 0, 1, 1], [], []>} : vector<288x128xbf16>, vector<128x128xbf16>, vector<288x128xf32> -> vector<288x128xf32>
    %c14 = arith.constant 14 : index
    %c0_17 = arith.constant 0 : index
    %18 = vector.load %arg7[%c14, %c0_17] : memref<352x128xbf16, #tpu.memory_space<vmem>>, vector<288x128xbf16>
    %c128 = arith.constant 128 : index
    %c0_18 = arith.constant 0 : index
    %19 = vector.load %arg4[%c128, %c0_18] : memref<1152x128xbf16, #tpu.memory_space<vmem>>, vector<128x128xbf16>
    %cst_19 = arith.constant dense<0.000000e+00> : vector<288x128xf32>
    %20 = tpu.matmul %18, %19, %cst_19 {dimension_numbers = #tpu.dot_dimension_numbers<[1], [0], [0], [1], [0, 0, 1, 1], [], []>} : vector<288x128xbf16>, vector<128x128xbf16>, vector<288x128xf32> -> vector<288x128xf32>
    %21 = arith.addf %17, %20 : vector<288x128xf32>
    %c15 = arith.constant 15 : index
    %c0_20 = arith.constant 0 : index
    %22 = vector.load %arg7[%c15, %c0_20] : memref<352x128xbf16, #tpu.memory_space<vmem>>, vector<288x128xbf16>
    %c256 = arith.constant 256 : index
    %c0_21 = arith.constant 0 : index
    %23 = vector.load %arg4[%c256, %c0_21] : memref<1152x128xbf16, #tpu.memory_space<vmem>>, vector<128x128xbf16>
    %cst_22 = arith.constant dense<0.000000e+00> : vector<288x128xf32>
    %24 = tpu.matmul %22, %23, %cst_22 {dimension_numbers = #tpu.dot_dimension_numbers<[1], [0], [0], [1], [0, 0, 1, 1], [], []>} : vector<288x128xbf16>, vector<128x128xbf16>, vector<288x128xf32> -> vector<288x128xf32>
    %25 = arith.addf %21, %24 : vector<288x128xf32>
    %c31 = arith.constant 31 : index
    %c0_23 = arith.constant 0 : index
    %26 = vector.load %arg7[%c31, %c0_23] : memref<352x128xbf16, #tpu.memory_space<vmem>>, vector<288x128xbf16>
    %c384 = arith.constant 384 : index
    %c0_24 = arith.constant 0 : index
    %27 = vector.load %arg4[%c384, %c0_24] : memref<1152x128xbf16, #tpu.memory_space<vmem>>, vector<128x128xbf16>
    %cst_25 = arith.constant dense<0.000000e+00> : vector<288x128xf32>
    %28 = tpu.matmul %26, %27, %cst_25 {dimension_numbers = #tpu.dot_dimension_numbers<[1], [0], [0], [1], [0, 0, 1, 1], [], []>} : vector<288x128xbf16>, vector<128x128xbf16>, vector<288x128xf32> -> vector<288x128xf32>
    %29 = arith.addf %25, %28 : vector<288x128xf32>
    %c32_26 = arith.constant 32 : index
    %c0_27 = arith.constant 0 : index
    %30 = vector.load %arg7[%c32_26, %c0_27] : memref<352x128xbf16, #tpu.memory_space<vmem>>, vector<288x128xbf16>
    %c512 = arith.constant 512 : index
    %c0_28 = arith.constant 0 : index
    %31 = vector.load %arg4[%c512, %c0_28] : memref<1152x128xbf16, #tpu.memory_space<vmem>>, vector<128x128xbf16>
    %cst_29 = arith.constant dense<0.000000e+00> : vector<288x128xf32>
    %32 = tpu.matmul %30, %31, %cst_29 {dimension_numbers = #tpu.dot_dimension_numbers<[1], [0], [0], [1], [0, 0, 1, 1], [], []>} : vector<288x128xbf16>, vector<128x128xbf16>, vector<288x128xf32> -> vector<288x128xf32>
    %33 = arith.addf %29, %32 : vector<288x128xf32>
    %c33 = arith.constant 33 : index
    %c0_30 = arith.constant 0 : index
    %34 = vector.load %arg7[%c33, %c0_30] : memref<352x128xbf16, #tpu.memory_space<vmem>>, vector<288x128xbf16>
    %c640 = arith.constant 640 : index
    %c0_31 = arith.constant 0 : index
    %35 = vector.load %arg4[%c640, %c0_31] : memref<1152x128xbf16, #tpu.memory_space<vmem>>, vector<128x128xbf16>
    %cst_32 = arith.constant dense<0.000000e+00> : vector<288x128xf32>
    %36 = tpu.matmul %34, %35, %cst_32 {dimension_numbers = #tpu.dot_dimension_numbers<[1], [0], [0], [1], [0, 0, 1, 1], [], []>} : vector<288x128xbf16>, vector<128x128xbf16>, vector<288x128xf32> -> vector<288x128xf32>
    %37 = arith.addf %33, %36 : vector<288x128xf32>
    %c49 = arith.constant 49 : index
    %c0_33 = arith.constant 0 : index
    %38 = vector.load %arg7[%c49, %c0_33] : memref<352x128xbf16, #tpu.memory_space<vmem>>, vector<288x128xbf16>
    %c768 = arith.constant 768 : index
    %c0_34 = arith.constant 0 : index
    %39 = vector.load %arg4[%c768, %c0_34] : memref<1152x128xbf16, #tpu.memory_space<vmem>>, vector<128x128xbf16>
    %cst_35 = arith.constant dense<0.000000e+00> : vector<288x128xf32>
    %40 = tpu.matmul %38, %39, %cst_35 {dimension_numbers = #tpu.dot_dimension_numbers<[1], [0], [0], [1], [0, 0, 1, 1], [], []>} : vector<288x128xbf16>, vector<128x128xbf16>, vector<288x128xf32> -> vector<288x128xf32>
    %41 = arith.addf %37, %40 : vector<288x128xf32>
    %c50 = arith.constant 50 : index
    %c0_36 = arith.constant 0 : index
    %42 = vector.load %arg7[%c50, %c0_36] : memref<352x128xbf16, #tpu.memory_space<vmem>>, vector<288x128xbf16>
    %c896 = arith.constant 896 : index
    %c0_37 = arith.constant 0 : index
    %43 = vector.load %arg4[%c896, %c0_37] : memref<1152x128xbf16, #tpu.memory_space<vmem>>, vector<128x128xbf16>
    %cst_38 = arith.constant dense<0.000000e+00> : vector<288x128xf32>
    %44 = tpu.matmul %42, %43, %cst_38 {dimension_numbers = #tpu.dot_dimension_numbers<[1], [0], [0], [1], [0, 0, 1, 1], [], []>} : vector<288x128xbf16>, vector<128x128xbf16>, vector<288x128xf32> -> vector<288x128xf32>
    %45 = arith.addf %41, %44 : vector<288x128xf32>
    %c51 = arith.constant 51 : index
    %c0_39 = arith.constant 0 : index
    %46 = vector.load %arg7[%c51, %c0_39] : memref<352x128xbf16, #tpu.memory_space<vmem>>, vector<288x128xbf16>
    %c1024 = arith.constant 1024 : index
    %c0_40 = arith.constant 0 : index
    %47 = vector.load %arg4[%c1024, %c0_40] : memref<1152x128xbf16, #tpu.memory_space<vmem>>, vector<128x128xbf16>
    %cst_41 = arith.constant dense<0.000000e+00> : vector<288x128xf32>
    %48 = tpu.matmul %46, %47, %cst_41 {dimension_numbers = #tpu.dot_dimension_numbers<[1], [0], [0], [1], [0, 0, 1, 1], [], []>} : vector<288x128xbf16>, vector<128x128xbf16>, vector<288x128xf32> -> vector<288x128xf32>
    %49 = arith.addf %45, %48 : vector<288x128xf32>
    %c0_42 = arith.constant 0 : index
    %c0_43 = arith.constant 0 : index
    %50 = vector.load %arg5[%c0_42, %c0_43] : memref<1x128xf32, #tpu.memory_space<vmem>>, vector<1x128xf32>
    %51 = vector.broadcast %50 : vector<1x128xf32> to vector<288x128xf32>
    %52 = arith.addf %49, %51 : vector<288x128xf32>
    %cst_44 = arith.constant 0.000000e+00 : f32
    %53 = vector.broadcast %cst_44 : f32 to vector<288x128xf32>
    %54 = arith.maximumf %52, %53 : vector<288x128xf32>
    %c0_45 = arith.constant 0 : index
    %c0_46 = arith.constant 0 : index
    %c0_47 = arith.constant 0 : index
    %55 = vector.load %arg6[%c0_45, %c0_46, %c0_47] : memref<1x288x128xf32, #tpu.memory_space<vmem>>, vector<1x288x128xf32>
    %56 = vector.shape_cast %55 : vector<1x288x128xf32> to vector<288x128xf32>
    %57 = vector.shape_cast %54 : vector<288x128xf32> to vector<1x288x128xf32>
    tpu.vector_store %arg6[%c0_45, %c0_46, %c0_47], %57 {strides = array<i32>} : memref<1x288x128xf32, #tpu.memory_space<vmem>>, vector<1x288x128xf32>,
    return
  }
  func.func @transform_0(%arg0: i32) -> (i32, i32, i32) {
    %c0_i32 = arith.constant 0 : i32
    %c0_i32_0 = arith.constant 0 : i32
    %c0_i32_1 = arith.constant 0 : i32
    return %arg0, %c0_i32, %c0_i32_0 : i32, i32, i32
  }
  func.func @transform_1(%arg0: i32) -> (i32, i32) {
    %c0_i32 = arith.constant 0 : i32
    %c0_i32_0 = arith.constant 0 : i32
    %c0_i32_1 = arith.constant 0 : i32
    return %c0_i32, %c0_i32_0 : i32, i32
  }
  func.func @transform_2(%arg0: i32) -> (i32, i32) {
    %c0_i32 = arith.constant 0 : i32
    %c0_i32_0 = arith.constant 0 : i32
    %c0_i32_1 = arith.constant 0 : i32
    return %c0_i32, %c0_i32_0 : i32, i32
  }
  func.func @transform_3(%arg0: i32) -> (i32, i32) {
    %c0_i32 = arith.constant 0 : i32
    %c0_i32_0 = arith.constant 0 : i32
    %c0_i32_1 = arith.constant 0 : i32
    return %c0_i32, %c0_i32_0 : i32, i32
  }
  func.func @transform_4(%arg0: i32) -> (i32, i32) {
    %c0_i32 = arith.constant 0 : i32
    %c0_i32_0 = arith.constant 0 : i32
    %c0_i32_1 = arith.constant 0 : i32
    return %c0_i32, %c0_i32_0 : i32, i32
  }
  func.func @transform_5(%arg0: i32) -> (i32, i32, i32) {
    %c0_i32 = arith.constant 0 : i32
    %c0_i32_0 = arith.constant 0 : i32
    %c0_i32_1 = arith.constant 0 : i32
    return %arg0, %c0_i32, %c0_i32_0 : i32, i32, i32
  }
}

</mosaic_0001>

<llo_original>
// kernel: unet_conv_block_forward.1
$region0: #{unet_conv_block_forward.1}
  #allocation0 [shape = 'u32[]', space=smem, size = 0x4, offset = 0x4, fixed_abs, tag = 'smem constant byte address 0x4 - core index']
  #allocation1 [shape = 'u32[72,128]{1,0:T(1,128)}', space=vmem, size = 0x9000, scoped, tag = 'internal scratch']
  #allocation2 [shape = 'bf16[352,128]{1,0:T(8,128)(2,1)}', space=vmem, size = 0x16000, scoped, tag = 'scratch operand']
  %s0 = inlined_call_operand.vmem [shape: bf16[2,288,37], index: 0, kind: input, shape index: {}]
  %s1 = inlined_call_operand.vmem [shape: bf16[37,128], index: 1, kind: input, shape index: {}]
  %s2 = inlined_call_operand.vmem [shape: f32[1,128], index: 2, kind: input, shape index: {}]
  %s3 = inlined_call_operand.vmem [shape: bf16[1152,128], index: 3, kind: input, shape index: {}]
  %s4 = inlined_call_operand.vmem [shape: f32[1,128], index: 4, kind: input, shape index: {}]
  %s5 = inlined_call_operand.vmem [shape: f32[2,288,128], index: 5, kind: output, shape index: {}]
  %s6 = sld [smem:[#allocation0]]
  $region53: #{unet_conv_block_forward.1} parent=0
    _
  %s8 = ssub.s32 1, %s6
  %s9 = scalar_select 0, %s8, %s6
  loop: start=0, step=1, limit=4
  $region2: #{unet_conv_block_forward.1} parent=0 // loop_pre_header
    _
  $region3: #{unet_conv_block_forward.1} parent=0 // loop_header
    %s11 = sphi 0, %s15
    %p12 = scmp.ge.s32.totalorder %s11, 4
    %s21 = sphi 0, %s23
    %s24 = sphi 0, %s21
    %s25 = sphi 0, %s24
    %s41 = sphi 0, %s25
    %s45 = sphi 0, %s45
    %s47 = sphi 0, %s45
    %s48 = sphi 0, %s47
    %s62 = sphi 0, %s48
    %s66 = sphi 0, %s66
    %s68 = sphi 0, %s66
    %s69 = sphi 0, %s68
    %s83 = sphi 0, %s69
    %s87 = sphi 0, %s87
    %s89 = sphi 0, %s87
    %s90 = sphi 0, %s89
    %s104 = sphi 0, %s90
    %s108 = sphi 0, %s108
    %s110 = sphi 0, %s108
    %s111 = sphi 0, %s110
    %s125 = sphi 0, %s111
    %s131 = sphi 0, %s133
    %s134 = sphi 0, %s131
    %s135 = sphi 0, %s134
    %s151 = sphi 0, %s135
  $region4: #{unet_conv_block_forward.1} parent=0 // loop_header_branch
    %14 = sbr.rel (%p12) target = $region8
  $region5: #{unet_conv_block_forward.1} parent=0 // loop_body
    %s16 = ssub.s32 %s11, 1
    %s17 = ssub.s32 %s11, 2
    %s18 = sadd.s32 %s11, 1
    %s19 = ssub.s32 %s11, %s18
    %p20 = scmp.eq.s32.totalorder %s19, 0
    %s22 = sadd.s32 %s21, 1
    %s23 = scalar_select %p20, %s21, %s22
    %p26 = pneg %p20
    %p27 = scmp.eq.s32.totalorder %s11, 1
    %p28 = por %p26, %p27
    %p29 = scmp.ne.s32.totalorder %s21, %s24
    %p30 = scmp.eq.s32.totalorder %s11, 0
    %p31 = por %p29, %p30
    %p32 = scmp.ne.s32.totalorder %s21, %s24
    %p33 = scmp.eq.s32.totalorder %s16, 1
    %p34 = por %p32, %p33
    %p35 = scmp.ne.s32.totalorder %s24, %s25
    %p36 = scmp.eq.s32.totalorder %s16, 0
    %p37 = por %p35, %p36
    %p38 = scmp.ne.s32.totalorder %s24, %s25
    %p39 = scmp.eq.s32.totalorder %s17, 1
    %p40 = por %p38, %p39
    %p42 = scmp.ne.s32.totalorder %s25, %s41
    %p43 = scmp.eq.s32.totalorder %s17, 0
    %p44 = por %p42, %p43
    %s46 = sadd.s32 %s45, 1
    %p49 = scmp.eq.s32.totalorder %s11, 1
    %p50 = scmp.ne.s32.totalorder %s45, %s47
    %p51 = scmp.eq.s32.totalorder %s11, 0
    %p52 = por %p50, %p51
    %p53 = scmp.ne.s32.totalorder %s45, %s47
    %p54 = scmp.eq.s32.totalorder %s16, 1
    %p55 = por %p53, %p54
    %p56 = scmp.ne.s32.totalorder %s47, %s48
    %p57 = scmp.eq.s32.totalorder %s16, 0
    %p58 = por %p56, %p57
    %p59 = scmp.ne.s32.totalorder %s47, %s48
    %p60 = scmp.eq.s32.totalorder %s17, 1
    %p61 = por %p59, %p60
    %p63 = scmp.ne.s32.totalorder %s48, %s62
    %p64 = scmp.eq.s32.totalorder %s17, 0
    %p65 = por %p63, %p64
    %s67 = sadd.s32 %s66, 1
    %p70 = scmp.eq.s32.totalorder %s11, 1
    %p71 = scmp.ne.s32.totalorder %s66, %s68
    %p72 = scmp.eq.s32.totalorder %s11, 0
    %p73 = por %p71, %p72
    %p74 = scmp.ne.s32.totalorder %s66, %s68
    %p75 = scmp.eq.s32.totalorder %s16, 1
    %p76 = por %p74, %p75
    %p77 = scmp.ne.s32.totalorder %s68, %s69
    %p78 = scmp.eq.s32.totalorder %s16, 0
    %p79 = por %p77, %p78
    %p80 = scmp.ne.s32.totalorder %s68, %s69
    %p81 = scmp.eq.s32.totalorder %s17, 1
    %p82 = por %p80, %p81
    %p84 = scmp.ne.s32.totalorder %s69, %s83
    %p85 = scmp.eq.s32.totalorder %s17, 0
    %p86 = por %p84, %p85
    %s88 = sadd.s32 %s87, 1
    %p91 = scmp.eq.s32.totalorder %s11, 1
    %p92 = scmp.ne.s32.totalorder %s87, %s89
    %p93 = scmp.eq.s32.totalorder %s11, 0
    %p94 = por %p92, %p93
    %p95 = scmp.ne.s32.totalorder %s87, %s89
    %p96 = scmp.eq.s32.totalorder %s16, 1
    %p97 = por %p95, %p96
    %p98 = scmp.ne.s32.totalorder %s89, %s90
    %p99 = scmp.eq.s32.totalorder %s16, 0
    %p100 = por %p98, %p99
    %p101 = scmp.ne.s32.totalorder %s89, %s90
    %p102 = scmp.eq.s32.totalorder %s17, 1
    %p103 = por %p101, %p102
    %p105 = scmp.ne.s32.totalorder %s90, %s104
    %p106 = scmp.eq.s32.totalorder %s17, 0
    %p107 = por %p105, %p106
    %s109 = sadd.s32 %s108, 1
    %p112 = scmp.eq.s32.totalorder %s11, 1
    %p113 = scmp.ne.s32.totalorder %s108, %s110
    %p114 = scmp.eq.s32.totalorder %s11, 0
    %p115 = por %p113, %p114
    %p116 = scmp.ne.s32.totalorder %s108, %s110
    %p117 = scmp.eq.s32.totalorder %s16, 1
    %p118 = por %p116, %p117
    %p119 = scmp.ne.s32.totalorder %s110, %s111
    %p120 = scmp.eq.s32.totalorder %s16, 0
    %p121 = por %p119, %p120
    %p122 = scmp.ne.s32.totalorder %s110, %s111
    %p123 = scmp.eq.s32.totalorder %s17, 1
    %p124 = por %p122, %p123
    %p126 = scmp.ne.s32.totalorder %s111, %s125
    %p127 = scmp.eq.s32.totalorder %s17, 0
    %p128 = por %p126, %p127
    %s129 = ssub.s32 %s11, %s18
    %p130 = scmp.eq.s32.totalorder %s129, 0
    %s132 = sadd.s32 %s131, 1
    %s133 = scalar_select %p130, %s131, %s132
    %p136 = pneg %p130
    %p137 = scmp.eq.s32.totalorder %s11, 1
    %p138 = por %p136, %p137
    %p139 = scmp.ne.s32.totalorder %s131, %s134
    %p140 = scmp.eq.s32.totalorder %s11, 0
    %p141 = por %p139, %p140
    %p142 = scmp.ne.s32.totalorder %s131, %s134
    %p143 = scmp.eq.s32.totalorder %s16, 1
    %p144 = por %p142, %p143
    %p145 = scmp.ne.s32.totalorder %s134, %s135
    %p146 = scmp.eq.s32.totalorder %s16, 0
    %p147 = por %p145, %p146
    %p148 = scmp.ne.s32.totalorder %s134, %s135
    %p149 = scmp.eq.s32.totalorder %s17, 1
    %p150 = por %p148, %p149
    %p152 = scmp.ne.s32.totalorder %s135, %s151
    %p153 = scmp.eq.s32.totalorder %s17, 0
    %p154 = por %p152, %p153
    %p155 = scmp.le.s32.totalorder 1, %s11
    %p156 = scmp.lt.s32.totalorder %s11, 3
    %p157 = pnand %p155, %p156
    %p158 = pneg %p157
    // Predicated region
    $region9: #{unet_conv_block_forward.1} parent=5 // pred_check
      _
    $region10: #{unet_conv_block_forward.1} parent=5 // pred_check_branch
      %160 = sbr.rel (%p157) target = $region12
    $region11: #{unet_conv_block_forward.1} parent=5 // pred_region
      %s161 = ssub.s32 %s11, 1
      // Predicated region
      $region13: #{unet_conv_block_forward.1} parent=11 // pred_check
        %p162 = pneg %p58
      $region14: #{unet_conv_block_forward.1} parent=11 // pred_check_branch
        %164 = sbr.rel (%p162) target = $region16
      $region15: #{unet_conv_block_forward.1} parent=11 // pred_region
        _
      $region16: #{unet_conv_block_forward.1} parent=11 // pred_fallthru
        _
      // Predicated region
      $region17: #{unet_conv_block_forward.1} parent=11 // pred_check
        %p165 = pneg %p79
      $region18: #{unet_conv_block_forward.1} parent=11 // pred_check_branch
        %167 = sbr.rel (%p165) target = $region20
      $region19: #{unet_conv_block_forward.1} parent=11 // pred_region
        _
      $region20: #{unet_conv_block_forward.1} parent=11 // pred_fallthru
        _
      // Predicated region
      $region21: #{unet_conv_block_forward.1} parent=11 // pred_check
        %p168 = pneg %p100
      $region22: #{unet_conv_block_forward.1} parent=11 // pred_check_branch
        %170 = sbr.rel (%p168) target = $region24
      $region23: #{unet_conv_block_forward.1} parent=11 // pred_region
        _
      $region24: #{unet_conv_block_forward.1} parent=11 // pred_fallthru
        _
      // Predicated region
      $region25: #{unet_conv_block_forward.1} parent=11 // pred_check
        %p171 = pneg %p121
      $region26: #{unet_conv_block_forward.1} parent=11 // pred_check_branch
        %173 = sbr.rel (%p171) target = $region28
      $region27: #{unet_conv_block_forward.1} parent=11 // pred_region
        _
      $region28: #{unet_conv_block_forward.1} parent=11 // pred_fallthru
        _
    $region12: #{unet_conv_block_forward.1} parent=5 // pred_fallthru
      _
    %p174 = scmp.lt.s32.totalorder %s11, 2
    // Predicated region
    $region29: #{unet_conv_block_forward.1} parent=5 // pred_check
      %p175 = pneg %p174
    $region30: #{unet_conv_block_forward.1} parent=5 // pred_check_branch
      %177 = sbr.rel (%p175) target = $region32
    $region31: #{unet_conv_block_forward.1} parent=5 // pred_region
      // Predicated region
      $region33: #{unet_conv_block_forward.1} parent=31 // pred_check
        %p178 = pneg %p31
      $region34: #{unet_conv_block_forward.1} parent=31 // pred_check_branch
        %180 = sbr.rel (%p178) target = $region36
      $region35: #{unet_conv_block_forward.1} parent=31 // pred_region
        %p181 = scmp.lt.s32.totalorder %s11, 1
        %s182 = scalar_select %p181, %s11, 1
        %s183 = smul.addr %s182, 36
        %s184 = smul.addr %s183, 4
        %s185 = scalar_lea.vmem %s0, %s184
      $region36: #{unet_conv_block_forward.1} parent=31 // pred_fallthru
        _
    $region32: #{unet_conv_block_forward.1} parent=5 // pred_fallthru
      _
    %p186 = scmp.le.s32.totalorder 1, %s11
    %p187 = scmp.lt.s32.totalorder %s11, 3
    %p188 = pnand %p186, %p187
    %p189 = pneg %p188
    // Predicated region
    $region37: #{unet_conv_block_forward.1} parent=5 // pred_check
      _
    $region38: #{unet_conv_block_forward.1} parent=5 // pred_check_branch
      %191 = sbr.rel (%p188) target = $region40
    $region39: #{unet_conv_block_forward.1} parent=5 // pred_region
      %s192 = ssub.s32 %s11, 1
      %p193 = scmp.lt.s32.totalorder %s16, 1
      %s194 = scalar_select %p193, %s16, 1
      %s195 = smul.addr %s194, 36
      %s196 = smul.addr %s195, 4
      %s197 = scalar_lea.vmem %s0, %s196
      %p198 = pneg %p37
      %p199 = pneg %p34
      %p200 = pneg %p58
      %p201 = pneg %p55
      %p202 = pneg %p79
      %p203 = pneg %p76
      %p204 = pneg %p100
      %p205 = pneg %p97
      %p206 = pneg %p121
      %p207 = pneg %p118
      %p208 = pneg %p147
      %p209 = pneg %p144
      %p210 = scmp.lt.s32.totalorder %s16, 1
      %s211 = scalar_select %p210, %s16, 1
      %s212 = smul.addr %s211, 36
      %s213 = smul.addr %s212, 8
      %s214 = scalar_lea.vmem %s5, %s213
      %p215 = scmp.lt.s32.totalorder %s16, 1
      %s216 = scalar_select %p215, %s16, 1
      %s217 = smul.addr %s216, 36
      %s218 = smul.addr %s217, 4
      %s219 = scalar_lea.vmem %s0, %s218
      %p220 = scmp.lt.s32.totalorder %s16, 1
      %s221 = scalar_select %p220, %s16, 1
      %s222 = smul.addr %s221, 36
      %s223 = smul.addr %s222, 8
      %s224 = scalar_lea.vmem %s5, %s223
      %226 = vst [vmem:[#allocation2] sm:$0xf] 0
      %227 = vst [vmem:[#allocation2 + $0x4] sm:$0xf] 0
      %228 = vst [vmem:[#allocation2 + $0x8] sm:$0xf] 0
      %229 = vst [vmem:[#allocation2 + $0xc] sm:$0xf] 0
      %230 = vst [vmem:[#allocation2 + $0xa0] sm:$0xf] 0
      %231 = vst [vmem:[#allocation2 + $0xa4] sm:$0xf] 0
      %232 = vst [vmem:[#allocation2 + $0xa8] sm:$0xf] 0
      %233 = vst [vmem:[#allocation2 + $0xac] sm:$0xf] 0
      %v234 = vld [vmem:[%s219] sm:$0xf]
      %v235 = vld [vmem:[%s219 + $0x4] sm:$0xf]
      %v236 = vld [vmem:[%s219 + $0x8] sm:$0xf]
      %v237 = vld [vmem:[%s219 + $0xc] sm:$0xf]
      %v238 = vld [vmem:[%s219 + $0x10] sm:$0xf]
      %v239 = vld [vmem:[%s219 + $0x14] sm:$0xf]
      %v240 = vld [vmem:[%s219 + $0x18] sm:$0xf]
      %v241 = vld [vmem:[%s219 + $0x1c] sm:$0xf]
      %v242 = vld [vmem:[%s219 + $0x20] sm:$0xf]
      %v243 = vld [vmem:[%s219 + $0x24] sm:$0xf]
      %v244 = vld [vmem:[%s219 + $0x28] sm:$0xf]
      %v245 = vld [vmem:[%s219 + $0x2c] sm:$0xf]
      %v246 = vld [vmem:[%s219 + $0x30] sm:$0xf]
      %v247 = vld [vmem:[%s219 + $0x34] sm:$0xf]
      %v248 = vld [vmem:[%s219 + $0x38] sm:$0xf]
      %v249 = vld [vmem:[%s219 + $0x3c] sm:$0xf]
      %v250 = vld [vmem:[%s219 + $0x40] sm:$0xf]
      %v251 = vld [vmem:[%s219 + $0x44] sm:$0xf]
      %v252 = vld [vmem:[%s219 + $0x48] sm:$0xf]
      %v253 = vld [vmem:[%s219 + $0x4c] sm:$0xf]
      %v254 = vld [vmem:[%s219 + $0x50] sm:$0xf]
      %v255 = vld [vmem:[%s219 + $0x54] sm:$0xf]
      %v256 = vld [vmem:[%s219 + $0x58] sm:$0xf]
      %v257 = vld [vmem:[%s219 + $0x5c] sm:$0xf]
      %v258 = vld [vmem:[%s219 + $0x60] sm:$0xf]
      %v259 = vld [vmem:[%s219 + $0x64] sm:$0xf]
      %v260 = vld [vmem:[%s219 + $0x68] sm:$0xf]
      %v261 = vld [vmem:[%s219 + $0x6c] sm:$0xf]
      %v262 = vld [vmem:[%s219 + $0x70] sm:$0xf]
      %v263 = vld [vmem:[%s219 + $0x74] sm:$0xf]
      %v264 = vld [vmem:[%s219 + $0x78] sm:$0xf]
      %v265 = vld [vmem:[%s219 + $0x7c] sm:$0xf]
      %v266 = vld [vmem:[%s219 + $0x80] sm:$0xf]
      %v267 = vld [vmem:[%s219 + $0x84] sm:$0xf]
      %v268 = vld [vmem:[%s219 + $0x88] sm:$0xf]
      %v269 = vld [vmem:[%s219 + $0x8c] sm:$0xf]
      %v270 = vld [vmem:[%s1] sm:$0xf]
      %v271 = vld [vmem:[%s1 + $0x4] sm:$0xf]
      %v272 = vld [vmem:[%s1 + $0x8] sm:$0xf]
      %v273 = vld [vmem:[%s1 + $0xc] sm:$0xf]
      %v274 = vld [vmem:[%s1 + $0x10] sm:$0x7]
      %v275 = vld [vmem:[%s2] sm:$0x1]
      %v277 = vperm.slane %v275, 0
      %v315 = vunpack.c.l.b16 %v234
      %v316 = vunpack.c.l.b16 %v235
      %v317 = vunpack.c.l.b16 %v236
      %v318 = vunpack.c.l.b16 %v237
      %v319 = vunpack.c.l.b16 %v238
      %v320 = vunpack.c.l.b16 %v239
      %v321 = vunpack.c.l.b16 %v240
      %v322 = vunpack.c.l.b16 %v241
      %v323 = vunpack.c.l.b16 %v242
      %v324 = vunpack.c.l.b16 %v243
      %v325 = vunpack.c.l.b16 %v244
      %v326 = vunpack.c.l.b16 %v245
      %v327 = vunpack.c.l.b16 %v246
      %v328 = vunpack.c.l.b16 %v247
      %v329 = vunpack.c.l.b16 %v248
      %v330 = vunpack.c.l.b16 %v249
      %v331 = vunpack.c.l.b16 %v250
      %v332 = vunpack.c.l.b16 %v251
      %v333 = vunpack.c.l.b16 %v252
      %v334 = vunpack.c.l.b16 %v253
      %v335 = vunpack.c.l.b16 %v254
      %v336 = vunpack.c.l.b16 %v255
      %v337 = vunpack.c.l.b16 %v256
      %v338 = vunpack.c.l.b16 %v257
      %v339 = vunpack.c.l.b16 %v258
      %v340 = vunpack.c.l.b16 %v259
      %v341 = vunpack.c.l.b16 %v260
      %v342 = vunpack.c.l.b16 %v261
      %v343 = vunpack.c.l.b16 %v262
      %v344 = vunpack.c.l.b16 %v263
      %v345 = vunpack.c.l.b16 %v264
      %v346 = vunpack.c.l.b16 %v265
      %v347 = vunpack.c.l.b16 %v266
      %v348 = vunpack.c.l.b16 %v267
      %v349 = vunpack.c.l.b16 %v268
      %v350 = vunpack.c.l.b16 %v269
      %v351 = vpack.c.b16 %v316, %v315
      %v352 = vpack.c.b16 %v318, %v317
      %v353 = vpack.c.b16 %v320, %v319
      %v354 = vpack.c.b16 %v322, %v321
      %v355 = vpack.c.b16 %v324, %v323
      %v356 = vpack.c.b16 %v326, %v325
      %v357 = vpack.c.b16 %v328, %v327
      %v358 = vpack.c.b16 %v330, %v329
      %v359 = vpack.c.b16 %v332, %v331
      %v360 = vpack.c.b16 %v334, %v333
      %v361 = vpack.c.b16 %v336, %v335
      %v362 = vpack.c.b16 %v338, %v337
      %v363 = vpack.c.b16 %v340, %v339
      %v364 = vpack.c.b16 %v342, %v341
      %v365 = vpack.c.b16 %v344, %v343
      %v366 = vpack.c.b16 %v346, %v345
      %v367 = vpack.c.b16 %v348, %v347
      %v368 = vpack.c.b16 %v350, %v349
      %v374 = vunpack.c.l.b16 %v270
      %v375 = vunpack.c.l.b16 %v271
      %v376 = vunpack.c.l.b16 %v272
      %v377 = vunpack.c.l.b16 %v273
      %v378 = vunpack.c.l.b16 %v274
      %v379 = vpack.c.b16 %v375, %v374
      %v380 = vpack.c.b16 %v377, %v376
      %v381 = vpack.c.b16 %v378, %v378
      %vm384 = vcmask 302080
      %v386 = vsel %vm384, %v351, 0
      %v389 = vsel %vm384, %v352, 0
      %v392 = vsel %vm384, %v353, 0
      %v395 = vsel %vm384, %v354, 0
      %v398 = vsel %vm384, %v355, 0
      %v401 = vsel %vm384, %v356, 0
      %v404 = vsel %vm384, %v357, 0
      %v407 = vsel %vm384, %v358, 0
      %v410 = vsel %vm384, %v359, 0
      %v413 = vsel %vm384, %v360, 0
      %v416 = vsel %vm384, %v361, 0
      %v419 = vsel %vm384, %v362, 0
      %v422 = vsel %vm384, %v363, 0
      %v425 = vsel %vm384, %v364, 0
      %v428 = vsel %vm384, %v365, 0
      %v431 = vsel %vm384, %v366, 0
      %v434 = vsel %vm384, %v367, 0
      %v437 = vsel %vm384, %v368, 0
      %vm439 = vcmask 1041408
      %vm440 = vcmask 1042432
      %v441 = vsel %vm439, 4294967295, 65535
      %v442 = vsel %vm440, %v441, 0
      %v444 = vand.u32 %v381, %v442
      %446 = vmatpush.bf16.msra.mxu0 0
      %447 = vmatpush.bf16.msra.mxu0 0
      %448 = vmatpush.bf16.msra.mxu0 0
      %449 = vmatpush.bf16.msra.mxu0 0
      %450 = vmatpush.bf16.msra.mxu0 0
      %451 = vmatpush.bf16.msra.mxu0 %v444
      %452 = vmatpush.bf16.msra.mxu0 %v380
      %453 = vmatpush.bf16.msra.mxu0 %v379
      %454 = vmatmul.bf16.gmra.mxu0 %v386
      %v455 = vpop.f32.mrf.mxu0
      %v456 = vadd.f32 %v277, %v455
      %v457 = vpop.f32.mrf.mxu0
      %v458 = vadd.f32 %v277, %v457
      %459 = vmatmul.bf16.gmra.mxu0 %v389
      %v460 = vpop.f32.mrf.mxu0
      %v461 = vadd.f32 %v277, %v460
      %v462 = vpop.f32.mrf.mxu0
      %v463 = vadd.f32 %v277, %v462
      %464 = vmatmul.bf16.gmra.mxu0 %v392
      %v465 = vpop.f32.mrf.mxu0
      %v466 = vadd.f32 %v277, %v465
      %v467 = vpop.f32.mrf.mxu0
      %v468 = vadd.f32 %v277, %v467
      %469 = vmatmul.bf16.gmra.mxu0 %v395
      %v470 = vpop.f32.mrf.mxu0
      %v471 = vadd.f32 %v277, %v470
      %v472 = vpop.f32.mrf.mxu0
      %v473 = vadd.f32 %v277, %v472
      %474 = vmatmul.bf16.gmra.mxu0 %v398
      %v475 = vpop.f32.mrf.mxu0
      %v476 = vadd.f32 %v277, %v475
      %v477 = vpop.f32.mrf.mxu0
      %v478 = vadd.f32 %v277, %v477
      %479 = vmatmul.bf16.gmra.mxu0 %v401
      %v480 = vpop.f32.mrf.mxu0
      %v481 = vadd.f32 %v277, %v480
      %v482 = vpop.f32.mrf.mxu0
      %v483 = vadd.f32 %v277, %v482
      %484 = vmatmul.bf16.gmra.mxu0 %v404
      %v485 = vpop.f32.mrf.mxu0
      %v486 = vadd.f32 %v277, %v485
      %v487 = vpop.f32.mrf.mxu0
      %v488 = vadd.f32 %v277, %v487
      %489 = vmatmul.bf16.gmra.mxu0 %v407
      %v490 = vpop.f32.mrf.mxu0
      %v491 = vadd.f32 %v277, %v490
      %v492 = vpop.f32.mrf.mxu0
      %v493 = vadd.f32 %v277, %v492
      %494 = vmatmul.bf16.gmra.mxu0 %v410
      %v495 = vpop.f32.mrf.mxu0
      %v496 = vadd.f32 %v277, %v495
      %v497 = vpop.f32.mrf.mxu0
      %v498 = vadd.f32 %v277, %v497
      %499 = vmatmul.bf16.gmra.mxu0 %v413
      %v500 = vpop.f32.mrf.mxu0
      %v501 = vadd.f32 %v277, %v500
      %v502 = vpop.f32.mrf.mxu0
      %v503 = vadd.f32 %v277, %v502
      %504 = vmatmul.bf16.gmra.mxu0 %v416
      %v505 = vpop.f32.mrf.mxu0
      %v506 = vadd.f32 %v277, %v505
      %v507 = vpop.f32.mrf.mxu0
      %v508 = vadd.f32 %v277, %v507
      %509 = vmatmul.bf16.gmra.mxu0 %v419
      %v510 = vpop.f32.mrf.mxu0
      %v511 = vadd.f32 %v277, %v510
      %v512 = vpop.f32.mrf.mxu0
      %v513 = vadd.f32 %v277, %v512
      %514 = vmatmul.bf16.gmra.mxu0 %v422
      %v515 = vpop.f32.mrf.mxu0
      %v516 = vadd.f32 %v277, %v515
      %v517 = vpop.f32.mrf.mxu0
      %v518 = vadd.f32 %v277, %v517
      %519 = vmatmul.bf16.gmra.mxu0 %v425
      %v520 = vpop.f32.mrf.mxu0
      %v521 = vadd.f32 %v277, %v520
      %v522 = vpop.f32.mrf.mxu0
      %v523 = vadd.f32 %v277, %v522
      %524 = vmatmul.bf16.gmra.mxu0 %v428
      %v525 = vpop.f32.mrf.mxu0
      %v526 = vadd.f32 %v277, %v525
      %v527 = vpop.f32.mrf.mxu0
      %v528 = vadd.f32 %v277, %v527
      %529 = vmatmul.bf16.gmra.mxu0 %v431
      %v530 = vpop.f32.mrf.mxu0
      %v531 = vadd.f32 %v277, %v530
      %v532 = vpop.f32.mrf.mxu0
      %v533 = vadd.f32 %v277, %v532
      %534 = vmatmul.bf16.gmra.mxu0 %v434
      %v535 = vpop.f32.mrf.mxu0
      %v536 = vadd.f32 %v277, %v535
      %v537 = vpop.f32.mrf.mxu0
      %v538 = vadd.f32 %v277, %v537
      %539 = vmatmul.bf16.gmra.mxu0 %v437
      %v540 = vpop.f32.mrf.mxu0
      %v541 = vadd.f32 %v277, %v540
      %v542 = vpop.f32.mrf.mxu0
      %v543 = vadd.f32 %v277, %v542
      %544 = vdwg.mxu0
      %v545 = vmax.f32 %v456, 0.0
      %v546 = vmax.f32 %v458, 0.0
      %v547 = vmax.f32 %v461, 0.0
      %v548 = vmax.f32 %v463, 0.0
      %v549 = vmax.f32 %v466, 0.0
      %v550 = vmax.f32 %v468, 0.0
      %v551 = vmax.f32 %v471, 0.0
      %v552 = vmax.f32 %v473, 0.0
      %v553 = vmax.f32 %v476, 0.0
      %v554 = vmax.f32 %v478, 0.0
      %v555 = vmax.f32 %v481, 0.0
      %v556 = vmax.f32 %v483, 0.0
      %v557 = vmax.f32 %v486, 0.0
      %v558 = vmax.f32 %v488, 0.0
      %v559 = vmax.f32 %v491, 0.0
      %v560 = vmax.f32 %v493, 0.0
      %v561 = vmax.f32 %v496, 0.0
      %v562 = vmax.f32 %v498, 0.0
      %v563 = vmax.f32 %v501, 0.0
      %v564 = vmax.f32 %v503, 0.0
      %v565 = vmax.f32 %v506, 0.0
      %v566 = vmax.f32 %v508, 0.0
      %v567 = vmax.f32 %v511, 0.0
      %v568 = vmax.f32 %v513, 0.0
      %v569 = vmax.f32 %v516, 0.0
      %v570 = vmax.f32 %v518, 0.0
      %v571 = vmax.f32 %v521, 0.0
      %v572 = vmax.f32 %v523, 0.0
      %v573 = vmax.f32 %v526, 0.0
      %v574 = vmax.f32 %v528, 0.0
      %v575 = vmax.f32 %v531, 0.0
      %v576 = vmax.f32 %v533, 0.0
      %v577 = vmax.f32 %v536, 0.0
      %v578 = vmax.f32 %v538, 0.0
      %v579 = vmax.f32 %v541, 0.0
      %v580 = vmax.f32 %v543, 0.0
      %v581 = vpack.c.bf16 %v545, %v545
      %v582 = vpack.c.bf16 %v546, %v546
      %v583 = vpack.c.bf16 %v547, %v547
      %v584 = vpack.c.bf16 %v548, %v548
      %v585 = vpack.c.bf16 %v549, %v549
      %v586 = vpack.c.bf16 %v550, %v550
      %v587 = vpack.c.bf16 %v551, %v551
      %v588 = vpack.c.bf16 %v552, %v552
      %v589 = vpack.c.bf16 %v553, %v553
      %v590 = vpack.c.bf16 %v554, %v554
      %v591 = vpack.c.bf16 %v555, %v555
      %v592 = vpack.c.bf16 %v556, %v556
      %v593 = vpack.c.bf16 %v557, %v557
      %v594 = vpack.c.bf16 %v558, %v558
      %v595 = vpack.c.bf16 %v559, %v559
      %v596 = vpack.c.bf16 %v560, %v560
      %v597 = vpack.c.bf16 %v561, %v561
      %v598 = vpack.c.bf16 %v562, %v562
      %v599 = vpack.c.bf16 %v563, %v563
      %v600 = vpack.c.bf16 %v564, %v564
      %v601 = vpack.c.bf16 %v565, %v565
      %v602 = vpack.c.bf16 %v566, %v566
      %v603 = vpack.c.bf16 %v567, %v567
      %v604 = vpack.c.bf16 %v568, %v568
      %v605 = vpack.c.bf16 %v569, %v569
      %v606 = vpack.c.bf16 %v570, %v570
      %v607 = vpack.c.bf16 %v571, %v571
      %v608 = vpack.c.bf16 %v572, %v572
      %v609 = vpack.c.bf16 %v573, %v573
      %v610 = vpack.c.bf16 %v574, %v574
      %v611 = vpack.c.bf16 %v575, %v575
      %v612 = vpack.c.bf16 %v576, %v576
      %v613 = vpack.c.bf16 %v577, %v577
      %v614 = vpack.c.bf16 %v578, %v578
      %v615 = vpack.c.bf16 %v579, %v579
      %v616 = vpack.c.bf16 %v580, %v580
      %617 = vst [vmem:[#allocation2 + $0x10] sm:$0xf] %v581
      %618 = vst [vmem:[#allocation2 + $0x14] sm:$0xf] %v582
      %619 = vst [vmem:[#allocation2 + $0x18] sm:$0xf] %v583
      %620 = vst [vmem:[#allocation2 + $0x1c] sm:$0xf] %v584
      %621 = vst [vmem:[#allocation2 + $0x20] sm:$0xf] %v585
      %622 = vst [vmem:[#allocation2 + $0x24] sm:$0xf] %v586
      %623 = vst [vmem:[#allocation2 + $0x28] sm:$0xf] %v587
      %624 = vst [vmem:[#allocation2 + $0x2c] sm:$0xf] %v588
      %625 = vst [vmem:[#allocation2 + $0x30] sm:$0xf] %v589
      %626 = vst [vmem:[#allocation2 + $0x34] sm:$0xf] %v590
      %627 = vst [vmem:[#allocation2 + $0x38] sm:$0xf] %v591
      %628 = vst [vmem:[#allocation2 + $0x3c] sm:$0xf] %v592
      %629 = vst [vmem:[#allocation2 + $0x40] sm:$0xf] %v593
      %630 = vst [vmem:[#allocation2 + $0x44] sm:$0xf] %v594
      %631 = vst [vmem:[#allocation2 + $0x48] sm:$0xf] %v595
      %632 = vst [vmem:[#allocation2 + $0x4c] sm:$0xf] %v596
      %633 = vst [vmem:[#allocation2 + $0x50] sm:$0xf] %v597
      %634 = vst [vmem:[#allocation2 + $0x54] sm:$0xf] %v598
      %635 = vst [vmem:[#allocation2 + $0x58] sm:$0xf] %v599
      %636 = vst [vmem:[#allocation2 + $0x5c] sm:$0xf] %v600
      %637 = vst [vmem:[#allocation2 + $0x60] sm:$0xf] %v601
      %638 = vst [vmem:[#allocation2 + $0x64] sm:$0xf] %v602
      %639 = vst [vmem:[#allocation2 + $0x68] sm:$0xf] %v603
      %640 = vst [vmem:[#allocation2 + $0x6c] sm:$0xf] %v604
      %641 = vst [vmem:[#allocation2 + $0x70] sm:$0xf] %v605
      %642 = vst [vmem:[#allocation2 + $0x74] sm:$0xf] %v606
      %643 = vst [vmem:[#allocation2 + $0x78] sm:$0xf] %v607
      %644 = vst [vmem:[#allocation2 + $0x7c] sm:$0xf] %v608
      %645 = vst [vmem:[#allocation2 + $0x80] sm:$0xf] %v609
      %646 = vst [vmem:[#allocation2 + $0x84] sm:$0xf] %v610
      %647 = vst [vmem:[#allocation2 + $0x88] sm:$0xf] %v611
      %648 = vst [vmem:[#allocation2 + $0x8c] sm:$0xf] %v612
      %649 = vst [vmem:[#allocation2 + $0x90] sm:$0xf] %v613
      %650 = vst [vmem:[#allocation2 + $0x94] sm:$0xf] %v614
      %651 = vst [vmem:[#allocation2 + $0x98] sm:$0xf] %v615
      %652 = vst [vmem:[#allocation2 + $0x9c] sm:$0xf] %v616
      %v653 = vld [vmem:[#allocation2 + $0x4] sm:$0xc]
      %v654 = vld [vmem:[#allocation2 + $0x8] sm:$0xf]
      %v655 = vld [vmem:[#allocation2 + $0xc] sm:$0xf]
      %v656 = vld [vmem:[#allocation2 + $0x10] sm:$0xf]
      %v657 = vld [vmem:[#allocation2 + $0x14] sm:$0xf]
      %v658 = vld [vmem:[#allocation2 + $0x18] sm:$0xf]
      %v659 = vld [vmem:[#allocation2 + $0x1c] sm:$0xf]
      %v660 = vld [vmem:[#allocation2 + $0x20] sm:$0xf]
      %v661 = vld [vmem:[#allocation2 + $0x24] sm:$0xf]
      %v662 = vld [vmem:[#allocation2 + $0x28] sm:$0xf]
      %v663 = vld [vmem:[#allocation2 + $0x2c] sm:$0xf]
      %v664 = vld [vmem:[#allocation2 + $0x30] sm:$0xf]
      %v665 = vld [vmem:[#allocation2 + $0x34] sm:$0xf]
      %v666 = vld [vmem:[#allocation2 + $0x38] sm:$0xf]
      %v667 = vld [vmem:[#allocation2 + $0x3c] sm:$0xf]
      %v668 = vld [vmem:[#allocation2 + $0x40] sm:$0xf]
      %v669 = vld [vmem:[#allocation2 + $0x44] sm:$0xf]
      %v670 = vld [vmem:[#allocation2 + $0x48] sm:$0xf]
      %v671 = vld [vmem:[#allocation2 + $0x4c] sm:$0xf]
      %v672 = vld [vmem:[#allocation2 + $0x50] sm:$0xf]
      %v673 = vld [vmem:[#allocation2 + $0x54] sm:$0xf]
      %v674 = vld [vmem:[#allocation2 + $0x58] sm:$0xf]
      %v675 = vld [vmem:[#allocation2 + $0x5c] sm:$0xf]
      %v676 = vld [vmem:[#allocation2 + $0x60] sm:$0xf]
      %v677 = vld [vmem:[#allocation2 + $0x64] sm:$0xf]
      %v678 = vld [vmem:[#allocation2 + $0x68] sm:$0xf]
      %v679 = vld [vmem:[#allocation2 + $0x6c] sm:$0xf]
      %v680 = vld [vmem:[#allocation2 + $0x70] sm:$0xf]
      %v681 = vld [vmem:[#allocation2 + $0x74] sm:$0xf]
      %v682 = vld [vmem:[#allocation2 + $0x78] sm:$0xf]
      %v683 = vld [vmem:[#allocation2 + $0x7c] sm:$0xf]
      %v684 = vld [vmem:[#allocation2 + $0x80] sm:$0xf]
      %v685 = vld [vmem:[#allocation2 + $0x84] sm:$0xf]
      %v686 = vld [vmem:[#allocation2 + $0x88] sm:$0xf]
      %v687 = vld [vmem:[#allocation2 + $0x8c] sm:$0xf]
      %v688 = vld [vmem:[#allocation2 + $0x90] sm:$0xf]
      %v689 = vld [vmem:[#allocation2 + $0x94] sm:$0x7]
      %v690 = vld [vmem:[%s3] sm:$0xf]
      %v691 = vld [vmem:[%s3 + $0x4] sm:$0xf]
      %v692 = vld [vmem:[%s3 + $0x8] sm:$0xf]
      %v693 = vld [vmem:[%s3 + $0xc] sm:$0xf]
      %v694 = vld [vmem:[%s3 + $0x10] sm:$0xf]
      %v695 = vld [vmem:[%s3 + $0x14] sm:$0xf]
      %v696 = vld [vmem:[%s3 + $0x18] sm:$0xf]
      %v697 = vld [vmem:[%s3 + $0x1c] sm:$0xf]
      %v698 = vld [vmem:[%s3 + $0x20] sm:$0xf]
      %v699 = vld [vmem:[%s3 + $0x24] sm:$0xf]
      %v700 = vld [vmem:[%s3 + $0x28] sm:$0xf]
      %v701 = vld [vmem:[%s3 + $0x2c] sm:$0xf]
      %v702 = vld [vmem:[%s3 + $0x30] sm:$0xf]
      %v703 = vld [vmem:[%s3 + $0x34] sm:$0xf]
      %v704 = vld [vmem:[%s3 + $0x38] sm:$0xf]
      %v705 = vld [vmem:[%s3 + $0x3c] sm:$0xf]
      %v706 = vld [vmem:[#allocation2 + $0x4] sm:$0x8]
      %v707 = vld [vmem:[%s3 + $0x40] sm:$0xf]
      %v708 = vld [vmem:[%s3 + $0x44] sm:$0xf]
      %v709 = vld [vmem:[%s3 + $0x48] sm:$0xf]
      %v710 = vld [vmem:[%s3 + $0x4c] sm:$0xf]
      %v711 = vld [vmem:[%s3 + $0x50] sm:$0xf]
      %v712 = vld [vmem:[%s3 + $0x54] sm:$0xf]
      %v713 = vld [vmem:[%s3 + $0x58] sm:$0xf]
      %v714 = vld [vmem:[%s3 + $0x5c] sm:$0xf]
      %v715 = vld [vmem:[%s3 + $0x60] sm:$0xf]
      %v716 = vld [vmem:[%s3 + $0x64] sm:$0xf]
      %v717 = vld [vmem:[%s3 + $0x68] sm:$0xf]
      %v718 = vld [vmem:[%s3 + $0x6c] sm:$0xf]
      %v719 = vld [vmem:[%s3 + $0x70] sm:$0xf]
      %v720 = vld [vmem:[%s3 + $0x74] sm:$0xf]
      %v721 = vld [vmem:[%s3 + $0x78] sm:$0xf]
      %v722 = vld [vmem:[%s3 + $0x7c] sm:$0xf]
      %v760 = vunpack.c.l.b16 %v706
      %v761 = vunpack.c.l.b16 %v654
      %v762 = vunpack.c.l.b16 %v655
      %v763 = vunpack.c.l.b16 %v656
      %v764 = vunpack.c.l.b16 %v657
      %v765 = vunpack.c.l.b16 %v658
      %v766 = vunpack.c.l.b16 %v659
      %v767 = vunpack.c.l.b16 %v660
      %v768 = vunpack.c.l.b16 %v661
      %v769 = vunpack.c.l.b16 %v662
      %v770 = vunpack.c.l.b16 %v663
      %v771 = vunpack.c.l.b16 %v664
      %v772 = vunpack.c.l.b16 %v665
      %v773 = vunpack.c.l.b16 %v666
      %v774 = vunpack.c.l.b16 %v667
      %v775 = vunpack.c.l.b16 %v668
      %v776 = vunpack.c.l.b16 %v669
      %v777 = vunpack.c.l.b16 %v670
      %v778 = vunpack.c.l.b16 %v671
      %v779 = vunpack.c.l.b16 %v672
      %v780 = vunpack.c.l.b16 %v673
      %v781 = vunpack.c.l.b16 %v674
      %v782 = vunpack.c.l.b16 %v675
      %v783 = vunpack.c.l.b16 %v676
      %v784 = vunpack.c.l.b16 %v677
      %v785 = vunpack.c.l.b16 %v678
      %v786 = vunpack.c.l.b16 %v679
      %v787 = vunpack.c.l.b16 %v680
      %v788 = vunpack.c.l.b16 %v681
      %v789 = vunpack.c.l.b16 %v682
      %v790 = vunpack.c.l.b16 %v683
      %v791 = vunpack.c.l.b16 %v684
      %v792 = vunpack.c.l.b16 %v685
      %v793 = vunpack.c.l.b16 %v686
      %v794 = vunpack.c.l.b16 %v687
      %v795 = vunpack.c.l.b16 %v688
      %v796 = vunpack.c.l.b16 %v689
      %v797 = vpack.c.b16 %v761, %v760
      %v798 = vpack.c.b16 %v763, %v762
      %v799 = vpack.c.b16 %v765, %v764
      %v800 = vpack.c.b16 %v767, %v766
      %v801 = vpack.c.b16 %v769, %v768
      %v802 = vpack.c.b16 %v771, %v770
      %v803 = vpack.c.b16 %v773, %v772
      %v804 = vpack.c.b16 %v775, %v774
      %v805 = vpack.c.b16 %v777, %v776
      %v806 = vpack.c.b16 %v779, %v778
      %v807 = vpack.c.b16 %v781, %v780
      %v808 = vpack.c.b16 %v783, %v782
      %v809 = vpack.c.b16 %v785, %v784
      %v810 = vpack.c.b16 %v787, %v786
      %v811 = vpack.c.b16 %v789, %v788
      %v812 = vpack.c.b16 %v791, %v790
      %v813 = vpack.c.b16 %v793, %v792
      %v814 = vpack.c.b16 %v795, %v794
      %v815 = vpack.c.b16 %v796, %v796
      %vm816 = vcmask 1044480
      %v817 = vrot.slane %v797, 3
      %v818 = vrot.slane %v798, 3
      %v819 = vsel %vm816, %v817, %v818
      %v820 = vrot.slane %v799, 3
      %v821 = vsel %vm816, %v818, %v820
      %v822 = vrot.slane %v800, 3
      %v823 = vsel %vm816, %v820, %v822
      %v824 = vrot.slane %v801, 3
      %v825 = vsel %vm816, %v822, %v824
      %v826 = vrot.slane %v802, 3
      %v827 = vsel %vm816, %v824, %v826
      %v828 = vrot.slane %v803, 3
      %v829 = vsel %vm816, %v826, %v828
      %v830 = vrot.slane %v804, 3
      %v831 = vsel %vm816, %v828, %v830
      %v832 = vrot.slane %v805, 3
      %v833 = vsel %vm816, %v830, %v832
      %v834 = vrot.slane %v806, 3
      %v835 = vsel %vm816, %v832, %v834
      %v836 = vrot.slane %v807, 3
      %v837 = vsel %vm816, %v834, %v836
      %v838 = vrot.slane %v808, 3
      %v839 = vsel %vm816, %v836, %v838
      %v840 = vrot.slane %v809, 3
      %v841 = vsel %vm816, %v838, %v840
      %v842 = vrot.slane %v810, 3
      %v843 = vsel %vm816, %v840, %v842
      %v844 = vrot.slane %v811, 3
      %v845 = vsel %vm816, %v842, %v844
      %v846 = vrot.slane %v812, 3
      %v847 = vsel %vm816, %v844, %v846
      %v848 = vrot.slane %v813, 3
      %v849 = vsel %vm816, %v846, %v848
      %v850 = vrot.slane %v814, 3
      %v851 = vsel %vm816, %v848, %v850
      %v852 = vrot.slane %v815, 3
      %v853 = vsel %vm816, %v850, %v852
      %v888 = vunpack.c.l.b16 %v707
      %v889 = vunpack.c.l.b16 %v708
      %v890 = vunpack.c.l.b16 %v709
      %v891 = vunpack.c.l.b16 %v710
      %v892 = vunpack.c.l.b16 %v711
      %v893 = vunpack.c.l.b16 %v712
      %v894 = vunpack.c.l.b16 %v713
      %v895 = vunpack.c.l.b16 %v714
      %v896 = vunpack.c.l.b16 %v715
      %v897 = vunpack.c.l.b16 %v716
      %v898 = vunpack.c.l.b16 %v717
      %v899 = vunpack.c.l.b16 %v718
      %v900 = vunpack.c.l.b16 %v719
      %v901 = vunpack.c.l.b16 %v720
      %v902 = vunpack.c.l.b16 %v721
      %v903 = vunpack.c.l.b16 %v722
      %v904 = vpack.c.b16 %v889, %v888
      %v905 = vpack.c.b16 %v891, %v890
      %v906 = vpack.c.b16 %v893, %v892
      %v907 = vpack.c.b16 %v895, %v894
      %v908 = vpack.c.b16 %v897, %v896
      %v909 = vpack.c.b16 %v899, %v898
      %v910 = vpack.c.b16 %v901, %v900
      %v911 = vpack.c.b16 %v903, %v902
      %920 = vmatpush.bf16.msra.mxu0 %v911
      %921 = vmatpush.bf16.msra.mxu0 %v910
      %922 = vmatpush.bf16.msra.mxu0 %v909
      %923 = vmatpush.bf16.msra.mxu0 %v908
      %924 = vmatpush.bf16.msra.mxu0 %v907
      %925 = vmatpush.bf16.msra.mxu0 %v906
      %926 = vmatpush.bf16.msra.mxu0 %v905
      %927 = vmatpush.bf16.msra.mxu0 %v904
      %928 = vmatmul.bf16.gmra.mxu0 %v819
      %v929 = vpop.f32.mrf.mxu0
      %v930 = vadd.f32 0.0, %v929
      %v931 = vpop.f32.mrf.mxu0
      %v932 = vadd.f32 0.0, %v931
      %933 = vmatmul.bf16.gmra.mxu0 %v821
      %v934 = vpop.f32.mrf.mxu0
      %v935 = vadd.f32 0.0, %v934
      %v936 = vpop.f32.mrf.mxu0
      %v937 = vadd.f32 0.0, %v936
      %938 = vmatmul.bf16.gmra.mxu0 %v823
      %v939 = vpop.f32.mrf.mxu0
      %v940 = vadd.f32 0.0, %v939
      %v941 = vpop.f32.mrf.mxu0
      %v942 = vadd.f32 0.0, %v941
      %943 = vmatmul.bf16.gmra.mxu0 %v825
      %v944 = vpop.f32.mrf.mxu0
      %v945 = vadd.f32 0.0, %v944
      %v946 = vpop.f32.mrf.mxu0
      %v947 = vadd.f32 0.0, %v946
      %948 = vmatmul.bf16.gmra.mxu0 %v827
      %v949 = vpop.f32.mrf.mxu0
      %v950 = vadd.f32 0.0, %v949
      %v951 = vpop.f32.mrf.mxu0
      %v952 = vadd.f32 0.0, %v951
      %953 = vmatmul.bf16.gmra.mxu0 %v829
      %v954 = vpop.f32.mrf.mxu0
      %v955 = vadd.f32 0.0, %v954
      %v956 = vpop.f32.mrf.mxu0
      %v957 = vadd.f32 0.0, %v956
      %958 = vmatmul.bf16.gmra.mxu0 %v831
      %v959 = vpop.f32.mrf.mxu0
      %v960 = vadd.f32 0.0, %v959
      %v961 = vpop.f32.mrf.mxu0
      %v962 = vadd.f32 0.0, %v961
      %963 = vmatmul.bf16.gmra.mxu0 %v833
      %v964 = vpop.f32.mrf.mxu0
      %v965 = vadd.f32 0.0, %v964
      %v966 = vpop.f32.mrf.mxu0
      %v967 = vadd.f32 0.0, %v966
      %968 = vmatmul.bf16.gmra.mxu0 %v835
      %v969 = vpop.f32.mrf.mxu0
      %v970 = vadd.f32 0.0, %v969
      %v971 = vpop.f32.mrf.mxu0
      %v972 = vadd.f32 0.0, %v971
      %973 = vmatmul.bf16.gmra.mxu0 %v837
      %v974 = vpop.f32.mrf.mxu0
      %v975 = vadd.f32 0.0, %v974
      %v976 = vpop.f32.mrf.mxu0
      %v977 = vadd.f32 0.0, %v976
      %978 = vmatmul.bf16.gmra.mxu0 %v839
      %v979 = vpop.f32.mrf.mxu0
      %v980 = vadd.f32 0.0, %v979
      %v981 = vpop.f32.mrf.mxu0
      %v982 = vadd.f32 0.0, %v981
      %983 = vmatmul.bf16.gmra.mxu0 %v841
      %v984 = vpop.f32.mrf.mxu0
      %v985 = vadd.f32 0.0, %v984
      %v986 = vpop.f32.mrf.mxu0
      %v987 = vadd.f32 0.0, %v986
      %988 = vmatmul.bf16.gmra.mxu0 %v843
      %v989 = vpop.f32.mrf.mxu0
      %v990 = vadd.f32 0.0, %v989
      %v991 = vpop.f32.mrf.mxu0
      %v992 = vadd.f32 0.0, %v991
      %993 = vmatmul.bf16.gmra.mxu0 %v845
      %v994 = vpop.f32.mrf.mxu0
      %v995 = vadd.f32 0.0, %v994
      %v996 = vpop.f32.mrf.mxu0
      %v997 = vadd.f32 0.0, %v996
      %998 = vmatmul.bf16.gmra.mxu0 %v847
      %v999 = vpop.f32.mrf.mxu0
      %v1000 = vadd.f32 0.0, %v999
      %v1001 = vpop.f32.mrf.mxu0
      %v1002 = vadd.f32 0.0, %v1001
      %1003 = vmatmul.bf16.gmra.mxu0 %v849
      %v1004 = vpop.f32.mrf.mxu0
      %v1005 = vadd.f32 0.0, %v1004
      %v1006 = vpop.f32.mrf.mxu0
      %v1007 = vadd.f32 0.0, %v1006
      %1008 = vmatmul.bf16.gmra.mxu0 %v851
      %v1009 = vpop.f32.mrf.mxu0
      %v1010 = vadd.f32 0.0, %v1009
      %v1011 = vpop.f32.mrf.mxu0
      %v1012 = vadd.f32 0.0, %v1011
      %1013 = vmatmul.bf16.gmra.mxu0 %v853
      %v1014 = vpop.f32.mrf.mxu0
      %v1015 = vadd.f32 0.0, %v1014
      %v1016 = vpop.f32.mrf.mxu0
      %v1017 = vadd.f32 0.0, %v1016
      %1018 = vdwg.mxu0
      %v1020 = vunpack.c.l.b16 %v653
      %v1021 = vpack.c.b16 %v761, %v1020
      %vm1022 = vsmask.f32 5376
      %v1024 = vshrl.u32 %v1021, 16
      %v1026 = vrot.slane %v1024, 2
      %v1027 = vshll.u32 %v1021, 16
      %v1029 = vrot.slane %v1027, 3
      %v1030 = vor.u32 %v1026, %v1029
      %v1032 = vshrl.u32 %v798, 16
      %v1034 = vrot.slane %v1032, 2
      %v1035 = vshll.u32 %v798, 16
      %v1037 = vrot.slane %v1035, 3
      %v1038 = vor.u32 %v1034, %v1037
      %v1039 = vsel %vm1022, %v1030, %v1038
      %v1041 = vshrl.u32 %v799, 16
      %v1043 = vrot.slane %v1041, 2
      %v1044 = vshll.u32 %v799, 16
      %v1046 = vrot.slane %v1044, 3
      %v1047 = vor.u32 %v1043, %v1046
      %v1048 = vsel %vm1022, %v1038, %v1047
      %v1050 = vshrl.u32 %v800, 16
      %v1052 = vrot.slane %v1050, 2
      %v1053 = vshll.u32 %v800, 16
      %v1055 = vrot.slane %v1053, 3
      %v1056 = vor.u32 %v1052, %v1055
      %v1057 = vsel %vm1022, %v1047, %v1056
      %v1059 = vshrl.u32 %v801, 16
      %v1061 = vrot.slane %v1059, 2
      %v1062 = vshll.u32 %v801, 16
      %v1064 = vrot.slane %v1062, 3
      %v1065 = vor.u32 %v1061, %v1064
      %v1066 = vsel %vm1022, %v1056, %v1065
      %v1068 = vshrl.u32 %v802, 16
      %v1070 = vrot.slane %v1068, 2
      %v1071 = vshll.u32 %v802, 16
      %v1073 = vrot.slane %v1071, 3
      %v1074 = vor.u32 %v1070, %v1073
      %v1075 = vsel %vm1022, %v1065, %v1074
      %v1077 = vshrl.u32 %v803, 16
      %v1079 = vrot.slane %v1077, 2
      %v1080 = vshll.u32 %v803, 16
      %v1082 = vrot.slane %v1080, 3
      %v1083 = vor.u32 %v1079, %v1082
      %v1084 = vsel %vm1022, %v1074, %v1083
      %v1086 = vshrl.u32 %v804, 16
      %v1088 = vrot.slane %v1086, 2
      %v1089 = vshll.u32 %v804, 16
      %v1091 = vrot.slane %v1089, 3
      %v1092 = vor.u32 %v1088, %v1091
      %v1093 = vsel %vm1022, %v1083, %v1092
      %v1095 = vshrl.u32 %v805, 16
      %v1097 = vrot.slane %v1095, 2
      %v1098 = vshll.u32 %v805, 16
      %v1100 = vrot.slane %v1098, 3
      %v1101 = vor.u32 %v1097, %v1100
      %v1102 = vsel %vm1022, %v1092, %v1101
      %v1104 = vshrl.u32 %v806, 16
      %v1106 = vrot.slane %v1104, 2
      %v1107 = vshll.u32 %v806, 16
      %v1109 = vrot.slane %v1107, 3
      %v1110 = vor.u32 %v1106, %v1109
      %v1111 = vsel %vm1022, %v1101, %v1110
      %v1113 = vshrl.u32 %v807, 16
      %v1115 = vrot.slane %v1113, 2
      %v1116 = vshll.u32 %v807, 16
      %v1118 = vrot.slane %v1116, 3
      %v1119 = vor.u32 %v1115, %v1118
      %v1120 = vsel %vm1022, %v1110, %v1119
      %v1122 = vshrl.u32 %v808, 16
      %v1124 = vrot.slane %v1122, 2
      %v1125 = vshll.u32 %v808, 16
      %v1127 = vrot.slane %v1125, 3
      %v1128 = vor.u32 %v1124, %v1127
      %v1129 = vsel %vm1022, %v1119, %v1128
      %v1131 = vshrl.u32 %v809, 16
      %v1133 = vrot.slane %v1131, 2
      %v1134 = vshll.u32 %v809, 16
      %v1136 = vrot.slane %v1134, 3
      %v1137 = vor.u32 %v1133, %v1136
      %v1138 = vsel %vm1022, %v1128, %v1137
      %v1140 = vshrl.u32 %v810, 16
      %v1142 = vrot.slane %v1140, 2
      %v1143 = vshll.u32 %v810, 16
      %v1145 = vrot.slane %v1143, 3
      %v1146 = vor.u32 %v1142, %v1145
      %v1147 = vsel %vm1022, %v1137, %v1146
      %v1149 = vshrl.u32 %v811, 16
      %v1151 = vrot.slane %v1149, 2
      %v1152 = vshll.u32 %v811, 16
      %v1154 = vrot.slane %v1152, 3
      %v1155 = vor.u32 %v1151, %v1154
      %v1156 = vsel %vm1022, %v1146, %v1155
      %v1158 = vshrl.u32 %v812, 16
      %v1160 = vrot.slane %v1158, 2
      %v1161 = vshll.u32 %v812, 16
      %v1163 = vrot.slane %v1161, 3
      %v1164 = vor.u32 %v1160, %v1163
      %v1165 = vsel %vm1022, %v1155, %v1164
      %v1167 = vshrl.u32 %v813, 16
      %v1169 = vrot.slane %v1167, 2
      %v1170 = vshll.u32 %v813, 16
      %v1172 = vrot.slane %v1170, 3
      %v1173 = vor.u32 %v1169, %v1172
      %v1174 = vsel %vm1022, %v1164, %v1173
      %v1176 = vshrl.u32 %v814, 16
      %v1178 = vrot.slane %v1176, 2
      %v1179 = vshll.u32 %v814, 16
      %v1181 = vrot.slane %v1179, 3
      %v1182 = vor.u32 %v1178, %v1181
      %v1183 = vsel %vm1022, %v1173, %v1182
      %v1185 = vshrl.u32 %v815, 16
      %v1187 = vrot.slane %v1185, 2
      %v1188 = vshll.u32 %v815, 16
      %v1190 = vrot.slane %v1188, 3
      %v1191 = vor.u32 %v1187, %v1190
      %v1192 = vsel %vm1022, %v1182, %v1191
      %v1227 = vunpack.c.l.b16 %v690
      %v1228 = vunpack.c.l.b16 %v691
      %v1229 = vunpack.c.l.b16 %v692
      %v1230 = vunpack.c.l.b16 %v693
      %v1231 = vunpack.c.l.b16 %v694
      %v1232 = vunpack.c.l.b16 %v695
      %v1233 = vunpack.c.l.b16 %v696
      %v1234 = vunpack.c.l.b16 %v697
      %v1235 = vunpack.c.l.b16 %v698
      %v1236 = vunpack.c.l.b16 %v699
      %v1237 = vunpack.c.l.b16 %v700
      %v1238 = vunpack.c.l.b16 %v701
      %v1239 = vunpack.c.l.b16 %v702
      %v1240 = vunpack.c.l.b16 %v703
      %v1241 = vunpack.c.l.b16 %v704
      %v1242 = vunpack.c.l.b16 %v705
      %v1243 = vpack.c.b16 %v1228, %v1227
      %v1244 = vpack.c.b16 %v1230, %v1229
      %v1245 = vpack.c.b16 %v1232, %v1231
      %v1246 = vpack.c.b16 %v1234, %v1233
      %v1247 = vpack.c.b16 %v1236, %v1235
      %v1248 = vpack.c.b16 %v1238, %v1237
      %v1249 = vpack.c.b16 %v1240, %v1239
      %v1250 = vpack.c.b16 %v1242, %v1241
      %1259 = vmatpush.bf16.msra.mxu0 %v1250
      %1260 = vmatpush.bf16.msra.mxu0 %v1249
      %1261 = vmatpush.bf16.msra.mxu0 %v1248
      %1262 = vmatpush.bf16.msra.mxu0 %v1247
      %1263 = vmatpush.bf16.msra.mxu0 %v1246
      %1264 = vmatpush.bf16.msra.mxu0 %v1245
      %1265 = vmatpush.bf16.msra.mxu0 %v1244
      %1266 = vmatpush.bf16.msra.mxu0 %v1243
      %1267 = vmatmul.bf16.gmra.mxu0 %v1039
      %v1268 = vpop.f32.mrf.mxu0
      %v1269 = vadd.f32 %v930, %v1268
      %v1270 = vpop.f32.mrf.mxu0
      %v1271 = vadd.f32 %v932, %v1270
      %1272 = vmatmul.bf16.gmra.mxu0 %v1048
      %v1273 = vpop.f32.mrf.mxu0
      %v1274 = vadd.f32 %v935, %v1273
      %v1275 = vpop.f32.mrf.mxu0
      %v1276 = vadd.f32 %v937, %v1275
      %1277 = vmatmul.bf16.gmra.mxu0 %v1057
      %v1278 = vpop.f32.mrf.mxu0
      %v1279 = vadd.f32 %v940, %v1278
      %v1280 = vpop.f32.mrf.mxu0
      %v1281 = vadd.f32 %v942, %v1280
      %1282 = vmatmul.bf16.gmra.mxu0 %v1066
      %v1283 = vpop.f32.mrf.mxu0
      %v1284 = vadd.f32 %v945, %v1283
      %v1285 = vpop.f32.mrf.mxu0
      %v1286 = vadd.f32 %v947, %v1285
      %1287 = vmatmul.bf16.gmra.mxu0 %v1075
      %v1288 = vpop.f32.mrf.mxu0
      %v1289 = vadd.f32 %v950, %v1288
      %v1290 = vpop.f32.mrf.mxu0
      %v1291 = vadd.f32 %v952, %v1290
      %1292 = vmatmul.bf16.gmra.mxu0 %v1084
      %v1293 = vpop.f32.mrf.mxu0
      %v1294 = vadd.f32 %v955, %v1293
      %v1295 = vpop.f32.mrf.mxu0
      %v1296 = vadd.f32 %v957, %v1295
      %1297 = vmatmul.bf16.gmra.mxu0 %v1093
      %v1298 = vpop.f32.mrf.mxu0
      %v1299 = vadd.f32 %v960, %v1298
      %v1300 = vpop.f32.mrf.mxu0
      %v1301 = vadd.f32 %v962, %v1300
      %1302 = vmatmul.bf16.gmra.mxu0 %v1102
      %v1303 = vpop.f32.mrf.mxu0
      %v1304 = vadd.f32 %v965, %v1303
      %v1305 = vpop.f32.mrf.mxu0
      %v1306 = vadd.f32 %v967, %v1305
      %1307 = vmatmul.bf16.gmra.mxu0 %v1111
      %v1308 = vpop.f32.mrf.mxu0
      %v1309 = vadd.f32 %v970, %v1308
      %v1310 = vpop.f32.mrf.mxu0
      %v1311 = vadd.f32 %v972, %v1310
      %1312 = vmatmul.bf16.gmra.mxu0 %v1120
      %v1313 = vpop.f32.mrf.mxu0
      %v1314 = vadd.f32 %v975, %v1313
      %v1315 = vpop.f32.mrf.mxu0
      %v1316 = vadd.f32 %v977, %v1315
      %1317 = vmatmul.bf16.gmra.mxu0 %v1129
      %v1318 = vpop.f32.mrf.mxu0
      %v1319 = vadd.f32 %v980, %v1318
      %v1320 = vpop.f32.mrf.mxu0
      %v1321 = vadd.f32 %v982, %v1320
      %1322 = vmatmul.bf16.gmra.mxu0 %v1138
      %v1323 = vpop.f32.mrf.mxu0
      %v1324 = vadd.f32 %v985, %v1323
      %v1325 = vpop.f32.mrf.mxu0
      %v1326 = vadd.f32 %v987, %v1325
      %1327 = vmatmul.bf16.gmra.mxu0 %v1147
      %v1328 = vpop.f32.mrf.mxu0
      %v1329 = vadd.f32 %v990, %v1328
      %v1330 = vpop.f32.mrf.mxu0
      %v1331 = vadd.f32 %v992, %v1330
      %1332 = vmatmul.bf16.gmra.mxu0 %v1156
      %v1333 = vpop.f32.mrf.mxu0
      %v1334 = vadd.f32 %v995, %v1333
      %v1335 = vpop.f32.mrf.mxu0
      %v1336 = vadd.f32 %v997, %v1335
      %1337 = vmatmul.bf16.gmra.mxu0 %v1165
      %v1338 = vpop.f32.mrf.mxu0
      %v1339 = vadd.f32 %v1000, %v1338
      %v1340 = vpop.f32.mrf.mxu0
      %v1341 = vadd.f32 %v1002, %v1340
      %1342 = vmatmul.bf16.gmra.mxu0 %v1174
      %v1343 = vpop.f32.mrf.mxu0
      %v1344 = vadd.f32 %v1005, %v1343
      %v1345 = vpop.f32.mrf.mxu0
      %v1346 = vadd.f32 %v1007, %v1345
      %1347 = vmatmul.bf16.gmra.mxu0 %v1183
      %v1348 = vpop.f32.mrf.mxu0
      %v1349 = vadd.f32 %v1010, %v1348
      %v1350 = vpop.f32.mrf.mxu0
      %v1351 = vadd.f32 %v1012, %v1350
      %1352 = vmatmul.bf16.gmra.mxu0 %v1192
      %v1353 = vpop.f32.mrf.mxu0
      %v1354 = vadd.f32 %v1015, %v1353
      %v1355 = vpop.f32.mrf.mxu0
      %v1356 = vadd.f32 %v1017, %v1355
      %1357 = vdwg.mxu0
      %v1358 = vld [vmem:[#allocation2 + $0x94] sm:$0xf]
      %v1359 = vld [vmem:[%s3 + $0x80] sm:$0xf]
      %v1360 = vld [vmem:[%s3 + $0x84] sm:$0xf]
      %v1361 = vld [vmem:[%s3 + $0x88] sm:$0xf]
      %v1362 = vld [vmem:[%s3 + $0x8c] sm:$0xf]
      %v1363 = vld [vmem:[%s3 + $0x90] sm:$0xf]
      %v1364 = vld [vmem:[%s3 + $0x94] sm:$0xf]
      %v1365 = vld [vmem:[%s3 + $0x98] sm:$0xf]
      %v1366 = vld [vmem:[%s3 + $0x9c] sm:$0xf]
      %v1367 = vld [vmem:[%s3 + $0xa0] sm:$0xf]
      %v1368 = vld [vmem:[%s3 + $0xa4] sm:$0xf]
      %v1369 = vld [vmem:[%s3 + $0xa8] sm:$0xf]
      %v1370 = vld [vmem:[%s3 + $0xac] sm:$0xf]
      %v1371 = vld [vmem:[%s3 + $0xb0] sm:$0xf]
      %v1372 = vld [vmem:[%s3 + $0xb4] sm:$0xf]
      %v1373 = vld [vmem:[%s3 + $0xb8] sm:$0xf]
      %v1374 = vld [vmem:[%s3 + $0xbc] sm:$0xf]
      %v1376 = vunpack.c.l.b16 %v1358
      %v1377 = vpack.c.b16 %v1376, %v1376
      %vm1378 = vsmask.f32 4352
      %v1380 = vshrl.u32 %v797, 16
      %v1382 = vrot.slane %v1380, 3
      %v1383 = vshll.u32 %v797, 16
      %v1385 = vrot.slane %v1383, 4
      %v1386 = vor.u32 %v1382, %v1385
      %v1387 = vrot.slane %v1032, 3
      %v1388 = vrot.slane %v1035, 4
      %v1389 = vor.u32 %v1387, %v1388
      %v1390 = vsel %vm1378, %v1386, %v1389
      %v1391 = vrot.slane %v1041, 3
      %v1392 = vrot.slane %v1044, 4
      %v1393 = vor.u32 %v1391, %v1392
      %v1394 = vsel %vm1378, %v1389, %v1393
      %v1395 = vrot.slane %v1050, 3
      %v1396 = vrot.slane %v1053, 4
      %v1397 = vor.u32 %v1395, %v1396
      %v1398 = vsel %vm1378, %v1393, %v1397
      %v1399 = vrot.slane %v1059, 3
      %v1400 = vrot.slane %v1062, 4
      %v1401 = vor.u32 %v1399, %v1400
      %v1402 = vsel %vm1378, %v1397, %v1401
      %v1403 = vrot.slane %v1068, 3
      %v1404 = vrot.slane %v1071, 4
      %v1405 = vor.u32 %v1403, %v1404
      %v1406 = vsel %vm1378, %v1401, %v1405
      %v1407 = vrot.slane %v1077, 3
      %v1408 = vrot.slane %v1080, 4
      %v1409 = vor.u32 %v1407, %v1408
      %v1410 = vsel %vm1378, %v1405, %v1409
      %v1411 = vrot.slane %v1086, 3
      %v1412 = vrot.slane %v1089, 4
      %v1413 = vor.u32 %v1411, %v1412
      %v1414 = vsel %vm1378, %v1409, %v1413
      %v1415 = vrot.slane %v1095, 3
      %v1416 = vrot.slane %v1098, 4
      %v1417 = vor.u32 %v1415, %v1416
      %v1418 = vsel %vm1378, %v1413, %v1417
      %v1419 = vrot.slane %v1104, 3
      %v1420 = vrot.slane %v1107, 4
      %v1421 = vor.u32 %v1419, %v1420
      %v1422 = vsel %vm1378, %v1417, %v1421
      %v1423 = vrot.slane %v1113, 3
      %v1424 = vrot.slane %v1116, 4
      %v1425 = vor.u32 %v1423, %v1424
      %v1426 = vsel %vm1378, %v1421, %v1425
      %v1427 = vrot.slane %v1122, 3
      %v1428 = vrot.slane %v1125, 4
      %v1429 = vor.u32 %v1427, %v1428
      %v1430 = vsel %vm1378, %v1425, %v1429
      %v1431 = vrot.slane %v1131, 3
      %v1432 = vrot.slane %v1134, 4
      %v1433 = vor.u32 %v1431, %v1432
      %v1434 = vsel %vm1378, %v1429, %v1433
      %v1435 = vrot.slane %v1140, 3
      %v1436 = vrot.slane %v1143, 4
      %v1437 = vor.u32 %v1435, %v1436
      %v1438 = vsel %vm1378, %v1433, %v1437
      %v1439 = vrot.slane %v1149, 3
      %v1440 = vrot.slane %v1152, 4
      %v1441 = vor.u32 %v1439, %v1440
      %v1442 = vsel %vm1378, %v1437, %v1441
      %v1443 = vrot.slane %v1158, 3
      %v1444 = vrot.slane %v1161, 4
      %v1445 = vor.u32 %v1443, %v1444
      %v1446 = vsel %vm1378, %v1441, %v1445
      %v1447 = vrot.slane %v1167, 3
      %v1448 = vrot.slane %v1170, 4
      %v1449 = vor.u32 %v1447, %v1448
      %v1450 = vsel %vm1378, %v1445, %v1449
      %v1451 = vrot.slane %v1176, 3
      %v1452 = vrot.slane %v1179, 4
      %v1453 = vor.u32 %v1451, %v1452
      %v1454 = vsel %vm1378, %v1449, %v1453
      %v1456 = vshrl.u32 %v1377, 16
      %v1458 = vrot.slane %v1456, 3
      %v1459 = vshll.u32 %v1377, 16
      %v1461 = vrot.slane %v1459, 4
      %v1462 = vor.u32 %v1458, %v1461
      %v1463 = vsel %vm1378, %v1453, %v1462
      %v1498 = vunpack.c.l.b16 %v1359
      %v1499 = vunpack.c.l.b16 %v1360
      %v1500 = vunpack.c.l.b16 %v1361
      %v1501 = vunpack.c.l.b16 %v1362
      %v1502 = vunpack.c.l.b16 %v1363
      %v1503 = vunpack.c.l.b16 %v1364
      %v1504 = vunpack.c.l.b16 %v1365
      %v1505 = vunpack.c.l.b16 %v1366
      %v1506 = vunpack.c.l.b16 %v1367
      %v1507 = vunpack.c.l.b16 %v1368
      %v1508 = vunpack.c.l.b16 %v1369
      %v1509 = vunpack.c.l.b16 %v1370
      %v1510 = vunpack.c.l.b16 %v1371
      %v1511 = vunpack.c.l.b16 %v1372
      %v1512 = vunpack.c.l.b16 %v1373
      %v1513 = vunpack.c.l.b16 %v1374
      %v1514 = vpack.c.b16 %v1499, %v1498
      %v1515 = vpack.c.b16 %v1501, %v1500
      %v1516 = vpack.c.b16 %v1503, %v1502
      %v1517 = vpack.c.b16 %v1505, %v1504
      %v1518 = vpack.c.b16 %v1507, %v1506
      %v1519 = vpack.c.b16 %v1509, %v1508
      %v1520 = vpack.c.b16 %v1511, %v1510
      %v1521 = vpack.c.b16 %v1513, %v1512
      %1530 = vmatpush.bf16.msra.mxu0 %v1521
      %1531 = vmatpush.bf16.msra.mxu0 %v1520
      %1532 = vmatpush.bf16.msra.mxu0 %v1519
      %1533 = vmatpush.bf16.msra.mxu0 %v1518
      %1534 = vmatpush.bf16.msra.mxu0 %v1517
      %1535 = vmatpush.bf16.msra.mxu0 %v1516
      %1536 = vmatpush.bf16.msra.mxu0 %v1515
      %1537 = vmatpush.bf16.msra.mxu0 %v1514
      %1538 = vmatmul.bf16.gmra.mxu0 %v1390
      %v1539 = vpop.f32.mrf.mxu0
      %v1540 = vadd.f32 0.0, %v1539
      %v1541 = vpop.f32.mrf.mxu0
      %v1542 = vadd.f32 0.0, %v1541
      %1543 = vmatmul.bf16.gmra.mxu0 %v1394
      %v1544 = vpop.f32.mrf.mxu0
      %v1545 = vadd.f32 0.0, %v1544
      %v1546 = vpop.f32.mrf.mxu0
      %v1547 = vadd.f32 0.0, %v1546
      %1548 = vmatmul.bf16.gmra.mxu0 %v1398
      %v1549 = vpop.f32.mrf.mxu0
      %v1550 = vadd.f32 0.0, %v1549
      %v1551 = vpop.f32.mrf.mxu0
      %v1552 = vadd.f32 0.0, %v1551
      %1553 = vmatmul.bf16.gmra.mxu0 %v1402
      %v1554 = vpop.f32.mrf.mxu0
      %v1555 = vadd.f32 0.0, %v1554
      %v1556 = vpop.f32.mrf.mxu0
      %v1557 = vadd.f32 0.0, %v1556
      %1558 = vmatmul.bf16.gmra.mxu0 %v1406
      %v1559 = vpop.f32.mrf.mxu0
      %v1560 = vadd.f32 0.0, %v1559
      %v1561 = vpop.f32.mrf.mxu0
      %v1562 = vadd.f32 0.0, %v1561
      %1563 = vmatmul.bf16.gmra.mxu0 %v1410
      %v1564 = vpop.f32.mrf.mxu0
      %v1565 = vadd.f32 0.0, %v1564
      %v1566 = vpop.f32.mrf.mxu0
      %v1567 = vadd.f32 0.0, %v1566
      %1568 = vmatmul.bf16.gmra.mxu0 %v1414
      %v1569 = vpop.f32.mrf.mxu0
      %v1570 = vadd.f32 0.0, %v1569
      %v1571 = vpop.f32.mrf.mxu0
      %v1572 = vadd.f32 0.0, %v1571
      %1573 = vmatmul.bf16.gmra.mxu0 %v1418
      %v1574 = vpop.f32.mrf.mxu0
      %v1575 = vadd.f32 0.0, %v1574
      %v1576 = vpop.f32.mrf.mxu0
      %v1577 = vadd.f32 0.0, %v1576
      %1578 = vmatmul.bf16.gmra.mxu0 %v1422
      %v1579 = vpop.f32.mrf.mxu0
      %v1580 = vadd.f32 0.0, %v1579
      %v1581 = vpop.f32.mrf.mxu0
      %v1582 = vadd.f32 0.0, %v1581
      %1583 = vmatmul.bf16.gmra.mxu0 %v1426
      %v1584 = vpop.f32.mrf.mxu0
      %v1585 = vadd.f32 0.0, %v1584
      %v1586 = vpop.f32.mrf.mxu0
      %v1587 = vadd.f32 0.0, %v1586
      %1588 = vmatmul.bf16.gmra.mxu0 %v1430
      %v1589 = vpop.f32.mrf.mxu0
      %v1590 = vadd.f32 0.0, %v1589
      %v1591 = vpop.f32.mrf.mxu0
      %v1592 = vadd.f32 0.0, %v1591
      %1593 = vmatmul.bf16.gmra.mxu0 %v1434
      %v1594 = vpop.f32.mrf.mxu0
      %v1595 = vadd.f32 0.0, %v1594
      %v1596 = vpop.f32.mrf.mxu0
      %v1597 = vadd.f32 0.0, %v1596
      %1598 = vmatmul.bf16.gmra.mxu0 %v1438
      %v1599 = vpop.f32.mrf.mxu0
      %v1600 = vadd.f32 0.0, %v1599
      %v1601 = vpop.f32.mrf.mxu0
      %v1602 = vadd.f32 0.0, %v1601
      %1603 = vmatmul.bf16.gmra.mxu0 %v1442
      %v1604 = vpop.f32.mrf.mxu0
      %v1605 = vadd.f32 0.0, %v1604
      %v1606 = vpop.f32.mrf.mxu0
      %v1607 = vadd.f32 0.0, %v1606
      %1608 = vmatmul.bf16.gmra.mxu0 %v1446
      %v1609 = vpop.f32.mrf.mxu0
      %v1610 = vadd.f32 0.0, %v1609
      %v1611 = vpop.f32.mrf.mxu0
      %v1612 = vadd.f32 0.0, %v1611
      %1613 = vmatmul.bf16.gmra.mxu0 %v1450
      %v1614 = vpop.f32.mrf.mxu0
      %v1615 = vadd.f32 0.0, %v1614
      %v1616 = vpop.f32.mrf.mxu0
      %v1617 = vadd.f32 0.0, %v1616
      %1618 = vmatmul.bf16.gmra.mxu0 %v1454
      %v1619 = vpop.f32.mrf.mxu0
      %v1620 = vadd.f32 0.0, %v1619
      %v1621 = vpop.f32.mrf.mxu0
      %v1622 = vadd.f32 0.0, %v1621
      %1623 = vmatmul.bf16.gmra.mxu0 %v1463
      %v1624 = vpop.f32.mrf.mxu0
      %v1625 = vadd.f32 0.0, %v1624
      %v1626 = vpop.f32.mrf.mxu0
      %v1627 = vadd.f32 0.0, %v1626
      %1628 = vdwg.mxu0
      %v1629 = vadd.f32 %v1269, %v1540
      %v1630 = vadd.f32 %v1271, %v1542
      %v1631 = vadd.f32 %v1274, %v1545
      %v1632 = vadd.f32 %v1276, %v1547
      %v1633 = vadd.f32 %v1279, %v1550
      %v1634 = vadd.f32 %v1281, %v1552
      %v1635 = vadd.f32 %v1284, %v1555
      %v1636 = vadd.f32 %v1286, %v1557
      %v1637 = vadd.f32 %v1289, %v1560
      %v1638 = vadd.f32 %v1291, %v1562
      %v1639 = vadd.f32 %v1294, %v1565
      %v1640 = vadd.f32 %v1296, %v1567
      %v1641 = vadd.f32 %v1299, %v1570
      %v1642 = vadd.f32 %v1301, %v1572
      %v1643 = vadd.f32 %v1304, %v1575
      %v1644 = vadd.f32 %v1306, %v1577
      %v1645 = vadd.f32 %v1309, %v1580
      %v1646 = vadd.f32 %v1311, %v1582
      %v1647 = vadd.f32 %v1314, %v1585
      %v1648 = vadd.f32 %v1316, %v1587
      %v1649 = vadd.f32 %v1319, %v1590
      %v1650 = vadd.f32 %v1321, %v1592
      %v1651 = vadd.f32 %v1324, %v1595
      %v1652 = vadd.f32 %v1326, %v1597
      %v1653 = vadd.f32 %v1329, %v1600
      %v1654 = vadd.f32 %v1331, %v1602
      %v1655 = vadd.f32 %v1334, %v1605
      %v1656 = vadd.f32 %v1336, %v1607
      %v1657 = vadd.f32 %v1339, %v1610
      %v1658 = vadd.f32 %v1341, %v1612
      %v1659 = vadd.f32 %v1344, %v1615
      %v1660 = vadd.f32 %v1346, %v1617
      %v1661 = vadd.f32 %v1349, %v1620
      %v1662 = vadd.f32 %v1351, %v1622
      %v1663 = vadd.f32 %v1354, %v1625
      %v1664 = vadd.f32 %v1356, %v1627
      %v1665 = vld [vmem:[#allocation2 + $0xc] sm:$0x8]
      %v1666 = vld [vmem:[#allocation2 + $0x10] sm:$0xf]
      %v1667 = vld [vmem:[#allocation2 + $0x14] sm:$0xf]
      %v1668 = vld [vmem:[#allocation2 + $0x18] sm:$0xf]
      %v1669 = vld [vmem:[#allocation2 + $0x1c] sm:$0xf]
      %v1670 = vld [vmem:[#allocation2 + $0x20] sm:$0xf]
      %v1671 = vld [vmem:[#allocation2 + $0x24] sm:$0xf]
      %v1672 = vld [vmem:[#allocation2 + $0x28] sm:$0xf]
      %v1673 = vld [vmem:[#allocation2 + $0x2c] sm:$0xf]
      %v1674 = vld [vmem:[#allocation2 + $0x30] sm:$0xf]
      %v1675 = vld [vmem:[#allocation2 + $0x34] sm:$0xf]
      %v1676 = vld [vmem:[#allocation2 + $0x38] sm:$0xf]
      %v1677 = vld [vmem:[#allocation2 + $0x3c] sm:$0xf]
      %v1678 = vld [vmem:[#allocation2 + $0x40] sm:$0xf]
      %v1679 = vld [vmem:[#allocation2 + $0x44] sm:$0xf]
      %v1680 = vld [vmem:[#allocation2 + $0x48] sm:$0xf]
      %v1681 = vld [vmem:[#allocation2 + $0x4c] sm:$0xf]
      %v1682 = vld [vmem:[#allocation2 + $0x50] sm:$0xf]
      %v1683 = vld [vmem:[#allocation2 + $0x54] sm:$0xf]
      %v1684 = vld [vmem:[#allocation2 + $0x58] sm:$0xf]
      %v1685 = vld [vmem:[#allocation2 + $0x5c] sm:$0xf]
      %v1686 = vld [vmem:[#allocation2 + $0x60] sm:$0xf]
      %v1687 = vld [vmem:[#allocation2 + $0x64] sm:$0xf]
      %v1688 = vld [vmem:[#allocation2 + $0x68] sm:$0xf]
      %v1689 = vld [vmem:[#allocation2 + $0x6c] sm:$0xf]
      %v1690 = vld [vmem:[#allocation2 + $0x70] sm:$0xf]
      %v1691 = vld [vmem:[#allocation2 + $0x74] sm:$0xf]
      %v1692 = vld [vmem:[#allocation2 + $0x78] sm:$0xf]
      %v1693 = vld [vmem:[#allocation2 + $0x7c] sm:$0xf]
      %v1694 = vld [vmem:[#allocation2 + $0x80] sm:$0xf]
      %v1695 = vld [vmem:[#allocation2 + $0x84] sm:$0xf]
      %v1696 = vld [vmem:[#allocation2 + $0x88] sm:$0xf]
      %v1697 = vld [vmem:[#allocation2 + $0x8c] sm:$0xf]
      %v1698 = vld [vmem:[#allocation2 + $0x90] sm:$0xf]
      %v1699 = vld [vmem:[#allocation2 + $0x94] sm:$0xf]
      %v1700 = vld [vmem:[#allocation2 + $0x98] sm:$0xf]
      %v1701 = vld [vmem:[#allocation2 + $0x9c] sm:$0xf]
      %v1702 = vld [vmem:[%s3 + $0xc0] sm:$0xf]
      %v1703 = vld [vmem:[%s3 + $0xc4] sm:$0xf]
      %v1704 = vld [vmem:[%s3 + $0xc8] sm:$0xf]
      %v1705 = vld [vmem:[%s3 + $0xcc] sm:$0xf]
      %v1706 = vld [vmem:[%s3 + $0xd0] sm:$0xf]
      %v1707 = vld [vmem:[%s3 + $0xd4] sm:$0xf]
      %v1708 = vld [vmem:[%s3 + $0xd8] sm:$0xf]
      %v1709 = vld [vmem:[%s3 + $0xdc] sm:$0xf]
      %v1710 = vld [vmem:[%s3 + $0xe0] sm:$0xf]
      %v1711 = vld [vmem:[%s3 + $0xe4] sm:$0xf]
      %v1712 = vld [vmem:[%s3 + $0xe8] sm:$0xf]
      %v1713 = vld [vmem:[%s3 + $0xec] sm:$0xf]
      %v1714 = vld [vmem:[%s3 + $0xf0] sm:$0xf]
      %v1715 = vld [vmem:[%s3 + $0xf4] sm:$0xf]
      %v1716 = vld [vmem:[%s3 + $0xf8] sm:$0xf]
      %v1717 = vld [vmem:[%s3 + $0xfc] sm:$0xf]
      %v1755 = vunpack.c.l.b16 %v1665
      %v1756 = vunpack.c.l.b16 %v1666
      %v1757 = vunpack.c.l.b16 %v1667
      %v1758 = vunpack.c.l.b16 %v1668
      %v1759 = vunpack.c.l.b16 %v1669
      %v1760 = vunpack.c.l.b16 %v1670
      %v1761 = vunpack.c.l.b16 %v1671
      %v1762 = vunpack.c.l.b16 %v1672
      %v1763 = vunpack.c.l.b16 %v1673
      %v1764 = vunpack.c.l.b16 %v1674
      %v1765 = vunpack.c.l.b16 %v1675
      %v1766 = vunpack.c.l.b16 %v1676
      %v1767 = vunpack.c.l.b16 %v1677
      %v1768 = vunpack.c.l.b16 %v1678
      %v1769 = vunpack.c.l.b16 %v1679
      %v1770 = vunpack.c.l.b16 %v1680
      %v1771 = vunpack.c.l.b16 %v1681
      %v1772 = vunpack.c.l.b16 %v1682
      %v1773 = vunpack.c.l.b16 %v1683
      %v1774 = vunpack.c.l.b16 %v1684
      %v1775 = vunpack.c.l.b16 %v1685
      %v1776 = vunpack.c.l.b16 %v1686
      %v1777 = vunpack.c.l.b16 %v1687
      %v1778 = vunpack.c.l.b16 %v1688
      %v1779 = vunpack.c.l.b16 %v1689
      %v1780 = vunpack.c.l.b16 %v1690
      %v1781 = vunpack.c.l.b16 %v1691
      %v1782 = vunpack.c.l.b16 %v1692
      %v1783 = vunpack.c.l.b16 %v1693
      %v1784 = vunpack.c.l.b16 %v1694
      %v1785 = vunpack.c.l.b16 %v1695
      %v1786 = vunpack.c.l.b16 %v1696
      %v1787 = vunpack.c.l.b16 %v1697
      %v1788 = vunpack.c.l.b16 %v1698
      %v1789 = vunpack.c.l.b16 %v1699
      %v1790 = vunpack.c.l.b16 %v1700
      %v1791 = vunpack.c.l.b16 %v1701
      %v1792 = vpack.c.b16 %v1756, %v1755
      %v1793 = vpack.c.b16 %v1758, %v1757
      %v1794 = vpack.c.b16 %v1760, %v1759
      %v1795 = vpack.c.b16 %v1762, %v1761
      %v1796 = vpack.c.b16 %v1764, %v1763
      %v1797 = vpack.c.b16 %v1766, %v1765
      %v1798 = vpack.c.b16 %v1768, %v1767
      %v1799 = vpack.c.b16 %v1770, %v1769
      %v1800 = vpack.c.b16 %v1772, %v1771
      %v1801 = vpack.c.b16 %v1774, %v1773
      %v1802 = vpack.c.b16 %v1776, %v1775
      %v1803 = vpack.c.b16 %v1778, %v1777
      %v1804 = vpack.c.b16 %v1780, %v1779
      %v1805 = vpack.c.b16 %v1782, %v1781
      %v1806 = vpack.c.b16 %v1784, %v1783
      %v1807 = vpack.c.b16 %v1786, %v1785
      %v1808 = vpack.c.b16 %v1788, %v1787
      %v1809 = vpack.c.b16 %v1790, %v1789
      %v1810 = vpack.c.b16 %v1791, %v1791
      %v1812 = vshrl.u32 %v1792, 16
      %v1814 = vrot.slane %v1812, 3
      %v1815 = vshll.u32 %v1792, 16
      %v1817 = vrot.slane %v1815, 4
      %v1818 = vor.u32 %v1814, %v1817
      %v1820 = vshrl.u32 %v1793, 16
      %v1822 = vrot.slane %v1820, 3
      %v1823 = vshll.u32 %v1793, 16
      %v1825 = vrot.slane %v1823, 4
      %v1826 = vor.u32 %v1822, %v1825
      %v1827 = vsel %vm1378, %v1818, %v1826
      %v1829 = vshrl.u32 %v1794, 16
      %v1831 = vrot.slane %v1829, 3
      %v1832 = vshll.u32 %v1794, 16
      %v1834 = vrot.slane %v1832, 4
      %v1835 = vor.u32 %v1831, %v1834
      %v1836 = vsel %vm1378, %v1826, %v1835
      %v1838 = vshrl.u32 %v1795, 16
      %v1840 = vrot.slane %v1838, 3
      %v1841 = vshll.u32 %v1795, 16
      %v1843 = vrot.slane %v1841, 4
      %v1844 = vor.u32 %v1840, %v1843
      %v1845 = vsel %vm1378, %v1835, %v1844
      %v1847 = vshrl.u32 %v1796, 16
      %v1849 = vrot.slane %v1847, 3
      %v1850 = vshll.u32 %v1796, 16
      %v1852 = vrot.slane %v1850, 4
      %v1853 = vor.u32 %v1849, %v1852
      %v1854 = vsel %vm1378, %v1844, %v1853
      %v1856 = vshrl.u32 %v1797, 16
      %v1858 = vrot.slane %v1856, 3
      %v1859 = vshll.u32 %v1797, 16
      %v1861 = vrot.slane %v1859, 4
      %v1862 = vor.u32 %v1858, %v1861
      %v1863 = vsel %vm1378, %v1853, %v1862
      %v1865 = vshrl.u32 %v1798, 16
      %v1867 = vrot.slane %v1865, 3
      %v1868 = vshll.u32 %v1798, 16
      %v1870 = vrot.slane %v1868, 4
      %v1871 = vor.u32 %v1867, %v1870
      %v1872 = vsel %vm1378, %v1862, %v1871
      %v1874 = vshrl.u32 %v1799, 16
      %v1876 = vrot.slane %v1874, 3
      %v1877 = vshll.u32 %v1799, 16
      %v1879 = vrot.slane %v1877, 4
      %v1880 = vor.u32 %v1876, %v1879
      %v1881 = vsel %vm1378, %v1871, %v1880
      %v1883 = vshrl.u32 %v1800, 16
      %v1885 = vrot.slane %v1883, 3
      %v1886 = vshll.u32 %v1800, 16
      %v1888 = vrot.slane %v1886, 4
      %v1889 = vor.u32 %v1885, %v1888
      %v1890 = vsel %vm1378, %v1880, %v1889
      %v1892 = vshrl.u32 %v1801, 16
      %v1894 = vrot.slane %v1892, 3
      %v1895 = vshll.u32 %v1801, 16
      %v1897 = vrot.slane %v1895, 4
      %v1898 = vor.u32 %v1894, %v1897
      %v1899 = vsel %vm1378, %v1889, %v1898
      %v1901 = vshrl.u32 %v1802, 16
      %v1903 = vrot.slane %v1901, 3
      %v1904 = vshll.u32 %v1802, 16
      %v1906 = vrot.slane %v1904, 4
      %v1907 = vor.u32 %v1903, %v1906
      %v1908 = vsel %vm1378, %v1898, %v1907
      %v1910 = vshrl.u32 %v1803, 16
      %v1912 = vrot.slane %v1910, 3
      %v1913 = vshll.u32 %v1803, 16
      %v1915 = vrot.slane %v1913, 4
      %v1916 = vor.u32 %v1912, %v1915
      %v1917 = vsel %vm1378, %v1907, %v1916
      %v1919 = vshrl.u32 %v1804, 16
      %v1921 = vrot.slane %v1919, 3
      %v1922 = vshll.u32 %v1804, 16
      %v1924 = vrot.slane %v1922, 4
      %v1925 = vor.u32 %v1921, %v1924
      %v1926 = vsel %vm1378, %v1916, %v1925
      %v1928 = vshrl.u32 %v1805, 16
      %v1930 = vrot.slane %v1928, 3
      %v1931 = vshll.u32 %v1805, 16
      %v1933 = vrot.slane %v1931, 4
      %v1934 = vor.u32 %v1930, %v1933
      %v1935 = vsel %vm1378, %v1925, %v1934
      %v1937 = vshrl.u32 %v1806, 16
      %v1939 = vrot.slane %v1937, 3
      %v1940 = vshll.u32 %v1806, 16
      %v1942 = vrot.slane %v1940, 4
      %v1943 = vor.u32 %v1939, %v1942
      %v1944 = vsel %vm1378, %v1934, %v1943
      %v1946 = vshrl.u32 %v1807, 16
      %v1948 = vrot.slane %v1946, 3
      %v1949 = vshll.u32 %v1807, 16
      %v1951 = vrot.slane %v1949, 4
      %v1952 = vor.u32 %v1948, %v1951
      %v1953 = vsel %vm1378, %v1943, %v1952
      %v1955 = vshrl.u32 %v1808, 16
      %v1957 = vrot.slane %v1955, 3
      %v1958 = vshll.u32 %v1808, 16
      %v1960 = vrot.slane %v1958, 4
      %v1961 = vor.u32 %v1957, %v1960
      %v1962 = vsel %vm1378, %v1952, %v1961
      %v1964 = vshrl.u32 %v1809, 16
      %v1966 = vrot.slane %v1964, 3
      %v1967 = vshll.u32 %v1809, 16
      %v1969 = vrot.slane %v1967, 4
      %v1970 = vor.u32 %v1966, %v1969
      %v1971 = vsel %vm1378, %v1961, %v1970
      %v1973 = vshrl.u32 %v1810, 16
      %v1975 = vrot.slane %v1973, 3
      %v1976 = vshll.u32 %v1810, 16
      %v1978 = vrot.slane %v1976, 4
      %v1979 = vor.u32 %v1975, %v1978
      %v1980 = vsel %vm1378, %v1970, %v1979
      %v2015 = vunpack.c.l.b16 %v1702
      %v2016 = vunpack.c.l.b16 %v1703
      %v2017 = vunpack.c.l.b16 %v1704
      %v2018 = vunpack.c.l.b16 %v1705
      %v2019 = vunpack.c.l.b16 %v1706
      %v2020 = vunpack.c.l.b16 %v1707
      %v2021 = vunpack.c.l.b16 %v1708
      %v2022 = vunpack.c.l.b16 %v1709
      %v2023 = vunpack.c.l.b16 %v1710
      %v2024 = vunpack.c.l.b16 %v1711
      %v2025 = vunpack.c.l.b16 %v1712
      %v2026 = vunpack.c.l.b16 %v1713
      %v2027 = vunpack.c.l.b16 %v1714
      %v2028 = vunpack.c.l.b16 %v1715
      %v2029 = vunpack.c.l.b16 %v1716
      %v2030 = vunpack.c.l.b16 %v1717
      %v2031 = vpack.c.b16 %v2016, %v2015
      %v2032 = vpack.c.b16 %v2018, %v2017
      %v2033 = vpack.c.b16 %v2020, %v2019
      %v2034 = vpack.c.b16 %v2022, %v2021
      %v2035 = vpack.c.b16 %v2024, %v2023
      %v2036 = vpack.c.b16 %v2026, %v2025
      %v2037 = vpack.c.b16 %v2028, %v2027
      %v2038 = vpack.c.b16 %v2030, %v2029
      %2047 = vmatpush.bf16.msra.mxu0 %v2038
      %2048 = vmatpush.bf16.msra.mxu0 %v2037
      %2049 = vmatpush.bf16.msra.mxu0 %v2036
      %2050 = vmatpush.bf16.msra.mxu0 %v2035
      %2051 = vmatpush.bf16.msra.mxu0 %v2034
      %2052 = vmatpush.bf16.msra.mxu0 %v2033
      %2053 = vmatpush.bf16.msra.mxu0 %v2032
      %2054 = vmatpush.bf16.msra.mxu0 %v2031
      %2055 = vmatmul.bf16.gmra.mxu0 %v1827
      %v2056 = vpop.f32.mrf.mxu0
      %v2057 = vadd.f32 0.0, %v2056
      %v2058 = vpop.f32.mrf.mxu0
      %v2059 = vadd.f32 0.0, %v2058
      %2060 = vmatmul.bf16.gmra.mxu0 %v1836
      %v2061 = vpop.f32.mrf.mxu0
      %v2062 = vadd.f32 0.0, %v2061
      %v2063 = vpop.f32.mrf.mxu0
      %v2064 = vadd.f32 0.0, %v2063
      %2065 = vmatmul.bf16.gmra.mxu0 %v1845
      %v2066 = vpop.f32.mrf.mxu0
      %v2067 = vadd.f32 0.0, %v2066
      %v2068 = vpop.f32.mrf.mxu0
      %v2069 = vadd.f32 0.0, %v2068
      %2070 = vmatmul.bf16.gmra.mxu0 %v1854
      %v2071 = vpop.f32.mrf.mxu0
      %v2072 = vadd.f32 0.0, %v2071
      %v2073 = vpop.f32.mrf.mxu0
      %v2074 = vadd.f32 0.0, %v2073
      %2075 = vmatmul.bf16.gmra.mxu0 %v1863
      %v2076 = vpop.f32.mrf.mxu0
      %v2077 = vadd.f32 0.0, %v2076
      %v2078 = vpop.f32.mrf.mxu0
      %v2079 = vadd.f32 0.0, %v2078
      %2080 = vmatmul.bf16.gmra.mxu0 %v1872
      %v2081 = vpop.f32.mrf.mxu0
      %v2082 = vadd.f32 0.0, %v2081
      %v2083 = vpop.f32.mrf.mxu0
      %v2084 = vadd.f32 0.0, %v2083
      %2085 = vmatmul.bf16.gmra.mxu0 %v1881
      %v2086 = vpop.f32.mrf.mxu0
      %v2087 = vadd.f32 0.0, %v2086
      %v2088 = vpop.f32.mrf.mxu0
      %v2089 = vadd.f32 0.0, %v2088
      %2090 = vmatmul.bf16.gmra.mxu0 %v1890
      %v2091 = vpop.f32.mrf.mxu0
      %v2092 = vadd.f32 0.0, %v2091
      %v2093 = vpop.f32.mrf.mxu0
      %v2094 = vadd.f32 0.0, %v2093
      %2095 = vmatmul.bf16.gmra.mxu0 %v1899
      %v2096 = vpop.f32.mrf.mxu0
      %v2097 = vadd.f32 0.0, %v2096
      %v2098 = vpop.f32.mrf.mxu0
      %v2099 = vadd.f32 0.0, %v2098
      %2100 = vmatmul.bf16.gmra.mxu0 %v1908
      %v2101 = vpop.f32.mrf.mxu0
      %v2102 = vadd.f32 0.0, %v2101
      %v2103 = vpop.f32.mrf.mxu0
      %v2104 = vadd.f32 0.0, %v2103
      %2105 = vmatmul.bf16.gmra.mxu0 %v1917
      %v2106 = vpop.f32.mrf.mxu0
      %v2107 = vadd.f32 0.0, %v2106
      %v2108 = vpop.f32.mrf.mxu0
      %v2109 = vadd.f32 0.0, %v2108
      %2110 = vmatmul.bf16.gmra.mxu0 %v1926
      %v2111 = vpop.f32.mrf.mxu0
      %v2112 = vadd.f32 0.0, %v2111
      %v2113 = vpop.f32.mrf.mxu0
      %v2114 = vadd.f32 0.0, %v2113
      %2115 = vmatmul.bf16.gmra.mxu0 %v1935
      %v2116 = vpop.f32.mrf.mxu0
      %v2117 = vadd.f32 0.0, %v2116
      %v2118 = vpop.f32.mrf.mxu0
      %v2119 = vadd.f32 0.0, %v2118
      %2120 = vmatmul.bf16.gmra.mxu0 %v1944
      %v2121 = vpop.f32.mrf.mxu0
      %v2122 = vadd.f32 0.0, %v2121
      %v2123 = vpop.f32.mrf.mxu0
      %v2124 = vadd.f32 0.0, %v2123
      %2125 = vmatmul.bf16.gmra.mxu0 %v1953
      %v2126 = vpop.f32.mrf.mxu0
      %v2127 = vadd.f32 0.0, %v2126
      %v2128 = vpop.f32.mrf.mxu0
      %v2129 = vadd.f32 0.0, %v2128
      %2130 = vmatmul.bf16.gmra.mxu0 %v1962
      %v2131 = vpop.f32.mrf.mxu0
      %v2132 = vadd.f32 0.0, %v2131
      %v2133 = vpop.f32.mrf.mxu0
      %v2134 = vadd.f32 0.0, %v2133
      %2135 = vmatmul.bf16.gmra.mxu0 %v1971
      %v2136 = vpop.f32.mrf.mxu0
      %v2137 = vadd.f32 0.0, %v2136
      %v2138 = vpop.f32.mrf.mxu0
      %v2139 = vadd.f32 0.0, %v2138
      %2140 = vmatmul.bf16.gmra.mxu0 %v1980
      %v2141 = vpop.f32.mrf.mxu0
      %v2142 = vadd.f32 0.0, %v2141
      %v2143 = vpop.f32.mrf.mxu0
      %v2144 = vadd.f32 0.0, %v2143
      %2145 = vdwg.mxu0
      %v2146 = vadd.f32 %v1629, %v2057
      %v2147 = vadd.f32 %v1630, %v2059
      %v2148 = vadd.f32 %v1631, %v2062
      %v2149 = vadd.f32 %v1632, %v2064
      %v2150 = vadd.f32 %v1633, %v2067
      %v2151 = vadd.f32 %v1634, %v2069
      %v2152 = vadd.f32 %v1635, %v2072
      %v2153 = vadd.f32 %v1636, %v2074
      %v2154 = vadd.f32 %v1637, %v2077
      %v2155 = vadd.f32 %v1638, %v2079
      %v2156 = vadd.f32 %v1639, %v2082
      %v2157 = vadd.f32 %v1640, %v2084
      %v2158 = vadd.f32 %v1641, %v2087
      %v2159 = vadd.f32 %v1642, %v2089
      %v2160 = vadd.f32 %v1643, %v2092
      %v2161 = vadd.f32 %v1644, %v2094
      %v2162 = vadd.f32 %v1645, %v2097
      %v2163 = vadd.f32 %v1646, %v2099
      %v2164 = vadd.f32 %v1647, %v2102
      %v2165 = vadd.f32 %v1648, %v2104
      %v2166 = vadd.f32 %v1649, %v2107
      %v2167 = vadd.f32 %v1650, %v2109
      %v2168 = vadd.f32 %v1651, %v2112
      %v2169 = vadd.f32 %v1652, %v2114
      %v2170 = vadd.f32 %v1653, %v2117
      %v2171 = vadd.f32 %v1654, %v2119
      %v2172 = vadd.f32 %v1655, %v2122
      %v2173 = vadd.f32 %v1656, %v2124
      %v2174 = vadd.f32 %v1657, %v2127
      %v2175 = vadd.f32 %v1658, %v2129
      %v2176 = vadd.f32 %v1659, %v2132
      %v2177 = vadd.f32 %v1660, %v2134
      %v2178 = vadd.f32 %v1661, %v2137
      %v2179 = vadd.f32 %v1662, %v2139
      %v2180 = vadd.f32 %v1663, %v2142
      %v2181 = vadd.f32 %v1664, %v2144
      %v2182 = vld [vmem:[%s3 + $0x100] sm:$0xf]
      %v2183 = vld [vmem:[%s3 + $0x104] sm:$0xf]
      %v2184 = vld [vmem:[%s3 + $0x108] sm:$0xf]
      %v2185 = vld [vmem:[%s3 + $0x10c] sm:$0xf]
      %v2186 = vld [vmem:[%s3 + $0x110] sm:$0xf]
      %v2187 = vld [vmem:[%s3 + $0x114] sm:$0xf]
      %v2188 = vld [vmem:[%s3 + $0x118] sm:$0xf]
      %v2189 = vld [vmem:[%s3 + $0x11c] sm:$0xf]
      %v2190 = vld [vmem:[%s3 + $0x120] sm:$0xf]
      %v2191 = vld [vmem:[%s3 + $0x124] sm:$0xf]
      %v2192 = vld [vmem:[%s3 + $0x128] sm:$0xf]
      %v2193 = vld [vmem:[%s3 + $0x12c] sm:$0xf]
      %v2194 = vld [vmem:[%s3 + $0x130] sm:$0xf]
      %v2195 = vld [vmem:[%s3 + $0x134] sm:$0xf]
      %v2196 = vld [vmem:[%s3 + $0x138] sm:$0xf]
      %v2197 = vld [vmem:[%s3 + $0x13c] sm:$0xf]
      %v2198 = vpack.c.b16 %v1757, %v1756
      %v2199 = vpack.c.b16 %v1759, %v1758
      %v2200 = vpack.c.b16 %v1761, %v1760
      %v2201 = vpack.c.b16 %v1763, %v1762
      %v2202 = vpack.c.b16 %v1765, %v1764
      %v2203 = vpack.c.b16 %v1767, %v1766
      %v2204 = vpack.c.b16 %v1769, %v1768
      %v2205 = vpack.c.b16 %v1771, %v1770
      %v2206 = vpack.c.b16 %v1773, %v1772
      %v2207 = vpack.c.b16 %v1775, %v1774
      %v2208 = vpack.c.b16 %v1777, %v1776
      %v2209 = vpack.c.b16 %v1779, %v1778
      %v2210 = vpack.c.b16 %v1781, %v1780
      %v2211 = vpack.c.b16 %v1783, %v1782
      %v2212 = vpack.c.b16 %v1785, %v1784
      %v2213 = vpack.c.b16 %v1787, %v1786
      %v2214 = vpack.c.b16 %v1789, %v1788
      %v2215 = vpack.c.b16 %v1791, %v1790
      %v2250 = vunpack.c.l.b16 %v2182
      %v2251 = vunpack.c.l.b16 %v2183
      %v2252 = vunpack.c.l.b16 %v2184
      %v2253 = vunpack.c.l.b16 %v2185
      %v2254 = vunpack.c.l.b16 %v2186
      %v2255 = vunpack.c.l.b16 %v2187
      %v2256 = vunpack.c.l.b16 %v2188
      %v2257 = vunpack.c.l.b16 %v2189
      %v2258 = vunpack.c.l.b16 %v2190
      %v2259 = vunpack.c.l.b16 %v2191
      %v2260 = vunpack.c.l.b16 %v2192
      %v2261 = vunpack.c.l.b16 %v2193
      %v2262 = vunpack.c.l.b16 %v2194
      %v2263 = vunpack.c.l.b16 %v2195
      %v2264 = vunpack.c.l.b16 %v2196
      %v2265 = vunpack.c.l.b16 %v2197
      %v2266 = vpack.c.b16 %v2251, %v2250
      %v2267 = vpack.c.b16 %v2253, %v2252
      %v2268 = vpack.c.b16 %v2255, %v2254
      %v2269 = vpack.c.b16 %v2257, %v2256
      %v2270 = vpack.c.b16 %v2259, %v2258
      %v2271 = vpack.c.b16 %v2261, %v2260
      %v2272 = vpack.c.b16 %v2263, %v2262
      %v2273 = vpack.c.b16 %v2265, %v2264
      %2282 = vmatpush.bf16.msra.mxu0 %v2273
      %2283 = vmatpush.bf16.msra.mxu0 %v2272
      %2284 = vmatpush.bf16.msra.mxu0 %v2271
      %2285 = vmatpush.bf16.msra.mxu0 %v2270
      %2286 = vmatpush.bf16.msra.mxu0 %v2269
      %2287 = vmatpush.bf16.msra.mxu0 %v2268
      %2288 = vmatpush.bf16.msra.mxu0 %v2267
      %2289 = vmatpush.bf16.msra.mxu0 %v2266
      %2290 = vmatmul.bf16.gmra.mxu0 %v2198
      %v2291 = vpop.f32.mrf.mxu0
      %v2292 = vadd.f32 0.0, %v2291
      %v2293 = vpop.f32.mrf.mxu0
      %v2294 = vadd.f32 0.0, %v2293
      %2295 = vmatmul.bf16.gmra.mxu0 %v2199
      %v2296 = vpop.f32.mrf.mxu0
      %v2297 = vadd.f32 0.0, %v2296
      %v2298 = vpop.f32.mrf.mxu0
      %v2299 = vadd.f32 0.0, %v2298
      %2300 = vmatmul.bf16.gmra.mxu0 %v2200
      %v2301 = vpop.f32.mrf.mxu0
      %v2302 = vadd.f32 0.0, %v2301
      %v2303 = vpop.f32.mrf.mxu0
      %v2304 = vadd.f32 0.0, %v2303
      %2305 = vmatmul.bf16.gmra.mxu0 %v2201
      %v2306 = vpop.f32.mrf.mxu0
      %v2307 = vadd.f32 0.0, %v2306
      %v2308 = vpop.f32.mrf.mxu0
      %v2309 = vadd.f32 0.0, %v2308
      %2310 = vmatmul.bf16.gmra.mxu0 %v2202
      %v2311 = vpop.f32.mrf.mxu0
      %v2312 = vadd.f32 0.0, %v2311
      %v2313 = vpop.f32.mrf.mxu0
      %v2314 = vadd.f32 0.0, %v2313
      %2315 = vmatmul.bf16.gmra.mxu0 %v2203
      %v2316 = vpop.f32.mrf.mxu0
      %v2317 = vadd.f32 0.0, %v2316
      %v2318 = vpop.f32.mrf.mxu0
      %v2319 = vadd.f32 0.0, %v2318
      %2320 = vmatmul.bf16.gmra.mxu0 %v2204
      %v2321 = vpop.f32.mrf.mxu0
      %v2322 = vadd.f32 0.0, %v2321
      %v2323 = vpop.f32.mrf.mxu0
      %v2324 = vadd.f32 0.0, %v2323
      %2325 = vmatmul.bf16.gmra.mxu0 %v2205
      %v2326 = vpop.f32.mrf.mxu0
      %v2327 = vadd.f32 0.0, %v2326
      %v2328 = vpop.f32.mrf.mxu0
      %v2329 = vadd.f32 0.0, %v2328
      %2330 = vmatmul.bf16.gmra.mxu0 %v2206
      %v2331 = vpop.f32.mrf.mxu0
      %v2332 = vadd.f32 0.0, %v2331
      %v2333 = vpop.f32.mrf.mxu0
      %v2334 = vadd.f32 0.0, %v2333
      %2335 = vmatmul.bf16.gmra.mxu0 %v2207
      %v2336 = vpop.f32.mrf.mxu0
      %v2337 = vadd.f32 0.0, %v2336
      %v2338 = vpop.f32.mrf.mxu0
      %v2339 = vadd.f32 0.0, %v2338
      %2340 = vmatmul.bf16.gmra.mxu0 %v2208
      %v2341 = vpop.f32.mrf.mxu0
      %v2342 = vadd.f32 0.0, %v2341
      %v2343 = vpop.f32.mrf.mxu0
      %v2344 = vadd.f32 0.0, %v2343
      %2345 = vmatmul.bf16.gmra.mxu0 %v2209
      %v2346 = vpop.f32.mrf.mxu0
      %v2347 = vadd.f32 0.0, %v2346
      %v2348 = vpop.f32.mrf.mxu0
      %v2349 = vadd.f32 0.0, %v2348
      %2350 = vmatmul.bf16.gmra.mxu0 %v2210
      %v2351 = vpop.f32.mrf.mxu0
      %v2352 = vadd.f32 0.0, %v2351
      %v2353 = vpop.f32.mrf.mxu0
      %v2354 = vadd.f32 0.0, %v2353
      %2355 = vmatmul.bf16.gmra.mxu0 %v2211
      %v2356 = vpop.f32.mrf.mxu0
      %v2357 = vadd.f32 0.0, %v2356
      %v2358 = vpop.f32.mrf.mxu0
      %v2359 = vadd.f32 0.0, %v2358
      %2360 = vmatmul.bf16.gmra.mxu0 %v2212
      %v2361 = vpop.f32.mrf.mxu0
      %v2362 = vadd.f32 0.0, %v2361
      %v2363 = vpop.f32.mrf.mxu0
      %v2364 = vadd.f32 0.0, %v2363
      %2365 = vmatmul.bf16.gmra.mxu0 %v2213
      %v2366 = vpop.f32.mrf.mxu0
      %v2367 = vadd.f32 0.0, %v2366
      %v2368 = vpop.f32.mrf.mxu0
      %v2369 = vadd.f32 0.0, %v2368
      %2370 = vmatmul.bf16.gmra.mxu0 %v2214
      %v2371 = vpop.f32.mrf.mxu0
      %v2372 = vadd.f32 0.0, %v2371
      %v2373 = vpop.f32.mrf.mxu0
      %v2374 = vadd.f32 0.0, %v2373
      %2375 = vmatmul.bf16.gmra.mxu0 %v2215
      %v2376 = vpop.f32.mrf.mxu0
      %v2377 = vadd.f32 0.0, %v2376
      %v2378 = vpop.f32.mrf.mxu0
      %v2379 = vadd.f32 0.0, %v2378
      %2380 = vdwg.mxu0
      %v2381 = vadd.f32 %v2146, %v2292
      %v2382 = vadd.f32 %v2147, %v2294
      %v2383 = vadd.f32 %v2148, %v2297
      %v2384 = vadd.f32 %v2149, %v2299
      %v2385 = vadd.f32 %v2150, %v2302
      %v2386 = vadd.f32 %v2151, %v2304
      %v2387 = vadd.f32 %v2152, %v2307
      %v2388 = vadd.f32 %v2153, %v2309
      %v2389 = vadd.f32 %v2154, %v2312
      %v2390 = vadd.f32 %v2155, %v2314
      %v2391 = vadd.f32 %v2156, %v2317
      %v2392 = vadd.f32 %v2157, %v2319
      %v2393 = vadd.f32 %v2158, %v2322
      %v2394 = vadd.f32 %v2159, %v2324
      %v2395 = vadd.f32 %v2160, %v2327
      %v2396 = vadd.f32 %v2161, %v2329
      %v2397 = vadd.f32 %v2162, %v2332
      %v2398 = vadd.f32 %v2163, %v2334
      %v2399 = vadd.f32 %v2164, %v2337
      %v2400 = vadd.f32 %v2165, %v2339
      %v2401 = vadd.f32 %v2166, %v2342
      %v2402 = vadd.f32 %v2167, %v2344
      %v2403 = vadd.f32 %v2168, %v2347
      %v2404 = vadd.f32 %v2169, %v2349
      %v2405 = vadd.f32 %v2170, %v2352
      %v2406 = vadd.f32 %v2171, %v2354
      %v2407 = vadd.f32 %v2172, %v2357
      %v2408 = vadd.f32 %v2173, %v2359
      %v2409 = vadd.f32 %v2174, %v2362
      %v2410 = vadd.f32 %v2175, %v2364
      %v2411 = vadd.f32 %v2176, %v2367
      %v2412 = vadd.f32 %v2177, %v2369
      %v2413 = vadd.f32 %v2178, %v2372
      %v2414 = vadd.f32 %v2179, %v2374
      %v2415 = vadd.f32 %v2180, %v2377
      %v2416 = vadd.f32 %v2181, %v2379
      %v2417 = vld [vmem:[#allocation2 + $0x10] sm:$0xf]
      %v2418 = vld [vmem:[#allocation2 + $0x14] sm:$0xf]
      %v2419 = vld [vmem:[#allocation2 + $0x18] sm:$0xf]
      %v2420 = vld [vmem:[#allocation2 + $0x1c] sm:$0xf]
      %v2421 = vld [vmem:[#allocation2 + $0x20] sm:$0xf]
      %v2422 = vld [vmem:[#allocation2 + $0x24] sm:$0xf]
      %v2423 = vld [vmem:[#allocation2 + $0x28] sm:$0xf]
      %v2424 = vld [vmem:[#allocation2 + $0x2c] sm:$0xf]
      %v2425 = vld [vmem:[#allocation2 + $0x30] sm:$0xf]
      %v2426 = vld [vmem:[#allocation2 + $0x34] sm:$0xf]
      %v2427 = vld [vmem:[#allocation2 + $0x38] sm:$0xf]
      %v2428 = vld [vmem:[#allocation2 + $0x3c] sm:$0xf]
      %v2429 = vld [vmem:[#allocation2 + $0x40] sm:$0xf]
      %v2430 = vld [vmem:[#allocation2 + $0x44] sm:$0xf]
      %v2431 = vld [vmem:[#allocation2 + $0x48] sm:$0xf]
      %v2432 = vld [vmem:[#allocation2 + $0x4c] sm:$0xf]
      %v2433 = vld [vmem:[#allocation2 + $0x50] sm:$0xf]
      %v2434 = vld [vmem:[#allocation2 + $0x54] sm:$0xf]
      %v2435 = vld [vmem:[#allocation2 + $0x58] sm:$0xf]
      %v2436 = vld [vmem:[#allocation2 + $0x5c] sm:$0xf]
      %v2437 = vld [vmem:[#allocation2 + $0x60] sm:$0xf]
      %v2438 = vld [vmem:[#allocation2 + $0x64] sm:$0xf]
      %v2439 = vld [vmem:[#allocation2 + $0x68] sm:$0xf]
      %v2440 = vld [vmem:[#allocation2 + $0x6c] sm:$0xf]
      %v2441 = vld [vmem:[#allocation2 + $0x70] sm:$0xf]
      %v2442 = vld [vmem:[#allocation2 + $0x74] sm:$0xf]
      %v2443 = vld [vmem:[#allocation2 + $0x78] sm:$0xf]
      %v2444 = vld [vmem:[#allocation2 + $0x7c] sm:$0xf]
      %v2445 = vld [vmem:[#allocation2 + $0x80] sm:$0xf]
      %v2446 = vld [vmem:[#allocation2 + $0x84] sm:$0xf]
      %v2447 = vld [vmem:[#allocation2 + $0x88] sm:$0xf]
      %v2448 = vld [vmem:[#allocation2 + $0x8c] sm:$0xf]
      %v2449 = vld [vmem:[#allocation2 + $0x90] sm:$0xf]
      %v2450 = vld [vmem:[#allocation2 + $0x94] sm:$0xf]
      %v2451 = vld [vmem:[#allocation2 + $0x98] sm:$0xf]
      %v2452 = vld [vmem:[#allocation2 + $0x9c] sm:$0xf]
      %v2453 = vld [vmem:[#allocation2 + $0xa0] sm:$0x1]
      %v2454 = vld [vmem:[%s3 + $0x140] sm:$0xf]
      %v2455 = vld [vmem:[%s3 + $0x144] sm:$0xf]
      %v2456 = vld [vmem:[%s3 + $0x148] sm:$0xf]
      %v2457 = vld [vmem:[%s3 + $0x14c] sm:$0xf]
      %v2458 = vld [vmem:[%s3 + $0x150] sm:$0xf]
      %v2459 = vld [vmem:[%s3 + $0x154] sm:$0xf]
      %v2460 = vld [vmem:[%s3 + $0x158] sm:$0xf]
      %v2461 = vld [vmem:[%s3 + $0x15c] sm:$0xf]
      %v2462 = vld [vmem:[%s3 + $0x160] sm:$0xf]
      %v2463 = vld [vmem:[%s3 + $0x164] sm:$0xf]
      %v2464 = vld [vmem:[%s3 + $0x168] sm:$0xf]
      %v2465 = vld [vmem:[%s3 + $0x16c] sm:$0xf]
      %v2466 = vld [vmem:[%s3 + $0x170] sm:$0xf]
      %v2467 = vld [vmem:[%s3 + $0x174] sm:$0xf]
      %v2468 = vld [vmem:[%s3 + $0x178] sm:$0xf]
      %v2469 = vld [vmem:[%s3 + $0x17c] sm:$0xf]
      %v2507 = vunpack.c.l.b16 %v2417
      %v2508 = vunpack.c.l.b16 %v2418
      %v2509 = vunpack.c.l.b16 %v2419
      %v2510 = vunpack.c.l.b16 %v2420
      %v2511 = vunpack.c.l.b16 %v2421
      %v2512 = vunpack.c.l.b16 %v2422
      %v2513 = vunpack.c.l.b16 %v2423
      %v2514 = vunpack.c.l.b16 %v2424
      %v2515 = vunpack.c.l.b16 %v2425
      %v2516 = vunpack.c.l.b16 %v2426
      %v2517 = vunpack.c.l.b16 %v2427
      %v2518 = vunpack.c.l.b16 %v2428
      %v2519 = vunpack.c.l.b16 %v2429
      %v2520 = vunpack.c.l.b16 %v2430
      %v2521 = vunpack.c.l.b16 %v2431
      %v2522 = vunpack.c.l.b16 %v2432
      %v2523 = vunpack.c.l.b16 %v2433
      %v2524 = vunpack.c.l.b16 %v2434
      %v2525 = vunpack.c.l.b16 %v2435
      %v2526 = vunpack.c.l.b16 %v2436
      %v2527 = vunpack.c.l.b16 %v2437
      %v2528 = vunpack.c.l.b16 %v2438
      %v2529 = vunpack.c.l.b16 %v2439
      %v2530 = vunpack.c.l.b16 %v2440
      %v2531 = vunpack.c.l.b16 %v2441
      %v2532 = vunpack.c.l.b16 %v2442
      %v2533 = vunpack.c.l.b16 %v2443
      %v2534 = vunpack.c.l.b16 %v2444
      %v2535 = vunpack.c.l.b16 %v2445
      %v2536 = vunpack.c.l.b16 %v2446
      %v2537 = vunpack.c.l.b16 %v2447
      %v2538 = vunpack.c.l.b16 %v2448
      %v2539 = vunpack.c.l.b16 %v2449
      %v2540 = vunpack.c.l.b16 %v2450
      %v2541 = vunpack.c.l.b16 %v2451
      %v2542 = vunpack.c.l.b16 %v2452
      %v2543 = vunpack.c.l.b16 %v2453
      %v2544 = vpack.c.b16 %v2508, %v2507
      %v2545 = vpack.c.b16 %v2510, %v2509
      %v2546 = vpack.c.b16 %v2512, %v2511
      %v2547 = vpack.c.b16 %v2514, %v2513
      %v2548 = vpack.c.b16 %v2516, %v2515
      %v2549 = vpack.c.b16 %v2518, %v2517
      %v2550 = vpack.c.b16 %v2520, %v2519
      %v2551 = vpack.c.b16 %v2522, %v2521
      %v2552 = vpack.c.b16 %v2524, %v2523
      %v2553 = vpack.c.b16 %v2526, %v2525
      %v2554 = vpack.c.b16 %v2528, %v2527
      %v2555 = vpack.c.b16 %v2530, %v2529
      %v2556 = vpack.c.b16 %v2532, %v2531
      %v2557 = vpack.c.b16 %v2534, %v2533
      %v2558 = vpack.c.b16 %v2536, %v2535
      %v2559 = vpack.c.b16 %v2538, %v2537
      %v2560 = vpack.c.b16 %v2540, %v2539
      %v2561 = vpack.c.b16 %v2542, %v2541
      %v2562 = vpack.c.b16 %v2543, %v2543
      %vm2563 = vsmask.f32 7424
      %v2565 = vshrl.u32 %v2544, 16
      %v2567 = vshll.u32 %v2544, 16
      %v2569 = vrot.slane %v2567, 1
      %v2570 = vor.u32 %v2565, %v2569
      %v2572 = vshll.u32 %v2545, 16
      %v2574 = vrot.slane %v2572, 1
      %v2575 = vsel %vm2563, %v2570, %v2574
      %v2576 = vshrl.u32 %v2545, 16
      %v2578 = vor.u32 %v2576, %v2574
      %v2580 = vshll.u32 %v2546, 16
      %v2582 = vrot.slane %v2580, 1
      %v2583 = vsel %vm2563, %v2578, %v2582
      %v2584 = vshrl.u32 %v2546, 16
      %v2586 = vor.u32 %v2584, %v2582
      %v2588 = vshll.u32 %v2547, 16
      %v2590 = vrot.slane %v2588, 1
      %v2591 = vsel %vm2563, %v2586, %v2590
      %v2592 = vshrl.u32 %v2547, 16
      %v2594 = vor.u32 %v2592, %v2590
      %v2596 = vshll.u32 %v2548, 16
      %v2598 = vrot.slane %v2596, 1
      %v2599 = vsel %vm2563, %v2594, %v2598
      %v2600 = vshrl.u32 %v2548, 16
      %v2602 = vor.u32 %v2600, %v2598
      %v2604 = vshll.u32 %v2549, 16
      %v2606 = vrot.slane %v2604, 1
      %v2607 = vsel %vm2563, %v2602, %v2606
      %v2608 = vshrl.u32 %v2549, 16
      %v2610 = vor.u32 %v2608, %v2606
      %v2612 = vshll.u32 %v2550, 16
      %v2614 = vrot.slane %v2612, 1
      %v2615 = vsel %vm2563, %v2610, %v2614
      %v2616 = vshrl.u32 %v2550, 16
      %v2618 = vor.u32 %v2616, %v2614
      %v2620 = vshll.u32 %v2551, 16
      %v2622 = vrot.slane %v2620, 1
      %v2623 = vsel %vm2563, %v2618, %v2622
      %v2624 = vshrl.u32 %v2551, 16
      %v2626 = vor.u32 %v2624, %v2622
      %v2628 = vshll.u32 %v2552, 16
      %v2630 = vrot.slane %v2628, 1
      %v2631 = vsel %vm2563, %v2626, %v2630
      %v2632 = vshrl.u32 %v2552, 16
      %v2634 = vor.u32 %v2632, %v2630
      %v2636 = vshll.u32 %v2553, 16
      %v2638 = vrot.slane %v2636, 1
      %v2639 = vsel %vm2563, %v2634, %v2638
      %v2640 = vshrl.u32 %v2553, 16
      %v2642 = vor.u32 %v2640, %v2638
      %v2644 = vshll.u32 %v2554, 16
      %v2646 = vrot.slane %v2644, 1
      %v2647 = vsel %vm2563, %v2642, %v2646
      %v2648 = vshrl.u32 %v2554, 16
      %v2650 = vor.u32 %v2648, %v2646
      %v2652 = vshll.u32 %v2555, 16
      %v2654 = vrot.slane %v2652, 1
      %v2655 = vsel %vm2563, %v2650, %v2654
      %v2656 = vshrl.u32 %v2555, 16
      %v2658 = vor.u32 %v2656, %v2654
      %v2660 = vshll.u32 %v2556, 16
      %v2662 = vrot.slane %v2660, 1
      %v2663 = vsel %vm2563, %v2658, %v2662
      %v2664 = vshrl.u32 %v2556, 16
      %v2666 = vor.u32 %v2664, %v2662
      %v2668 = vshll.u32 %v2557, 16
      %v2670 = vrot.slane %v2668, 1
      %v2671 = vsel %vm2563, %v2666, %v2670
      %v2672 = vshrl.u32 %v2557, 16
      %v2674 = vor.u32 %v2672, %v2670
      %v2676 = vshll.u32 %v2558, 16
      %v2678 = vrot.slane %v2676, 1
      %v2679 = vsel %vm2563, %v2674, %v2678
      %v2680 = vshrl.u32 %v2558, 16
      %v2682 = vor.u32 %v2680, %v2678
      %v2684 = vshll.u32 %v2559, 16
      %v2686 = vrot.slane %v2684, 1
      %v2687 = vsel %vm2563, %v2682, %v2686
      %v2688 = vshrl.u32 %v2559, 16
      %v2690 = vor.u32 %v2688, %v2686
      %v2692 = vshll.u32 %v2560, 16
      %v2694 = vrot.slane %v2692, 1
      %v2695 = vsel %vm2563, %v2690, %v2694
      %v2696 = vshrl.u32 %v2560, 16
      %v2698 = vor.u32 %v2696, %v2694
      %v2700 = vshll.u32 %v2561, 16
      %v2702 = vrot.slane %v2700, 1
      %v2703 = vsel %vm2563, %v2698, %v2702
      %v2704 = vshrl.u32 %v2561, 16
      %v2706 = vor.u32 %v2704, %v2702
      %v2708 = vshll.u32 %v2562, 16
      %v2710 = vrot.slane %v2708, 1
      %v2711 = vsel %vm2563, %v2706, %v2710
      %v2746 = vunpack.c.l.b16 %v2454
      %v2747 = vunpack.c.l.b16 %v2455
      %v2748 = vunpack.c.l.b16 %v2456
      %v2749 = vunpack.c.l.b16 %v2457
      %v2750 = vunpack.c.l.b16 %v2458
      %v2751 = vunpack.c.l.b16 %v2459
      %v2752 = vunpack.c.l.b16 %v2460
      %v2753 = vunpack.c.l.b16 %v2461
      %v2754 = vunpack.c.l.b16 %v2462
      %v2755 = vunpack.c.l.b16 %v2463
      %v2756 = vunpack.c.l.b16 %v2464
      %v2757 = vunpack.c.l.b16 %v2465
      %v2758 = vunpack.c.l.b16 %v2466
      %v2759 = vunpack.c.l.b16 %v2467
      %v2760 = vunpack.c.l.b16 %v2468
      %v2761 = vunpack.c.l.b16 %v2469
      %v2762 = vpack.c.b16 %v2747, %v2746
      %v2763 = vpack.c.b16 %v2749, %v2748
      %v2764 = vpack.c.b16 %v2751, %v2750
      %v2765 = vpack.c.b16 %v2753, %v2752
      %v2766 = vpack.c.b16 %v2755, %v2754
      %v2767 = vpack.c.b16 %v2757, %v2756
      %v2768 = vpack.c.b16 %v2759, %v2758
      %v2769 = vpack.c.b16 %v2761, %v2760
      %2778 = vmatpush.bf16.msra.mxu0 %v2769
      %2779 = vmatpush.bf16.msra.mxu0 %v2768
      %2780 = vmatpush.bf16.msra.mxu0 %v2767
      %2781 = vmatpush.bf16.msra.mxu0 %v2766
      %2782 = vmatpush.bf16.msra.mxu0 %v2765
      %2783 = vmatpush.bf16.msra.mxu0 %v2764
      %2784 = vmatpush.bf16.msra.mxu0 %v2763
      %2785 = vmatpush.bf16.msra.mxu0 %v2762
      %2786 = vmatmul.bf16.gmra.mxu0 %v2575
      %v2787 = vpop.f32.mrf.mxu0
      %v2788 = vadd.f32 0.0, %v2787
      %v2789 = vpop.f32.mrf.mxu0
      %v2790 = vadd.f32 0.0, %v2789
      %2791 = vmatmul.bf16.gmra.mxu0 %v2583
      %v2792 = vpop.f32.mrf.mxu0
      %v2793 = vadd.f32 0.0, %v2792
      %v2794 = vpop.f32.mrf.mxu0
      %v2795 = vadd.f32 0.0, %v2794
      %2796 = vmatmul.bf16.gmra.mxu0 %v2591
      %v2797 = vpop.f32.mrf.mxu0
      %v2798 = vadd.f32 0.0, %v2797
      %v2799 = vpop.f32.mrf.mxu0
      %v2800 = vadd.f32 0.0, %v2799
      %2801 = vmatmul.bf16.gmra.mxu0 %v2599
      %v2802 = vpop.f32.mrf.mxu0
      %v2803 = vadd.f32 0.0, %v2802
      %v2804 = vpop.f32.mrf.mxu0
      %v2805 = vadd.f32 0.0, %v2804
      %2806 = vmatmul.bf16.gmra.mxu0 %v2607
      %v2807 = vpop.f32.mrf.mxu0
      %v2808 = vadd.f32 0.0, %v2807
      %v2809 = vpop.f32.mrf.mxu0
      %v2810 = vadd.f32 0.0, %v2809
      %2811 = vmatmul.bf16.gmra.mxu0 %v2615
      %v2812 = vpop.f32.mrf.mxu0
      %v2813 = vadd.f32 0.0, %v2812
      %v2814 = vpop.f32.mrf.mxu0
      %v2815 = vadd.f32 0.0, %v2814
      %2816 = vmatmul.bf16.gmra.mxu0 %v2623
      %v2817 = vpop.f32.mrf.mxu0
      %v2818 = vadd.f32 0.0, %v2817
      %v2819 = vpop.f32.mrf.mxu0
      %v2820 = vadd.f32 0.0, %v2819
      %2821 = vmatmul.bf16.gmra.mxu0 %v2631
      %v2822 = vpop.f32.mrf.mxu0
      %v2823 = vadd.f32 0.0, %v2822
      %v2824 = vpop.f32.mrf.mxu0
      %v2825 = vadd.f32 0.0, %v2824
      %2826 = vmatmul.bf16.gmra.mxu0 %v2639
      %v2827 = vpop.f32.mrf.mxu0
      %v2828 = vadd.f32 0.0, %v2827
      %v2829 = vpop.f32.mrf.mxu0
      %v2830 = vadd.f32 0.0, %v2829
      %2831 = vmatmul.bf16.gmra.mxu0 %v2647
      %v2832 = vpop.f32.mrf.mxu0
      %v2833 = vadd.f32 0.0, %v2832
      %v2834 = vpop.f32.mrf.mxu0
      %v2835 = vadd.f32 0.0, %v2834
      %2836 = vmatmul.bf16.gmra.mxu0 %v2655
      %v2837 = vpop.f32.mrf.mxu0
      %v2838 = vadd.f32 0.0, %v2837
      %v2839 = vpop.f32.mrf.mxu0
      %v2840 = vadd.f32 0.0, %v2839
      %2841 = vmatmul.bf16.gmra.mxu0 %v2663
      %v2842 = vpop.f32.mrf.mxu0
      %v2843 = vadd.f32 0.0, %v2842
      %v2844 = vpop.f32.mrf.mxu0
      %v2845 = vadd.f32 0.0, %v2844
      %2846 = vmatmul.bf16.gmra.mxu0 %v2671
      %v2847 = vpop.f32.mrf.mxu0
      %v2848 = vadd.f32 0.0, %v2847
      %v2849 = vpop.f32.mrf.mxu0
      %v2850 = vadd.f32 0.0, %v2849
      %2851 = vmatmul.bf16.gmra.mxu0 %v2679
      %v2852 = vpop.f32.mrf.mxu0
      %v2853 = vadd.f32 0.0, %v2852
      %v2854 = vpop.f32.mrf.mxu0
      %v2855 = vadd.f32 0.0, %v2854
      %2856 = vmatmul.bf16.gmra.mxu0 %v2687
      %v2857 = vpop.f32.mrf.mxu0
      %v2858 = vadd.f32 0.0, %v2857
      %v2859 = vpop.f32.mrf.mxu0
      %v2860 = vadd.f32 0.0, %v2859
      %2861 = vmatmul.bf16.gmra.mxu0 %v2695
      %v2862 = vpop.f32.mrf.mxu0
      %v2863 = vadd.f32 0.0, %v2862
      %v2864 = vpop.f32.mrf.mxu0
      %v2865 = vadd.f32 0.0, %v2864
      %2866 = vmatmul.bf16.gmra.mxu0 %v2703
      %v2867 = vpop.f32.mrf.mxu0
      %v2868 = vadd.f32 0.0, %v2867
      %v2869 = vpop.f32.mrf.mxu0
      %v2870 = vadd.f32 0.0, %v2869
      %2871 = vmatmul.bf16.gmra.mxu0 %v2711
      %v2872 = vpop.f32.mrf.mxu0
      %v2873 = vadd.f32 0.0, %v2872
      %v2874 = vpop.f32.mrf.mxu0
      %v2875 = vadd.f32 0.0, %v2874
      %2876 = vdwg.mxu0
      %v2877 = vadd.f32 %v2381, %v2788
      %v2878 = vadd.f32 %v2382, %v2790
      %v2879 = vadd.f32 %v2383, %v2793
      %v2880 = vadd.f32 %v2384, %v2795
      %v2881 = vadd.f32 %v2385, %v2798
      %v2882 = vadd.f32 %v2386, %v2800
      %v2883 = vadd.f32 %v2387, %v2803
      %v2884 = vadd.f32 %v2388, %v2805
      %v2885 = vadd.f32 %v2389, %v2808
      %v2886 = vadd.f32 %v2390, %v2810
      %v2887 = vadd.f32 %v2391, %v2813
      %v2888 = vadd.f32 %v2392, %v2815
      %v2889 = vadd.f32 %v2393, %v2818
      %v2890 = vadd.f32 %v2394, %v2820
      %v2891 = vadd.f32 %v2395, %v2823
      %v2892 = vadd.f32 %v2396, %v2825
      %v2893 = vadd.f32 %v2397, %v2828
      %v2894 = vadd.f32 %v2398, %v2830
      %v2895 = vadd.f32 %v2399, %v2833
      %v2896 = vadd.f32 %v2400, %v2835
      %v2897 = vadd.f32 %v2401, %v2838
      %v2898 = vadd.f32 %v2402, %v2840
      %v2899 = vadd.f32 %v2403, %v2843
      %v2900 = vadd.f32 %v2404, %v2845
      %v2901 = vadd.f32 %v2405, %v2848
      %v2902 = vadd.f32 %v2406, %v2850
      %v2903 = vadd.f32 %v2407, %v2853
      %v2904 = vadd.f32 %v2408, %v2855
      %v2905 = vadd.f32 %v2409, %v2858
      %v2906 = vadd.f32 %v2410, %v2860
      %v2907 = vadd.f32 %v2411, %v2863
      %v2908 = vadd.f32 %v2412, %v2865
      %v2909 = vadd.f32 %v2413, %v2868
      %v2910 = vadd.f32 %v2414, %v2870
      %v2911 = vadd.f32 %v2415, %v2873
      %v2912 = vadd.f32 %v2416, %v2875
      %v2913 = vld [vmem:[#allocation2 + $0x18] sm:$0xf]
      %v2914 = vld [vmem:[#allocation2 + $0x1c] sm:$0xf]
      %v2915 = vld [vmem:[#allocation2 + $0x20] sm:$0xf]
      %v2916 = vld [vmem:[#allocation2 + $0x24] sm:$0xf]
      %v2917 = vld [vmem:[#allocation2 + $0x28] sm:$0xf]
      %v2918 = vld [vmem:[#allocation2 + $0x2c] sm:$0xf]
      %v2919 = vld [vmem:[#allocation2 + $0x30] sm:$0xf]
      %v2920 = vld [vmem:[#allocation2 + $0x34] sm:$0xf]
      %v2921 = vld [vmem:[#allocation2 + $0x38] sm:$0xf]
      %v2922 = vld [vmem:[#allocation2 + $0x3c] sm:$0xf]
      %v2923 = vld [vmem:[#allocation2 + $0x40] sm:$0xf]
      %v2924 = vld [vmem:[#allocation2 + $0x44] sm:$0xf]
      %v2925 = vld [vmem:[#allocation2 + $0x48] sm:$0xf]
      %v2926 = vld [vmem:[#allocation2 + $0x4c] sm:$0xf]
      %v2927 = vld [vmem:[#allocation2 + $0x50] sm:$0xf]
      %v2928 = vld [vmem:[#allocation2 + $0x54] sm:$0xf]
      %v2929 = vld [vmem:[#allocation2 + $0x58] sm:$0xf]
      %v2930 = vld [vmem:[#allocation2 + $0x5c] sm:$0xf]
      %v2931 = vld [vmem:[#allocation2 + $0x60] sm:$0xf]
      %v2932 = vld [vmem:[#allocation2 + $0x64] sm:$0xf]
      %v2933 = vld [vmem:[#allocation2 + $0x68] sm:$0xf]
      %v2934 = vld [vmem:[#allocation2 + $0x6c] sm:$0xf]
      %v2935 = vld [vmem:[#allocation2 + $0x70] sm:$0xf]
      %v2936 = vld [vmem:[#allocation2 + $0x74] sm:$0xf]
      %v2937 = vld [vmem:[#allocation2 + $0x78] sm:$0xf]
      %v2938 = vld [vmem:[#allocation2 + $0x7c] sm:$0xf]
      %v2939 = vld [vmem:[#allocation2 + $0x80] sm:$0xf]
      %v2940 = vld [vmem:[#allocation2 + $0x84] sm:$0xf]
      %v2941 = vld [vmem:[#allocation2 + $0x88] sm:$0xf]
      %v2942 = vld [vmem:[#allocation2 + $0x8c] sm:$0xf]
      %v2943 = vld [vmem:[#allocation2 + $0x90] sm:$0xf]
      %v2944 = vld [vmem:[#allocation2 + $0x94] sm:$0xf]
      %v2945 = vld [vmem:[#allocation2 + $0x98] sm:$0xf]
      %v2946 = vld [vmem:[#allocation2 + $0x9c] sm:$0xf]
      %v2947 = vld [vmem:[#allocation2 + $0xa0] sm:$0xf]
      %v2948 = vld [vmem:[#allocation2 + $0xa4] sm:$0xf]
      %v2949 = vld [vmem:[#allocation2 + $0xa8] sm:$0x1]
      %v2950 = vld [vmem:[%s3 + $0x180] sm:$0xf]
      %v2951 = vld [vmem:[%s3 + $0x184] sm:$0xf]
      %v2952 = vld [vmem:[%s3 + $0x188] sm:$0xf]
      %v2953 = vld [vmem:[%s3 + $0x18c] sm:$0xf]
      %v2954 = vld [vmem:[%s3 + $0x190] sm:$0xf]
      %v2955 = vld [vmem:[%s3 + $0x194] sm:$0xf]
      %v2956 = vld [vmem:[%s3 + $0x198] sm:$0xf]
      %v2957 = vld [vmem:[%s3 + $0x19c] sm:$0xf]
      %v2958 = vld [vmem:[%s3 + $0x1a0] sm:$0xf]
      %v2959 = vld [vmem:[%s3 + $0x1a4] sm:$0xf]
      %v2960 = vld [vmem:[%s3 + $0x1a8] sm:$0xf]
      %v2961 = vld [vmem:[%s3 + $0x1ac] sm:$0xf]
      %v2962 = vld [vmem:[%s3 + $0x1b0] sm:$0xf]
      %v2963 = vld [vmem:[%s3 + $0x1b4] sm:$0xf]
      %v2964 = vld [vmem:[%s3 + $0x1b8] sm:$0xf]
      %v2965 = vld [vmem:[%s3 + $0x1bc] sm:$0xf]
      %v3003 = vunpack.c.l.b16 %v2913
      %v3004 = vunpack.c.l.b16 %v2914
      %v3005 = vunpack.c.l.b16 %v2915
      %v3006 = vunpack.c.l.b16 %v2916
      %v3007 = vunpack.c.l.b16 %v2917
      %v3008 = vunpack.c.l.b16 %v2918
      %v3009 = vunpack.c.l.b16 %v2919
      %v3010 = vunpack.c.l.b16 %v2920
      %v3011 = vunpack.c.l.b16 %v2921
      %v3012 = vunpack.c.l.b16 %v2922
      %v3013 = vunpack.c.l.b16 %v2923
      %v3014 = vunpack.c.l.b16 %v2924
      %v3015 = vunpack.c.l.b16 %v2925
      %v3016 = vunpack.c.l.b16 %v2926
      %v3017 = vunpack.c.l.b16 %v2927
      %v3018 = vunpack.c.l.b16 %v2928
      %v3019 = vunpack.c.l.b16 %v2929
      %v3020 = vunpack.c.l.b16 %v2930
      %v3021 = vunpack.c.l.b16 %v2931
      %v3022 = vunpack.c.l.b16 %v2932
      %v3023 = vunpack.c.l.b16 %v2933
      %v3024 = vunpack.c.l.b16 %v2934
      %v3025 = vunpack.c.l.b16 %v2935
      %v3026 = vunpack.c.l.b16 %v2936
      %v3027 = vunpack.c.l.b16 %v2937
      %v3028 = vunpack.c.l.b16 %v2938
      %v3029 = vunpack.c.l.b16 %v2939
      %v3030 = vunpack.c.l.b16 %v2940
      %v3031 = vunpack.c.l.b16 %v2941
      %v3032 = vunpack.c.l.b16 %v2942
      %v3033 = vunpack.c.l.b16 %v2943
      %v3034 = vunpack.c.l.b16 %v2944
      %v3035 = vunpack.c.l.b16 %v2945
      %v3036 = vunpack.c.l.b16 %v2946
      %v3037 = vunpack.c.l.b16 %v2947
      %v3038 = vunpack.c.l.b16 %v2948
      %v3039 = vunpack.c.l.b16 %v2949
      %v3040 = vpack.c.b16 %v3004, %v3003
      %v3041 = vpack.c.b16 %v3006, %v3005
      %v3042 = vpack.c.b16 %v3008, %v3007
      %v3043 = vpack.c.b16 %v3010, %v3009
      %v3044 = vpack.c.b16 %v3012, %v3011
      %v3045 = vpack.c.b16 %v3014, %v3013
      %v3046 = vpack.c.b16 %v3016, %v3015
      %v3047 = vpack.c.b16 %v3018, %v3017
      %v3048 = vpack.c.b16 %v3020, %v3019
      %v3049 = vpack.c.b16 %v3022, %v3021
      %v3050 = vpack.c.b16 %v3024, %v3023
      %v3051 = vpack.c.b16 %v3026, %v3025
      %v3052 = vpack.c.b16 %v3028, %v3027
      %v3053 = vpack.c.b16 %v3030, %v3029
      %v3054 = vpack.c.b16 %v3032, %v3031
      %v3055 = vpack.c.b16 %v3034, %v3033
      %v3056 = vpack.c.b16 %v3036, %v3035
      %v3057 = vpack.c.b16 %v3038, %v3037
      %v3058 = vpack.c.b16 %v3039, %v3039
      %v3060 = vshrl.u32 %v3040, 16
      %v3062 = vshll.u32 %v3040, 16
      %v3064 = vrot.slane %v3062, 1
      %v3065 = vor.u32 %v3060, %v3064
      %v3067 = vshll.u32 %v3041, 16
      %v3069 = vrot.slane %v3067, 1
      %v3070 = vsel %vm2563, %v3065, %v3069
      %v3071 = vshrl.u32 %v3041, 16
      %v3073 = vor.u32 %v3071, %v3069
      %v3075 = vshll.u32 %v3042, 16
      %v3077 = vrot.slane %v3075, 1
      %v3078 = vsel %vm2563, %v3073, %v3077
      %v3079 = vshrl.u32 %v3042, 16
      %v3081 = vor.u32 %v3079, %v3077
      %v3083 = vshll.u32 %v3043, 16
      %v3085 = vrot.slane %v3083, 1
      %v3086 = vsel %vm2563, %v3081, %v3085
      %v3087 = vshrl.u32 %v3043, 16
      %v3089 = vor.u32 %v3087, %v3085
      %v3091 = vshll.u32 %v3044, 16
      %v3093 = vrot.slane %v3091, 1
      %v3094 = vsel %vm2563, %v3089, %v3093
      %v3095 = vshrl.u32 %v3044, 16
      %v3097 = vor.u32 %v3095, %v3093
      %v3099 = vshll.u32 %v3045, 16
      %v3101 = vrot.slane %v3099, 1
      %v3102 = vsel %vm2563, %v3097, %v3101
      %v3103 = vshrl.u32 %v3045, 16
      %v3105 = vor.u32 %v3103, %v3101
      %v3107 = vshll.u32 %v3046, 16
      %v3109 = vrot.slane %v3107, 1
      %v3110 = vsel %vm2563, %v3105, %v3109
      %v3111 = vshrl.u32 %v3046, 16
      %v3113 = vor.u32 %v3111, %v3109
      %v3115 = vshll.u32 %v3047, 16
      %v3117 = vrot.slane %v3115, 1
      %v3118 = vsel %vm2563, %v3113, %v3117
      %v3119 = vshrl.u32 %v3047, 16
      %v3121 = vor.u32 %v3119, %v3117
      %v3123 = vshll.u32 %v3048, 16
      %v3125 = vrot.slane %v3123, 1
      %v3126 = vsel %vm2563, %v3121, %v3125
      %v3127 = vshrl.u32 %v3048, 16
      %v3129 = vor.u32 %v3127, %v3125
      %v3131 = vshll.u32 %v3049, 16
      %v3133 = vrot.slane %v3131, 1
      %v3134 = vsel %vm2563, %v3129, %v3133
      %v3135 = vshrl.u32 %v3049, 16
      %v3137 = vor.u32 %v3135, %v3133
      %v3139 = vshll.u32 %v3050, 16
      %v3141 = vrot.slane %v3139, 1
      %v3142 = vsel %vm2563, %v3137, %v3141
      %v3143 = vshrl.u32 %v3050, 16
      %v3145 = vor.u32 %v3143, %v3141
      %v3147 = vshll.u32 %v3051, 16
      %v3149 = vrot.slane %v3147, 1
      %v3150 = vsel %vm2563, %v3145, %v3149
      %v3151 = vshrl.u32 %v3051, 16
      %v3153 = vor.u32 %v3151, %v3149
      %v3155 = vshll.u32 %v3052, 16
      %v3157 = vrot.slane %v3155, 1
      %v3158 = vsel %vm2563, %v3153, %v3157
      %v3159 = vshrl.u32 %v3052, 16
      %v3161 = vor.u32 %v3159, %v3157
      %v3163 = vshll.u32 %v3053, 16
      %v3165 = vrot.slane %v3163, 1
      %v3166 = vsel %vm2563, %v3161, %v3165
      %v3167 = vshrl.u32 %v3053, 16
      %v3169 = vor.u32 %v3167, %v3165
      %v3171 = vshll.u32 %v3054, 16
      %v3173 = vrot.slane %v3171, 1
      %v3174 = vsel %vm2563, %v3169, %v3173
      %v3175 = vshrl.u32 %v3054, 16
      %v3177 = vor.u32 %v3175, %v3173
      %v3179 = vshll.u32 %v3055, 16
      %v3181 = vrot.slane %v3179, 1
      %v3182 = vsel %vm2563, %v3177, %v3181
      %v3183 = vshrl.u32 %v3055, 16
      %v3185 = vor.u32 %v3183, %v3181
      %v3187 = vshll.u32 %v3056, 16
      %v3189 = vrot.slane %v3187, 1
      %v3190 = vsel %vm2563, %v3185, %v3189
      %v3191 = vshrl.u32 %v3056, 16
      %v3193 = vor.u32 %v3191, %v3189
      %v3195 = vshll.u32 %v3057, 16
      %v3197 = vrot.slane %v3195, 1
      %v3198 = vsel %vm2563, %v3193, %v3197
      %v3199 = vshrl.u32 %v3057, 16
      %v3201 = vor.u32 %v3199, %v3197
      %v3203 = vshll.u32 %v3058, 16
      %v3205 = vrot.slane %v3203, 1
      %v3206 = vsel %vm2563, %v3201, %v3205
      %v3241 = vunpack.c.l.b16 %v2950
      %v3242 = vunpack.c.l.b16 %v2951
      %v3243 = vunpack.c.l.b16 %v2952
      %v3244 = vunpack.c.l.b16 %v2953
      %v3245 = vunpack.c.l.b16 %v2954
      %v3246 = vunpack.c.l.b16 %v2955
      %v3247 = vunpack.c.l.b16 %v2956
      %v3248 = vunpack.c.l.b16 %v2957
      %v3249 = vunpack.c.l.b16 %v2958
      %v3250 = vunpack.c.l.b16 %v2959
      %v3251 = vunpack.c.l.b16 %v2960
      %v3252 = vunpack.c.l.b16 %v2961
      %v3253 = vunpack.c.l.b16 %v2962
      %v3254 = vunpack.c.l.b16 %v2963
      %v3255 = vunpack.c.l.b16 %v2964
      %v3256 = vunpack.c.l.b16 %v2965
      %v3257 = vpack.c.b16 %v3242, %v3241
      %v3258 = vpack.c.b16 %v3244, %v3243
      %v3259 = vpack.c.b16 %v3246, %v3245
      %v3260 = vpack.c.b16 %v3248, %v3247
      %v3261 = vpack.c.b16 %v3250, %v3249
      %v3262 = vpack.c.b16 %v3252, %v3251
      %v3263 = vpack.c.b16 %v3254, %v3253
      %v3264 = vpack.c.b16 %v3256, %v3255
      %3273 = vmatpush.bf16.msra.mxu0 %v3264
      %3274 = vmatpush.bf16.msra.mxu0 %v3263
      %3275 = vmatpush.bf16.msra.mxu0 %v3262
      %3276 = vmatpush.bf16.msra.mxu0 %v3261
      %3277 = vmatpush.bf16.msra.mxu0 %v3260
      %3278 = vmatpush.bf16.msra.mxu0 %v3259
      %3279 = vmatpush.bf16.msra.mxu0 %v3258
      %3280 = vmatpush.bf16.msra.mxu0 %v3257
      %3281 = vmatmul.bf16.gmra.mxu0 %v3070
      %v3282 = vpop.f32.mrf.mxu0
      %v3283 = vadd.f32 0.0, %v3282
      %v3284 = vpop.f32.mrf.mxu0
      %v3285 = vadd.f32 0.0, %v3284
      %3286 = vmatmul.bf16.gmra.mxu0 %v3078
      %v3287 = vpop.f32.mrf.mxu0
      %v3288 = vadd.f32 0.0, %v3287
      %v3289 = vpop.f32.mrf.mxu0
      %v3290 = vadd.f32 0.0, %v3289
      %3291 = vmatmul.bf16.gmra.mxu0 %v3086
      %v3292 = vpop.f32.mrf.mxu0
      %v3293 = vadd.f32 0.0, %v3292
      %v3294 = vpop.f32.mrf.mxu0
      %v3295 = vadd.f32 0.0, %v3294
      %3296 = vmatmul.bf16.gmra.mxu0 %v3094
      %v3297 = vpop.f32.mrf.mxu0
      %v3298 = vadd.f32 0.0, %v3297
      %v3299 = vpop.f32.mrf.mxu0
      %v3300 = vadd.f32 0.0, %v3299
      %3301 = vmatmul.bf16.gmra.mxu0 %v3102
      %v3302 = vpop.f32.mrf.mxu0
      %v3303 = vadd.f32 0.0, %v3302
      %v3304 = vpop.f32.mrf.mxu0
      %v3305 = vadd.f32 0.0, %v3304
      %3306 = vmatmul.bf16.gmra.mxu0 %v3110
      %v3307 = vpop.f32.mrf.mxu0
      %v3308 = vadd.f32 0.0, %v3307
      %v3309 = vpop.f32.mrf.mxu0
      %v3310 = vadd.f32 0.0, %v3309
      %3311 = vmatmul.bf16.gmra.mxu0 %v3118
      %v3312 = vpop.f32.mrf.mxu0
      %v3313 = vadd.f32 0.0, %v3312
      %v3314 = vpop.f32.mrf.mxu0
      %v3315 = vadd.f32 0.0, %v3314
      %3316 = vmatmul.bf16.gmra.mxu0 %v3126
      %v3317 = vpop.f32.mrf.mxu0
      %v3318 = vadd.f32 0.0, %v3317
      %v3319 = vpop.f32.mrf.mxu0
      %v3320 = vadd.f32 0.0, %v3319
      %3321 = vmatmul.bf16.gmra.mxu0 %v3134
      %v3322 = vpop.f32.mrf.mxu0
      %v3323 = vadd.f32 0.0, %v3322
      %v3324 = vpop.f32.mrf.mxu0
      %v3325 = vadd.f32 0.0, %v3324
      %3326 = vmatmul.bf16.gmra.mxu0 %v3142
      %v3327 = vpop.f32.mrf.mxu0
      %v3328 = vadd.f32 0.0, %v3327
      %v3329 = vpop.f32.mrf.mxu0
      %v3330 = vadd.f32 0.0, %v3329
      %3331 = vmatmul.bf16.gmra.mxu0 %v3150
      %v3332 = vpop.f32.mrf.mxu0
      %v3333 = vadd.f32 0.0, %v3332
      %v3334 = vpop.f32.mrf.mxu0
      %v3335 = vadd.f32 0.0, %v3334
      %3336 = vmatmul.bf16.gmra.mxu0 %v3158
      %v3337 = vpop.f32.mrf.mxu0
      %v3338 = vadd.f32 0.0, %v3337
      %v3339 = vpop.f32.mrf.mxu0
      %v3340 = vadd.f32 0.0, %v3339
      %3341 = vmatmul.bf16.gmra.mxu0 %v3166
      %v3342 = vpop.f32.mrf.mxu0
      %v3343 = vadd.f32 0.0, %v3342
      %v3344 = vpop.f32.mrf.mxu0
      %v3345 = vadd.f32 0.0, %v3344
      %3346 = vmatmul.bf16.gmra.mxu0 %v3174
      %v3347 = vpop.f32.mrf.mxu0
      %v3348 = vadd.f32 0.0, %v3347
      %v3349 = vpop.f32.mrf.mxu0
      %v3350 = vadd.f32 0.0, %v3349
      %3351 = vmatmul.bf16.gmra.mxu0 %v3182
      %v3352 = vpop.f32.mrf.mxu0
      %v3353 = vadd.f32 0.0, %v3352
      %v3354 = vpop.f32.mrf.mxu0
      %v3355 = vadd.f32 0.0, %v3354
      %3356 = vmatmul.bf16.gmra.mxu0 %v3190
      %v3357 = vpop.f32.mrf.mxu0
      %v3358 = vadd.f32 0.0, %v3357
      %v3359 = vpop.f32.mrf.mxu0
      %v3360 = vadd.f32 0.0, %v3359
      %3361 = vmatmul.bf16.gmra.mxu0 %v3198
      %v3362 = vpop.f32.mrf.mxu0
      %v3363 = vadd.f32 0.0, %v3362
      %v3364 = vpop.f32.mrf.mxu0
      %v3365 = vadd.f32 0.0, %v3364
      %3366 = vmatmul.bf16.gmra.mxu0 %v3206
      %v3367 = vpop.f32.mrf.mxu0
      %v3368 = vadd.f32 0.0, %v3367
      %v3369 = vpop.f32.mrf.mxu0
      %v3370 = vadd.f32 0.0, %v3369
      %3371 = vdwg.mxu0
      %v3372 = vadd.f32 %v2877, %v3283
      %v3373 = vadd.f32 %v2878, %v3285
      %v3374 = vadd.f32 %v2879, %v3288
      %v3375 = vadd.f32 %v2880, %v3290
      %v3376 = vadd.f32 %v2881, %v3293
      %v3377 = vadd.f32 %v2882, %v3295
      %v3378 = vadd.f32 %v2883, %v3298
      %v3379 = vadd.f32 %v2884, %v3300
      %v3380 = vadd.f32 %v2885, %v3303
      %v3381 = vadd.f32 %v2886, %v3305
      %v3382 = vadd.f32 %v2887, %v3308
      %v3383 = vadd.f32 %v2888, %v3310
      %v3384 = vadd.f32 %v2889, %v3313
      %v3385 = vadd.f32 %v2890, %v3315
      %v3386 = vadd.f32 %v2891, %v3318
      %v3387 = vadd.f32 %v2892, %v3320
      %v3388 = vadd.f32 %v2893, %v3323
      %v3389 = vadd.f32 %v2894, %v3325
      %v3390 = vadd.f32 %v2895, %v3328
      %v3391 = vadd.f32 %v2896, %v3330
      %v3392 = vadd.f32 %v2897, %v3333
      %v3393 = vadd.f32 %v2898, %v3335
      %v3394 = vadd.f32 %v2899, %v3338
      %v3395 = vadd.f32 %v2900, %v3340
      %v3396 = vadd.f32 %v2901, %v3343
      %v3397 = vadd.f32 %v2902, %v3345
      %v3398 = vadd.f32 %v2903, %v3348
      %v3399 = vadd.f32 %v2904, %v3350
      %v3400 = vadd.f32 %v2905, %v3353
      %v3401 = vadd.f32 %v2906, %v3355
      %v3402 = vadd.f32 %v2907, %v3358
      %v3403 = vadd.f32 %v2908, %v3360
      %v3404 = vadd.f32 %v2909, %v3363
      %v3405 = vadd.f32 %v2910, %v3365
      %v3406 = vadd.f32 %v2911, %v3368
      %v3407 = vadd.f32 %v2912, %v3370
      %v3408 = vld [vmem:[#allocation2 + $0x18] sm:$0xe]
      %v3409 = vld [vmem:[%s3 + $0x1c0] sm:$0xf]
      %v3410 = vld [vmem:[%s3 + $0x1c4] sm:$0xf]
      %v3411 = vld [vmem:[%s3 + $0x1c8] sm:$0xf]
      %v3412 = vld [vmem:[%s3 + $0x1cc] sm:$0xf]
      %v3413 = vld [vmem:[%s3 + $0x1d0] sm:$0xf]
      %v3414 = vld [vmem:[%s3 + $0x1d4] sm:$0xf]
      %v3415 = vld [vmem:[%s3 + $0x1d8] sm:$0xf]
      %v3416 = vld [vmem:[%s3 + $0x1dc] sm:$0xf]
      %v3417 = vld [vmem:[%s3 + $0x1e0] sm:$0xf]
      %v3418 = vld [vmem:[%s3 + $0x1e4] sm:$0xf]
      %v3419 = vld [vmem:[%s3 + $0x1e8] sm:$0xf]
      %v3420 = vld [vmem:[%s3 + $0x1ec] sm:$0xf]
      %v3421 = vld [vmem:[%s3 + $0x1f0] sm:$0xf]
      %v3422 = vld [vmem:[%s3 + $0x1f4] sm:$0xf]
      %v3423 = vld [vmem:[%s3 + $0x1f8] sm:$0xf]
      %v3424 = vld [vmem:[%s3 + $0x1fc] sm:$0xf]
      %v3426 = vunpack.c.l.b16 %v3408
      %v3427 = vpack.c.b16 %v3004, %v3426
      %vm3428 = vcmask 1046528
      %v3429 = vrot.slane %v3427, 1
      %v3430 = vrot.slane %v3041, 1
      %v3431 = vsel %vm3428, %v3429, %v3430
      %v3432 = vrot.slane %v3042, 1
      %v3433 = vsel %vm3428, %v3430, %v3432
      %v3434 = vrot.slane %v3043, 1
      %v3435 = vsel %vm3428, %v3432, %v3434
      %v3436 = vrot.slane %v3044, 1
      %v3437 = vsel %vm3428, %v3434, %v3436
      %v3438 = vrot.slane %v3045, 1
      %v3439 = vsel %vm3428, %v3436, %v3438
      %v3440 = vrot.slane %v3046, 1
      %v3441 = vsel %vm3428, %v3438, %v3440
      %v3442 = vrot.slane %v3047, 1
      %v3443 = vsel %vm3428, %v3440, %v3442
      %v3444 = vrot.slane %v3048, 1
      %v3445 = vsel %vm3428, %v3442, %v3444
      %v3446 = vrot.slane %v3049, 1
      %v3447 = vsel %vm3428, %v3444, %v3446
      %v3448 = vrot.slane %v3050, 1
      %v3449 = vsel %vm3428, %v3446, %v3448
      %v3450 = vrot.slane %v3051, 1
      %v3451 = vsel %vm3428, %v3448, %v3450
      %v3452 = vrot.slane %v3052, 1
      %v3453 = vsel %vm3428, %v3450, %v3452
      %v3454 = vrot.slane %v3053, 1
      %v3455 = vsel %vm3428, %v3452, %v3454
      %v3456 = vrot.slane %v3054, 1
      %v3457 = vsel %vm3428, %v3454, %v3456
      %v3458 = vrot.slane %v3055, 1
      %v3459 = vsel %vm3428, %v3456, %v3458
      %v3460 = vrot.slane %v3056, 1
      %v3461 = vsel %vm3428, %v3458, %v3460
      %v3462 = vrot.slane %v3057, 1
      %v3463 = vsel %vm3428, %v3460, %v3462
      %v3464 = vrot.slane %v3058, 1
      %v3465 = vsel %vm3428, %v3462, %v3464
      %v3500 = vunpack.c.l.b16 %v3409
      %v3501 = vunpack.c.l.b16 %v3410
      %v3502 = vunpack.c.l.b16 %v3411
      %v3503 = vunpack.c.l.b16 %v3412
      %v3504 = vunpack.c.l.b16 %v3413
      %v3505 = vunpack.c.l.b16 %v3414
      %v3506 = vunpack.c.l.b16 %v3415
      %v3507 = vunpack.c.l.b16 %v3416
      %v3508 = vunpack.c.l.b16 %v3417
      %v3509 = vunpack.c.l.b16 %v3418
      %v3510 = vunpack.c.l.b16 %v3419
      %v3511 = vunpack.c.l.b16 %v3420
      %v3512 = vunpack.c.l.b16 %v3421
      %v3513 = vunpack.c.l.b16 %v3422
      %v3514 = vunpack.c.l.b16 %v3423
      %v3515 = vunpack.c.l.b16 %v3424
      %v3516 = vpack.c.b16 %v3501, %v3500
      %v3517 = vpack.c.b16 %v3503, %v3502
      %v3518 = vpack.c.b16 %v3505, %v3504
      %v3519 = vpack.c.b16 %v3507, %v3506
      %v3520 = vpack.c.b16 %v3509, %v3508
      %v3521 = vpack.c.b16 %v3511, %v3510
      %v3522 = vpack.c.b16 %v3513, %v3512
      %v3523 = vpack.c.b16 %v3515, %v3514
      %3532 = vmatpush.bf16.msra.mxu0 %v3523
      %3533 = vmatpush.bf16.msra.mxu0 %v3522
      %3534 = vmatpush.bf16.msra.mxu0 %v3521
      %3535 = vmatpush.bf16.msra.mxu0 %v3520
      %3536 = vmatpush.bf16.msra.mxu0 %v3519
      %3537 = vmatpush.bf16.msra.mxu0 %v3518
      %3538 = vmatpush.bf16.msra.mxu0 %v3517
      %3539 = vmatpush.bf16.msra.mxu0 %v3516
      %3540 = vmatmul.bf16.gmra.mxu0 %v3431
      %v3541 = vpop.f32.mrf.mxu0
      %v3542 = vadd.f32 0.0, %v3541
      %v3543 = vpop.f32.mrf.mxu0
      %v3544 = vadd.f32 0.0, %v3543
      %3545 = vmatmul.bf16.gmra.mxu0 %v3433
      %v3546 = vpop.f32.mrf.mxu0
      %v3547 = vadd.f32 0.0, %v3546
      %v3548 = vpop.f32.mrf.mxu0
      %v3549 = vadd.f32 0.0, %v3548
      %3550 = vmatmul.bf16.gmra.mxu0 %v3435
      %v3551 = vpop.f32.mrf.mxu0
      %v3552 = vadd.f32 0.0, %v3551
      %v3553 = vpop.f32.mrf.mxu0
      %v3554 = vadd.f32 0.0, %v3553
      %3555 = vmatmul.bf16.gmra.mxu0 %v3437
      %v3556 = vpop.f32.mrf.mxu0
      %v3557 = vadd.f32 0.0, %v3556
      %v3558 = vpop.f32.mrf.mxu0
      %v3559 = vadd.f32 0.0, %v3558
      %3560 = vmatmul.bf16.gmra.mxu0 %v3439
      %v3561 = vpop.f32.mrf.mxu0
      %v3562 = vadd.f32 0.0, %v3561
      %v3563 = vpop.f32.mrf.mxu0
      %v3564 = vadd.f32 0.0, %v3563
      %3565 = vmatmul.bf16.gmra.mxu0 %v3441
      %v3566 = vpop.f32.mrf.mxu0
      %v3567 = vadd.f32 0.0, %v3566
      %v3568 = vpop.f32.mrf.mxu0
      %v3569 = vadd.f32 0.0, %v3568
      %3570 = vmatmul.bf16.gmra.mxu0 %v3443
      %v3571 = vpop.f32.mrf.mxu0
      %v3572 = vadd.f32 0.0, %v3571
      %v3573 = vpop.f32.mrf.mxu0
      %v3574 = vadd.f32 0.0, %v3573
      %3575 = vmatmul.bf16.gmra.mxu0 %v3445
      %v3576 = vpop.f32.mrf.mxu0
      %v3577 = vadd.f32 0.0, %v3576
      %v3578 = vpop.f32.mrf.mxu0
      %v3579 = vadd.f32 0.0, %v3578
      %3580 = vmatmul.bf16.gmra.mxu0 %v3447
      %v3581 = vpop.f32.mrf.mxu0
      %v3582 = vadd.f32 0.0, %v3581
      %v3583 = vpop.f32.mrf.mxu0
      %v3584 = vadd.f32 0.0, %v3583
      %3585 = vmatmul.bf16.gmra.mxu0 %v3449
      %v3586 = vpop.f32.mrf.mxu0
      %v3587 = vadd.f32 0.0, %v3586
      %v3588 = vpop.f32.mrf.mxu0
      %v3589 = vadd.f32 0.0, %v3588
      %3590 = vmatmul.bf16.gmra.mxu0 %v3451
      %v3591 = vpop.f32.mrf.mxu0
      %v3592 = vadd.f32 0.0, %v3591
      %v3593 = vpop.f32.mrf.mxu0
      %v3594 = vadd.f32 0.0, %v3593
      %3595 = vmatmul.bf16.gmra.mxu0 %v3453
      %v3596 = vpop.f32.mrf.mxu0
      %v3597 = vadd.f32 0.0, %v3596
      %v3598 = vpop.f32.mrf.mxu0
      %v3599 = vadd.f32 0.0, %v3598
      %3600 = vmatmul.bf16.gmra.mxu0 %v3455
      %v3601 = vpop.f32.mrf.mxu0
      %v3602 = vadd.f32 0.0, %v3601
      %v3603 = vpop.f32.mrf.mxu0
      %v3604 = vadd.f32 0.0, %v3603
      %3605 = vmatmul.bf16.gmra.mxu0 %v3457
      %v3606 = vpop.f32.mrf.mxu0
      %v3607 = vadd.f32 0.0, %v3606
      %v3608 = vpop.f32.mrf.mxu0
      %v3609 = vadd.f32 0.0, %v3608
      %3610 = vmatmul.bf16.gmra.mxu0 %v3459
      %v3611 = vpop.f32.mrf.mxu0
      %v3612 = vadd.f32 0.0, %v3611
      %v3613 = vpop.f32.mrf.mxu0
      %v3614 = vadd.f32 0.0, %v3613
      %3615 = vmatmul.bf16.gmra.mxu0 %v3461
      %v3616 = vpop.f32.mrf.mxu0
      %v3617 = vadd.f32 0.0, %v3616
      %v3618 = vpop.f32.mrf.mxu0
      %v3619 = vadd.f32 0.0, %v3618
      %3620 = vmatmul.bf16.gmra.mxu0 %v3463
      %v3621 = vpop.f32.mrf.mxu0
      %v3622 = vadd.f32 0.0, %v3621
      %v3623 = vpop.f32.mrf.mxu0
      %v3624 = vadd.f32 0.0, %v3623
      %3625 = vmatmul.bf16.gmra.mxu0 %v3465
      %v3626 = vpop.f32.mrf.mxu0
      %v3627 = vadd.f32 0.0, %v3626
      %v3628 = vpop.f32.mrf.mxu0
      %v3629 = vadd.f32 0.0, %v3628
      %3630 = vdwg.mxu0
      %v3631 = vadd.f32 %v3372, %v3542
      %v3632 = vadd.f32 %v3373, %v3544
      %v3633 = vadd.f32 %v3374, %v3547
      %v3634 = vadd.f32 %v3375, %v3549
      %v3635 = vadd.f32 %v3376, %v3552
      %v3636 = vadd.f32 %v3377, %v3554
      %v3637 = vadd.f32 %v3378, %v3557
      %v3638 = vadd.f32 %v3379, %v3559
      %v3639 = vadd.f32 %v3380, %v3562
      %v3640 = vadd.f32 %v3381, %v3564
      %v3641 = vadd.f32 %v3382, %v3567
      %v3642 = vadd.f32 %v3383, %v3569
      %v3643 = vadd.f32 %v3384, %v3572
      %v3644 = vadd.f32 %v3385, %v3574
      %v3645 = vadd.f32 %v3386, %v3577
      %v3646 = vadd.f32 %v3387, %v3579
      %v3647 = vadd.f32 %v3388, %v3582
      %v3648 = vadd.f32 %v3389, %v3584
      %v3649 = vadd.f32 %v3390, %v3587
      %v3650 = vadd.f32 %v3391, %v3589
      %v3651 = vadd.f32 %v3392, %v3592
      %v3652 = vadd.f32 %v3393, %v3594
      %v3653 = vadd.f32 %v3394, %v3597
      %v3654 = vadd.f32 %v3395, %v3599
      %v3655 = vadd.f32 %v3396, %v3602
      %v3656 = vadd.f32 %v3397, %v3604
      %v3657 = vadd.f32 %v3398, %v3607
      %v3658 = vadd.f32 %v3399, %v3609
      %v3659 = vadd.f32 %v3400, %v3612
      %v3660 = vadd.f32 %v3401, %v3614
      %v3661 = vadd.f32 %v3402, %v3617
      %v3662 = vadd.f32 %v3403, %v3619
      %v3663 = vadd.f32 %v3404, %v3622
      %v3664 = vadd.f32 %v3405, %v3624
      %v3665 = vadd.f32 %v3406, %v3627
      %v3666 = vadd.f32 %v3407, %v3629
      %v3667 = vld [vmem:[#allocation2 + $0xa8] sm:$0x3]
      %v3668 = vld [vmem:[%s3 + $0x200] sm:$0xf]
      %v3669 = vld [vmem:[%s3 + $0x204] sm:$0xf]
      %v3670 = vld [vmem:[%s3 + $0x208] sm:$0xf]
      %v3671 = vld [vmem:[%s3 + $0x20c] sm:$0xf]
      %v3672 = vld [vmem:[%s3 + $0x210] sm:$0xf]
      %v3673 = vld [vmem:[%s3 + $0x214] sm:$0xf]
      %v3674 = vld [vmem:[%s3 + $0x218] sm:$0xf]
      %v3675 = vld [vmem:[%s3 + $0x21c] sm:$0xf]
      %v3676 = vld [vmem:[%s3 + $0x220] sm:$0xf]
      %v3677 = vld [vmem:[%s3 + $0x224] sm:$0xf]
      %v3678 = vld [vmem:[%s3 + $0x228] sm:$0xf]
      %v3679 = vld [vmem:[%s3 + $0x22c] sm:$0xf]
      %v3680 = vld [vmem:[%s3 + $0x230] sm:$0xf]
      %v3681 = vld [vmem:[%s3 + $0x234] sm:$0xf]
      %v3682 = vld [vmem:[%s3 + $0x238] sm:$0xf]
      %v3683 = vld [vmem:[%s3 + $0x23c] sm:$0xf]
      %v3685 = vunpack.c.l.b16 %v3667
      %v3686 = vpack.c.b16 %v3685, %v3685
      %vm3687 = vsmask.f32 6400
      %v3689 = vshrl.u32 %v3427, 16
      %v3691 = vrot.slane %v3689, 1
      %v3692 = vshll.u32 %v3427, 16
      %v3694 = vrot.slane %v3692, 2
      %v3695 = vor.u32 %v3691, %v3694
      %v3696 = vrot.slane %v3071, 1
      %v3697 = vrot.slane %v3067, 2
      %v3698 = vor.u32 %v3696, %v3697
      %v3699 = vsel %vm3687, %v3695, %v3698
      %v3700 = vrot.slane %v3079, 1
      %v3701 = vrot.slane %v3075, 2
      %v3702 = vor.u32 %v3700, %v3701
      %v3703 = vsel %vm3687, %v3698, %v3702
      %v3704 = vrot.slane %v3087, 1
      %v3705 = vrot.slane %v3083, 2
      %v3706 = vor.u32 %v3704, %v3705
      %v3707 = vsel %vm3687, %v3702, %v3706
      %v3708 = vrot.slane %v3095, 1
      %v3709 = vrot.slane %v3091, 2
      %v3710 = vor.u32 %v3708, %v3709
      %v3711 = vsel %vm3687, %v3706, %v3710
      %v3712 = vrot.slane %v3103, 1
      %v3713 = vrot.slane %v3099, 2
      %v3714 = vor.u32 %v3712, %v3713
      %v3715 = vsel %vm3687, %v3710, %v3714
      %v3716 = vrot.slane %v3111, 1
      %v3717 = vrot.slane %v3107, 2
      %v3718 = vor.u32 %v3716, %v3717
      %v3719 = vsel %vm3687, %v3714, %v3718
      %v3720 = vrot.slane %v3119, 1
      %v3721 = vrot.slane %v3115, 2
      %v3722 = vor.u32 %v3720, %v3721
      %v3723 = vsel %vm3687, %v3718, %v3722
      %v3724 = vrot.slane %v3127, 1
      %v3725 = vrot.slane %v3123, 2
      %v3726 = vor.u32 %v3724, %v3725
      %v3727 = vsel %vm3687, %v3722, %v3726
      %v3728 = vrot.slane %v3135, 1
      %v3729 = vrot.slane %v3131, 2
      %v3730 = vor.u32 %v3728, %v3729
      %v3731 = vsel %vm3687, %v3726, %v3730
      %v3732 = vrot.slane %v3143, 1
      %v3733 = vrot.slane %v3139, 2
      %v3734 = vor.u32 %v3732, %v3733
      %v3735 = vsel %vm3687, %v3730, %v3734
      %v3736 = vrot.slane %v3151, 1
      %v3737 = vrot.slane %v3147, 2
      %v3738 = vor.u32 %v3736, %v3737
      %v3739 = vsel %vm3687, %v3734, %v3738
      %v3740 = vrot.slane %v3159, 1
      %v3741 = vrot.slane %v3155, 2
      %v3742 = vor.u32 %v3740, %v3741
      %v3743 = vsel %vm3687, %v3738, %v3742
      %v3744 = vrot.slane %v3167, 1
      %v3745 = vrot.slane %v3163, 2
      %v3746 = vor.u32 %v3744, %v3745
      %v3747 = vsel %vm3687, %v3742, %v3746
      %v3748 = vrot.slane %v3175, 1
      %v3749 = vrot.slane %v3171, 2
      %v3750 = vor.u32 %v3748, %v3749
      %v3751 = vsel %vm3687, %v3746, %v3750
      %v3752 = vrot.slane %v3183, 1
      %v3753 = vrot.slane %v3179, 2
      %v3754 = vor.u32 %v3752, %v3753
      %v3755 = vsel %vm3687, %v3750, %v3754
      %v3756 = vrot.slane %v3191, 1
      %v3757 = vrot.slane %v3187, 2
      %v3758 = vor.u32 %v3756, %v3757
      %v3759 = vsel %vm3687, %v3754, %v3758
      %v3760 = vrot.slane %v3199, 1
      %v3761 = vrot.slane %v3195, 2
      %v3762 = vor.u32 %v3760, %v3761
      %v3763 = vsel %vm3687, %v3758, %v3762
      %v3765 = vshrl.u32 %v3686, 16
      %v3767 = vrot.slane %v3765, 1
      %v3768 = vshll.u32 %v3686, 16
      %v3770 = vrot.slane %v3768, 2
      %v3771 = vor.u32 %v3767, %v3770
      %v3772 = vsel %vm3687, %v3762, %v3771
      %v3807 = vunpack.c.l.b16 %v3668
      %v3808 = vunpack.c.l.b16 %v3669
      %v3809 = vunpack.c.l.b16 %v3670
      %v3810 = vunpack.c.l.b16 %v3671
      %v3811 = vunpack.c.l.b16 %v3672
      %v3812 = vunpack.c.l.b16 %v3673
      %v3813 = vunpack.c.l.b16 %v3674
      %v3814 = vunpack.c.l.b16 %v3675
      %v3815 = vunpack.c.l.b16 %v3676
      %v3816 = vunpack.c.l.b16 %v3677
      %v3817 = vunpack.c.l.b16 %v3678
      %v3818 = vunpack.c.l.b16 %v3679
      %v3819 = vunpack.c.l.b16 %v3680
      %v3820 = vunpack.c.l.b16 %v3681
      %v3821 = vunpack.c.l.b16 %v3682
      %v3822 = vunpack.c.l.b16 %v3683
      %v3823 = vpack.c.b16 %v3808, %v3807
      %v3824 = vpack.c.b16 %v3810, %v3809
      %v3825 = vpack.c.b16 %v3812, %v3811
      %v3826 = vpack.c.b16 %v3814, %v3813
      %v3827 = vpack.c.b16 %v3816, %v3815
      %v3828 = vpack.c.b16 %v3818, %v3817
      %v3829 = vpack.c.b16 %v3820, %v3819
      %v3830 = vpack.c.b16 %v3822, %v3821
      %3839 = vmatpush.bf16.msra.mxu0 %v3830
      %3840 = vmatpush.bf16.msra.mxu0 %v3829
      %3841 = vmatpush.bf16.msra.mxu0 %v3828
      %3842 = vmatpush.bf16.msra.mxu0 %v3827
      %3843 = vmatpush.bf16.msra.mxu0 %v3826
      %3844 = vmatpush.bf16.msra.mxu0 %v3825
      %3845 = vmatpush.bf16.msra.mxu0 %v3824
      %3846 = vmatpush.bf16.msra.mxu0 %v3823
      %3847 = vmatmul.bf16.gmra.mxu0 %v3699
      %v3848 = vpop.f32.mrf.mxu0
      %v3849 = vadd.f32 0.0, %v3848
      %v3850 = vpop.f32.mrf.mxu0
      %v3851 = vadd.f32 0.0, %v3850
      %3852 = vmatmul.bf16.gmra.mxu0 %v3703
      %v3853 = vpop.f32.mrf.mxu0
      %v3854 = vadd.f32 0.0, %v3853
      %v3855 = vpop.f32.mrf.mxu0
      %v3856 = vadd.f32 0.0, %v3855
      %3857 = vmatmul.bf16.gmra.mxu0 %v3707
      %v3858 = vpop.f32.mrf.mxu0
      %v3859 = vadd.f32 0.0, %v3858
      %v3860 = vpop.f32.mrf.mxu0
      %v3861 = vadd.f32 0.0, %v3860
      %3862 = vmatmul.bf16.gmra.mxu0 %v3711
      %v3863 = vpop.f32.mrf.mxu0
      %v3864 = vadd.f32 0.0, %v3863
      %v3865 = vpop.f32.mrf.mxu0
      %v3866 = vadd.f32 0.0, %v3865
      %3867 = vmatmul.bf16.gmra.mxu0 %v3715
      %v3868 = vpop.f32.mrf.mxu0
      %v3869 = vadd.f32 0.0, %v3868
      %v3870 = vpop.f32.mrf.mxu0
      %v3871 = vadd.f32 0.0, %v3870
      %3872 = vmatmul.bf16.gmra.mxu0 %v3719
      %v3873 = vpop.f32.mrf.mxu0
      %v3874 = vadd.f32 0.0, %v3873
      %v3875 = vpop.f32.mrf.mxu0
      %v3876 = vadd.f32 0.0, %v3875
      %3877 = vmatmul.bf16.gmra.mxu0 %v3723
      %v3878 = vpop.f32.mrf.mxu0
      %v3879 = vadd.f32 0.0, %v3878
      %v3880 = vpop.f32.mrf.mxu0
      %v3881 = vadd.f32 0.0, %v3880
      %3882 = vmatmul.bf16.gmra.mxu0 %v3727
      %v3883 = vpop.f32.mrf.mxu0
      %v3884 = vadd.f32 0.0, %v3883
      %v3885 = vpop.f32.mrf.mxu0
      %v3886 = vadd.f32 0.0, %v3885
      %3887 = vmatmul.bf16.gmra.mxu0 %v3731
      %v3888 = vpop.f32.mrf.mxu0
      %v3889 = vadd.f32 0.0, %v3888
      %v3890 = vpop.f32.mrf.mxu0
      %v3891 = vadd.f32 0.0, %v3890
      %3892 = vmatmul.bf16.gmra.mxu0 %v3735
      %v3893 = vpop.f32.mrf.mxu0
      %v3894 = vadd.f32 0.0, %v3893
      %v3895 = vpop.f32.mrf.mxu0
      %v3896 = vadd.f32 0.0, %v3895
      %3897 = vmatmul.bf16.gmra.mxu0 %v3739
      %v3898 = vpop.f32.mrf.mxu0
      %v3899 = vadd.f32 0.0, %v3898
      %v3900 = vpop.f32.mrf.mxu0
      %v3901 = vadd.f32 0.0, %v3900
      %3902 = vmatmul.bf16.gmra.mxu0 %v3743
      %v3903 = vpop.f32.mrf.mxu0
      %v3904 = vadd.f32 0.0, %v3903
      %v3905 = vpop.f32.mrf.mxu0
      %v3906 = vadd.f32 0.0, %v3905
      %3907 = vmatmul.bf16.gmra.mxu0 %v3747
      %v3908 = vpop.f32.mrf.mxu0
      %v3909 = vadd.f32 0.0, %v3908
      %v3910 = vpop.f32.mrf.mxu0
      %v3911 = vadd.f32 0.0, %v3910
      %3912 = vmatmul.bf16.gmra.mxu0 %v3751
      %v3913 = vpop.f32.mrf.mxu0
      %v3914 = vadd.f32 0.0, %v3913
      %v3915 = vpop.f32.mrf.mxu0
      %v3916 = vadd.f32 0.0, %v3915
      %3917 = vmatmul.bf16.gmra.mxu0 %v3755
      %v3918 = vpop.f32.mrf.mxu0
      %v3919 = vadd.f32 0.0, %v3918
      %v3920 = vpop.f32.mrf.mxu0
      %v3921 = vadd.f32 0.0, %v3920
      %3922 = vmatmul.bf16.gmra.mxu0 %v3759
      %v3923 = vpop.f32.mrf.mxu0
      %v3924 = vadd.f32 0.0, %v3923
      %v3925 = vpop.f32.mrf.mxu0
      %v3926 = vadd.f32 0.0, %v3925
      %3927 = vmatmul.bf16.gmra.mxu0 %v3763
      %v3928 = vpop.f32.mrf.mxu0
      %v3929 = vadd.f32 0.0, %v3928
      %v3930 = vpop.f32.mrf.mxu0
      %v3931 = vadd.f32 0.0, %v3930
      %3932 = vmatmul.bf16.gmra.mxu0 %v3772
      %v3933 = vpop.f32.mrf.mxu0
      %v3934 = vadd.f32 0.0, %v3933
      %v3935 = vpop.f32.mrf.mxu0
      %v3936 = vadd.f32 0.0, %v3935
      %3937 = vdwg.mxu0
      %v3938 = vadd.f32 %v3631, %v3849
      %v3939 = vadd.f32 %v3632, %v3851
      %v3940 = vadd.f32 %v3633, %v3854
      %v3941 = vadd.f32 %v3634, %v3856
      %v3942 = vadd.f32 %v3635, %v3859
      %v3943 = vadd.f32 %v3636, %v3861
      %v3944 = vadd.f32 %v3637, %v3864
      %v3945 = vadd.f32 %v3638, %v3866
      %v3946 = vadd.f32 %v3639, %v3869
      %v3947 = vadd.f32 %v3640, %v3871
      %v3948 = vadd.f32 %v3641, %v3874
      %v3949 = vadd.f32 %v3642, %v3876
      %v3950 = vadd.f32 %v3643, %v3879
      %v3951 = vadd.f32 %v3644, %v3881
      %v3952 = vadd.f32 %v3645, %v3884
      %v3953 = vadd.f32 %v3646, %v3886
      %v3954 = vadd.f32 %v3647, %v3889
      %v3955 = vadd.f32 %v3648, %v3891
      %v3956 = vadd.f32 %v3649, %v3894
      %v3957 = vadd.f32 %v3650, %v3896
      %v3958 = vadd.f32 %v3651, %v3899
      %v3959 = vadd.f32 %v3652, %v3901
      %v3960 = vadd.f32 %v3653, %v3904
      %v3961 = vadd.f32 %v3654, %v3906
      %v3962 = vadd.f32 %v3655, %v3909
      %v3963 = vadd.f32 %v3656, %v3911
      %v3964 = vadd.f32 %v3657, %v3914
      %v3965 = vadd.f32 %v3658, %v3916
      %v3966 = vadd.f32 %v3659, %v3919
      %v3967 = vadd.f32 %v3660, %v3921
      %v3968 = vadd.f32 %v3661, %v3924
      %v3969 = vadd.f32 %v3662, %v3926
      %v3970 = vadd.f32 %v3663, %v3929
      %v3971 = vadd.f32 %v3664, %v3931
      %v3972 = vadd.f32 %v3665, %v3934
      %v3973 = vadd.f32 %v3666, %v3936
      %v3974 = vld [vmem:[%s4] sm:$0x1]
      %v3976 = vperm.slane %v3974, 0
      %v3978 = vadd.f32 %v3938, %v3976
      %v3979 = vadd.f32 %v3939, %v3976
      %v3980 = vadd.f32 %v3940, %v3976
      %v3981 = vadd.f32 %v3941, %v3976
      %v3982 = vadd.f32 %v3942, %v3976
      %v3983 = vadd.f32 %v3943, %v3976
      %v3984 = vadd.f32 %v3944, %v3976
      %v3985 = vadd.f32 %v3945, %v3976
      %v3986 = vadd.f32 %v3946, %v3976
      %v3987 = vadd.f32 %v3947, %v3976
      %v3988 = vadd.f32 %v3948, %v3976
      %v3989 = vadd.f32 %v3949, %v3976
      %v3990 = vadd.f32 %v3950, %v3976
      %v3991 = vadd.f32 %v3951, %v3976
      %v3992 = vadd.f32 %v3952, %v3976
      %v3993 = vadd.f32 %v3953, %v3976
      %v3994 = vadd.f32 %v3954, %v3976
      %v3995 = vadd.f32 %v3955, %v3976
      %v3996 = vadd.f32 %v3956, %v3976
      %v3997 = vadd.f32 %v3957, %v3976
      %v3998 = vadd.f32 %v3958, %v3976
      %v3999 = vadd.f32 %v3959, %v3976
      %v4000 = vadd.f32 %v3960, %v3976
      %v4001 = vadd.f32 %v3961, %v3976
      %v4002 = vadd.f32 %v3962, %v3976
      %v4003 = vadd.f32 %v3963, %v3976
      %v4004 = vadd.f32 %v3964, %v3976
      %v4005 = vadd.f32 %v3965, %v3976
      %v4006 = vadd.f32 %v3966, %v3976
      %v4007 = vadd.f32 %v3967, %v3976
      %v4008 = vadd.f32 %v3968, %v3976
      %v4009 = vadd.f32 %v3969, %v3976
      %v4010 = vadd.f32 %v3970, %v3976
      %v4011 = vadd.f32 %v3971, %v3976
      %v4012 = vadd.f32 %v3972, %v3976
      %v4013 = vadd.f32 %v3973, %v3976
      %v4014 = vmax.f32 %v3978, 0.0
      %v4015 = vmax.f32 %v3979, 0.0
      %v4016 = vmax.f32 %v3980, 0.0
      %v4017 = vmax.f32 %v3981, 0.0
      %v4018 = vmax.f32 %v3982, 0.0
      %v4019 = vmax.f32 %v3983, 0.0
      %v4020 = vmax.f32 %v3984, 0.0
      %v4021 = vmax.f32 %v3985, 0.0
      %v4022 = vmax.f32 %v3986, 0.0
      %v4023 = vmax.f32 %v3987, 0.0
      %v4024 = vmax.f32 %v3988, 0.0
      %v4025 = vmax.f32 %v3989, 0.0
      %v4026 = vmax.f32 %v3990, 0.0
      %v4027 = vmax.f32 %v3991, 0.0
      %v4028 = vmax.f32 %v3992, 0.0
      %v4029 = vmax.f32 %v3993, 0.0
      %v4030 = vmax.f32 %v3994, 0.0
      %v4031 = vmax.f32 %v3995, 0.0
      %v4032 = vmax.f32 %v3996, 0.0
      %v4033 = vmax.f32 %v3997, 0.0
      %v4034 = vmax.f32 %v3998, 0.0
      %v4035 = vmax.f32 %v3999, 0.0
      %v4036 = vmax.f32 %v4000, 0.0
      %v4037 = vmax.f32 %v4001, 0.0
      %v4038 = vmax.f32 %v4002, 0.0
      %v4039 = vmax.f32 %v4003, 0.0
      %v4040 = vmax.f32 %v4004, 0.0
      %v4041 = vmax.f32 %v4005, 0.0
      %v4042 = vmax.f32 %v4006, 0.0
      %v4043 = vmax.f32 %v4007, 0.0
      %v4044 = vmax.f32 %v4008, 0.0
      %v4045 = vmax.f32 %v4009, 0.0
      %v4046 = vmax.f32 %v4010, 0.0
      %v4047 = vmax.f32 %v4011, 0.0
      %v4048 = vmax.f32 %v4012, 0.0
      %v4049 = vmax.f32 %v4013, 0.0
      %4050 = vst [vmem:[%s224] sm:$0xff] %v4014
      %4051 = vst [vmem:[%s224 + $0x8] sm:$0xff] %v4015
      %4052 = vst [vmem:[%s224 + $0x10] sm:$0xff] %v4016
      %4053 = vst [vmem:[%s224 + $0x18] sm:$0xff] %v4017
      %4054 = vst [vmem:[%s224 + $0x20] sm:$0xff] %v4018
      %4055 = vst [vmem:[%s224 + $0x28] sm:$0xff] %v4019
      %4056 = vst [vmem:[%s224 + $0x30] sm:$0xff] %v4020
      %4057 = vst [vmem:[%s224 + $0x38] sm:$0xff] %v4021
      %4058 = vst [vmem:[%s224 + $0x40] sm:$0xff] %v4022
      %4059 = vst [vmem:[%s224 + $0x48] sm:$0xff] %v4023
      %4060 = vst [vmem:[%s224 + $0x50] sm:$0xff] %v4024
      %4061 = vst [vmem:[%s224 + $0x58] sm:$0xff] %v4025
      %4062 = vst [vmem:[%s224 + $0x60] sm:$0xff] %v4026
      %4063 = vst [vmem:[%s224 + $0x68] sm:$0xff] %v4027
      %4064 = vst [vmem:[%s224 + $0x70] sm:$0xff] %v4028
      %4065 = vst [vmem:[%s224 + $0x78] sm:$0xff] %v4029
      %4066 = vst [vmem:[%s224 + $0x80] sm:$0xff] %v4030
      %4067 = vst [vmem:[%s224 + $0x88] sm:$0xff] %v4031
      %4068 = vst [vmem:[%s224 + $0x90] sm:$0xff] %v4032
      %4069 = vst [vmem:[%s224 + $0x98] sm:$0xff] %v4033
      %4070 = vst [vmem:[%s224 + $0xa0] sm:$0xff] %v4034
      %4071 = vst [vmem:[%s224 + $0xa8] sm:$0xff] %v4035
      %4072 = vst [vmem:[%s224 + $0xb0] sm:$0xff] %v4036
      %4073 = vst [vmem:[%s224 + $0xb8] sm:$0xff] %v4037
      %4074 = vst [vmem:[%s224 + $0xc0] sm:$0xff] %v4038
      %4075 = vst [vmem:[%s224 + $0xc8] sm:$0xff] %v4039
      %4076 = vst [vmem:[%s224 + $0xd0] sm:$0xff] %v4040
      %4077 = vst [vmem:[%s224 + $0xd8] sm:$0xff] %v4041
      %4078 = vst [vmem:[%s224 + $0xe0] sm:$0xff] %v4042
      %4079 = vst [vmem:[%s224 + $0xe8] sm:$0xff] %v4043
      %4080 = vst [vmem:[%s224 + $0xf0] sm:$0xff] %v4044
      %4081 = vst [vmem:[%s224 + $0xf8] sm:$0xff] %v4045
      %4082 = vst [vmem:[%s224 + $0x100] sm:$0xff] %v4046
      %4083 = vst [vmem:[%s224 + $0x108] sm:$0xff] %v4047
      %4084 = vst [vmem:[%s224 + $0x110] sm:$0xff] %v4048
      %4085 = vst [vmem:[%s224 + $0x118] sm:$0xff] %v4049
      %p4086 = scmp.lt.s32.totalorder %s16, 1
      %s4087 = scalar_select %p4086, %s16, 1
      %s4088 = smul.addr %s4087, 36
      %s4089 = smul.addr %s4088, 8
      %s4090 = scalar_lea.vmem %s5, %s4089
      // Predicated region
      $region41: #{unet_conv_block_forward.1} parent=39 // pred_check
        %p4091 = pneg %p144
      $region42: #{unet_conv_block_forward.1} parent=39 // pred_check_branch
        %4093 = sbr.rel (%p4091) target = $region44
      $region43: #{unet_conv_block_forward.1} parent=39 // pred_region
        _
      $region44: #{unet_conv_block_forward.1} parent=39 // pred_fallthru
        _
    $region40: #{unet_conv_block_forward.1} parent=5 // pred_fallthru
      _
    %p4094 = scmp.le.s32.totalorder 2, %s11
    // Predicated region
    $region45: #{unet_conv_block_forward.1} parent=5 // pred_check
      %p4095 = pneg %p4094
    $region46: #{unet_conv_block_forward.1} parent=5 // pred_check_branch
      %4097 = sbr.rel (%p4095) target = $region48
    $region47: #{unet_conv_block_forward.1} parent=5 // pred_region
      %s4098 = ssub.s32 %s11, 2
      // Predicated region
      $region49: #{unet_conv_block_forward.1} parent=47 // pred_check
        %p4099 = pneg %p150
      $region50: #{unet_conv_block_forward.1} parent=47 // pred_check_branch
        %4101 = sbr.rel (%p4099) target = $region52
      $region51: #{unet_conv_block_forward.1} parent=47 // pred_region
        %p4102 = scmp.lt.s32.totalorder %s17, 1
        %s4103 = scalar_select %p4102, %s17, 1
        %s4104 = smul.addr %s4103, 36
        %s4105 = smul.addr %s4104, 8
        %s4106 = scalar_lea.vmem %s5, %s4105
      $region52: #{unet_conv_block_forward.1} parent=47 // pred_fallthru
        _
    $region48: #{unet_conv_block_forward.1} parent=5 // pred_fallthru
      _
  $region6: #{unet_conv_block_forward.1} parent=0 // loop_footer
    %s15 = sadd.s32 1, %s11
  $region7: #{unet_conv_block_forward.1} parent=0 // loop_footer_branch
    %10 = sbr.rel target = $region3
  $region8: #{unet_conv_block_forward.1} parent=0 // loop_exit
    _

</llo_original>
